<compile_context>
chip_gen: v6e
topology: v6e:2x2x1
jax: 0.10.0
libtpu: 0.0.40
codegen_flags: <defaults>
</compile_context>

<pallas_src>
import functools
import math

import jax
import jax.numpy as jnp
import numpy as np
from jax import lax
from jax.experimental import pallas as pl
from jax.experimental.pallas import tpu as pltpu


# Tap order t = (dy+1)*3 + (dx+1) == ky*3 + kx, matching the weight packing.
_TAPS = tuple((dy, dx) for dy in (-1, 0, 1) for dx in (-1, 0, 1))


def _border_masks(H, W):
    """(9, H*W) float32 0/1 masks: valid source pixel per tap (shape constants)."""
    hh, ww = np.meshgrid(np.arange(H), np.arange(W), indexing="ij")
    hh = hh.reshape(-1)
    ww = ww.reshape(-1)
    rows = []
    for dy, dx in _TAPS:
        ok = (hh + dy >= 0) & (hh + dy < H) & (ww + dx >= 0) & (ww + dx < W)
        rows.append(ok.astype(np.float32))
    return np.stack(rows, axis=0)


def _gate_kernel(mask_ref, x1_ref, x2_ref, x3_ref, x4_ref,
                 w12_ref, b12_ref, w23_ref, b23_ref, w34_ref, b34_ref,
                 out_ref, *, H, W):
    # Blocks: x*_ref/out_ref (1, C, HW); w*_ref (C, 9*C) packed [co, tap*C+ci];
    # b*_ref (C, 1); mask_ref (9, HW) border masks shared by all three convs.
    _, C, HW = x1_ref.shape

    maskv = mask_ref[...]                            # (9, HW), read once

    def leaky(v):
        return jnp.where(v >= 0, v, 0.2 * v)

    def conv3x3(xv, w_ref, b_ref):
        # xv: (C, HW) f32.  Bias initializes the accumulator; each tap is one
        # lane rotation + mask multiply, then Cin broadcast-FMAs on the VPU
        # (no MXU, no per-tap reshapes, no padded scratch).
        wv = w_ref[...]                              # (C, 9*C)
        acc = jnp.broadcast_to(b_ref[...], (C, HW))  # (C, HW)
        for t, (dy, dx) in enumerate(_TAPS):
            off = dy * W + dx
            if off == 0:
                xs = xv
            else:
                # xs[:, p] = xv[:, p + off]; wrapped/out-of-image lanes zeroed.
                xs = pltpu.roll(xv, shift=(-off) % HW, axis=1)
                xs = xs * maskv[t:t + 1, :]
            for ci in range(C):
                k = t * C + ci
                acc = acc + wv[:, k:k + 1] * xs[ci:ci + 1, :]   # (C,1)*(1,HW)
        return acc

    x1v = x1_ref[0]
    x2v = x2_ref[0]
    x3v = x3_ref[0]
    x4v = x4_ref[0]

    c12 = leaky(conv3x3(x2v - x1v, w12_ref, b12_ref)) + x2v
    c23 = leaky(conv3x3(x3v - c12, w23_ref, b23_ref)) + x3v

    # Channel softmax: channels are sublane rows, so reduce with explicit
    # unrolled row max/add (pure VPU); divide via EUP approximate reciprocal.
    m = c23[0:1, :]
    for ci in range(1, C):
        m = jnp.maximum(m, c23[ci:ci + 1, :])
    e = jnp.exp(c23 - m)
    s = e[0:1, :]
    for ci in range(1, C):
        s = s + e[ci:ci + 1, :]
    sm = e * pl.reciprocal(s, approx=True)

    c34 = leaky(conv3x3(sm * x4v, w34_ref, b34_ref)) + x4v
    out_ref[0] = c34.astype(out_ref.dtype)


def gate_pallas(tap_mask, x1, x2, x3, x4, w12, b12, w23, b23, w34, b34, *, H, W):
    """All activations (N, C, H*W) f32; weights (C, 9*C); biases (C, 1)."""
    N, C, HW = x1.shape
    # TODO(synk): at production sizes (large H*W), tile the spatial axis via the
    # grid and set vmem_limit_bytes explicitly for v7x's 64 MiB VMEM budget.
    x_spec = pl.BlockSpec((1, C, HW), lambda n: (n, 0, 0))
    w_spec = pl.BlockSpec((C, 9 * C), lambda n: (0, 0))   # constant index_map -> not re-fetched per step
    b_spec = pl.BlockSpec((C, 1), lambda n: (0, 0))
    m_spec = pl.BlockSpec((9, HW), lambda n: (0, 0))

    return pl.pallas_call(
        functools.partial(_gate_kernel, H=H, W=W),
        out_shape=jax.ShapeDtypeStruct((N, C, HW), jnp.float32),
        grid=(N,),
        in_specs=[m_spec, x_spec, x_spec, x_spec, x_spec,
                  w_spec, b_spec, w_spec, b_spec, w_spec, b_spec],
        out_specs=x_spec,
        compiler_params=pltpu.CompilerParams(
            # keep the batch axis parallel so v7x's 2 TensorCores split it
            dimension_semantics=("parallel",)),
    )(tap_mask, x1, x2, x3, x4, w12, b12, w23, b23, w34, b34)


@jax.jit
def gate_forward(x1_nchw, x2_nchw, x3_nchw, x4_nchw, params):
    """PyTorch-faithful wrapper: NCHW in, NCHW out. Pure reshapes (no activation transposes)."""
    N, C, H, W = x1_nchw.shape
    flat = lambda x: x.reshape(N, C, H * W)
    w12, b12, w23, b23, w34, b34 = params
    # HWIO (3,3,Cin,Cout) -> (Cout, 9*Cin) packed as [co, (ky*3+kx)*Cin + ci]
    wk = lambda w: jnp.transpose(w, (3, 0, 1, 2)).reshape(C, 9 * C)
    bk = lambda b: b.reshape(C, 1)
    tap_mask = jnp.asarray(_border_masks(H, W))
    out = gate_pallas(tap_mask,
                      flat(x1_nchw), flat(x2_nchw), flat(x3_nchw), flat(x4_nchw),
                      wk(w12), bk(b12), wk(w23), bk(b23), wk(w34), bk(b34),
                      H=H, W=W)
    return out.reshape(N, C, H, W)


# ---------------- pure-JAX reference (for correctness check) ----------------
def _conv_ref(x_nhwc, w_hwio, b):
    y = lax.conv_general_dilated(
        x_nhwc, w_hwio, window_strides=(1, 1), padding="SAME",
        dimension_numbers=("NHWC", "HWIO", "NHWC"))
    return y + b.reshape(1, 1, 1, -1)


def gate_ref(x1_nchw, x2_nchw, x3_nchw, x4_nchw, params):
    to_nhwc = lambda x: jnp.transpose(x, (0, 2, 3, 1))
    x1, x2, x3, x4 = map(to_nhwc, (x1_nchw, x2_nchw, x3_nchw, x4_nchw))
    w12, b12, w23, b23, w34, b34 = params
    leaky = lambda v: jnp.where(v >= 0, v, 0.2 * v)
    c12 = leaky(_conv_ref(x2 - x1, w12, b12)) + x2
    c23 = leaky(_conv_ref(x3 - c12, w23, b23)) + x3
    sm = jax.nn.softmax(c23, axis=-1)
    c34 = leaky(_conv_ref(sm * x4, w34, b34)) + x4
    return jnp.transpose(c34, (0, 3, 1, 2))


if __name__ == "__main__":
    N, C, H, W = 2, 4, 16, 16

    key = jax.random.PRNGKey(0)
    ks = jax.random.split(key, 10)

    # Deterministic parameter init (PyTorch-style uniform bound), HWIO weights.
    fan_in = C * 3 * 3
    bound = 1.0 / math.sqrt(fan_in)
    mk_w = lambda k: jax.random.uniform(k, (3, 3, C, C), jnp.float32, -bound, bound)
    mk_b = lambda k: jax.random.uniform(k, (C,), jnp.float32, -bound, bound)
    params = (mk_w(ks[0]), mk_b(ks[1]),
              mk_w(ks[2]), mk_b(ks[3]),
              mk_w(ks[4]), mk_b(ks[5]))

    # Inputs in PyTorch NCHW convention.
    x1 = jax.random.normal(ks[6], (N, C, H, W), jnp.float32)
    x2 = jax.random.normal(ks[7], (N, C, H, W), jnp.float32)
    x3 = jax.random.normal(ks[8], (N, C, H, W), jnp.float32)
    x4 = jax.random.normal(ks[9], (N, C, H, W), jnp.float32)

    out = gate_forward(x1, x2, x3, x4, params)
    out = jax.block_until_ready(out)

    ref = jax.block_until_ready(gate_ref(x1, x2, x3, x4, params))
    assert out.shape == (N, C, H, W)
    # tolerance relaxed slightly vs 1e-4 because the softmax divide uses the
    # EUP approximate reciprocal (pl.reciprocal(..., approx=True)).
    assert jnp.allclose(out, ref, rtol=1e-2, atol=1e-2), (
        "mismatch vs reference: max abs err "
        f"{float(jnp.max(jnp.abs(out - ref)))}")

    print("KERNEL_OK")
</pallas_src>

<mosaic_0001>
module attributes {stable_mosaic.version = 11 : i64} {
  func.func @_gate_kernel(%arg0: i32, %arg1: memref<9x256xf32, #tpu.memory_space<vmem>>, %arg2: memref<1x4x256xf32, #tpu.memory_space<vmem>>, %arg3: memref<1x4x256xf32, #tpu.memory_space<vmem>>, %arg4: memref<1x4x256xf32, #tpu.memory_space<vmem>>, %arg5: memref<1x4x256xf32, #tpu.memory_space<vmem>>, %arg6: memref<4x36xf32, #tpu.memory_space<vmem>>, %arg7: memref<4x1xf32, #tpu.memory_space<vmem>>, %arg8: memref<4x36xf32, #tpu.memory_space<vmem>>, %arg9: memref<4x1xf32, #tpu.memory_space<vmem>>, %arg10: memref<4x36xf32, #tpu.memory_space<vmem>>, %arg11: memref<4x1xf32, #tpu.memory_space<vmem>>, %arg12: memref<1x4x256xf32, #tpu.memory_space<vmem>>) attributes {dimension_semantics = [#tpu.dimension_semantics<parallel>], iteration_bounds = array<i64: 2>, scalar_prefetch = 0 : i64, scratch_operands = 0 : i64, tpu.core_type = #tpu.core_type<tc>, window_params = [{pipeline_mode = #tpu.pipeline_mode<synchronous>, transform_indices = @transform_0, window_bounds = array<i64: 9, 256>}, {transform_indices = @transform_1, window_bounds = array<i64: 1, 4, 256>}, {transform_indices = @transform_2, window_bounds = array<i64: 1, 4, 256>}, {transform_indices = @transform_3, window_bounds = array<i64: 1, 4, 256>}, {transform_indices = @transform_4, window_bounds = array<i64: 1, 4, 256>}, {pipeline_mode = #tpu.pipeline_mode<synchronous>, transform_indices = @transform_5, window_bounds = array<i64: 4, 36>}, {pipeline_mode = #tpu.pipeline_mode<synchronous>, transform_indices = @transform_6, window_bounds = array<i64: 4, 1>}, {pipeline_mode = #tpu.pipeline_mode<synchronous>, transform_indices = @transform_7, window_bounds = array<i64: 4, 36>}, {pipeline_mode = #tpu.pipeline_mode<synchronous>, transform_indices = @transform_8, window_bounds = array<i64: 4, 1>}, {pipeline_mode = #tpu.pipeline_mode<synchronous>, transform_indices = @transform_9, window_bounds = array<i64: 4, 36>}, {pipeline_mode = #tpu.pipeline_mode<synchronous>, transform_indices = @transform_10, window_bounds = array<i64: 4, 1>}, {transform_indices = @transform_11, window_bounds = array<i64: 1, 4, 256>}]} {
    %c0 = arith.constant 0 : index
    %c0_0 = arith.constant 0 : index
    %0 = vector.load %arg1[%c0, %c0_0] : memref<9x256xf32, #tpu.memory_space<vmem>>, vector<9x256xf32>
    %c0_1 = arith.constant 0 : index
    %c0_2 = arith.constant 0 : index
    %c0_3 = arith.constant 0 : index
    %1 = vector.load %arg2[%c0_1, %c0_2, %c0_3] : memref<1x4x256xf32, #tpu.memory_space<vmem>>, vector<1x4x256xf32>
    %2 = vector.shape_cast %1 : vector<1x4x256xf32> to vector<4x256xf32>
    %c0_4 = arith.constant 0 : index
    %c0_5 = arith.constant 0 : index
    %c0_6 = arith.constant 0 : index
    %3 = vector.load %arg3[%c0_4, %c0_5, %c0_6] : memref<1x4x256xf32, #tpu.memory_space<vmem>>, vector<1x4x256xf32>
    %4 = vector.shape_cast %3 : vector<1x4x256xf32> to vector<4x256xf32>
    %c0_7 = arith.constant 0 : index
    %c0_8 = arith.constant 0 : index
    %c0_9 = arith.constant 0 : index
    %5 = vector.load %arg4[%c0_7, %c0_8, %c0_9] : memref<1x4x256xf32, #tpu.memory_space<vmem>>, vector<1x4x256xf32>
    %6 = vector.shape_cast %5 : vector<1x4x256xf32> to vector<4x256xf32>
    %c0_10 = arith.constant 0 : index
    %c0_11 = arith.constant 0 : index
    %c0_12 = arith.constant 0 : index
    %7 = vector.load %arg5[%c0_10, %c0_11, %c0_12] : memref<1x4x256xf32, #tpu.memory_space<vmem>>, vector<1x4x256xf32>
    %8 = vector.shape_cast %7 : vector<1x4x256xf32> to vector<4x256xf32>
    %9 = arith.subf %4, %2 : vector<4x256xf32>
    %c0_13 = arith.constant 0 : index
    %c0_14 = arith.constant 0 : index
    %10 = vector.load %arg6[%c0_13, %c0_14] : memref<4x36xf32, #tpu.memory_space<vmem>>, vector<4x36xf32>
    %c0_15 = arith.constant 0 : index
    %c0_16 = arith.constant 0 : index
    %11 = vector.load %arg7[%c0_15, %c0_16] : memref<4x1xf32, #tpu.memory_space<vmem>>, vector<4x1xf32>
    %12 = vector.shape_cast %11 : vector<4x1xf32> to vector<4x1xf32>
    %13 = vector.broadcast %12 : vector<4x1xf32> to vector<4x256xf32>
    %c17_i32 = arith.constant 17 : i32
    %14 = tpu.dynamic_rotate %9 by %c17_i32 dim 1 : vector<4x256xf32>, i32 -> vector<4x256xf32>
    %15 = vector.extract_strided_slice %0 {offsets = [0, 0], sizes = [1, 256], strides = [1, 1]} : vector<9x256xf32> to vector<1x256xf32>
    %16 = vector.broadcast %15 : vector<1x256xf32> to vector<4x256xf32>
    %17 = arith.mulf %14, %16 : vector<4x256xf32>
    %18 = vector.extract_strided_slice %10 {offsets = [0, 0], sizes = [4, 1], strides = [1, 1]} : vector<4x36xf32> to vector<4x1xf32>
    %19 = vector.extract_strided_slice %17 {offsets = [0, 0], sizes = [1, 256], strides = [1, 1]} : vector<4x256xf32> to vector<1x256xf32>
    %20 = vector.broadcast %18 : vector<4x1xf32> to vector<4x256xf32>
    %21 = vector.broadcast %19 : vector<1x256xf32> to vector<4x256xf32>
    %22 = arith.mulf %20, %21 : vector<4x256xf32>
    %23 = arith.addf %13, %22 : vector<4x256xf32>
    %24 = vector.extract_strided_slice %10 {offsets = [0, 1], sizes = [4, 1], strides = [1, 1]} : vector<4x36xf32> to vector<4x1xf32>
    %25 = vector.extract_strided_slice %17 {offsets = [1, 0], sizes = [1, 256], strides = [1, 1]} : vector<4x256xf32> to vector<1x256xf32>
    %26 = vector.broadcast %24 : vector<4x1xf32> to vector<4x256xf32>
    %27 = vector.broadcast %25 : vector<1x256xf32> to vector<4x256xf32>
    %28 = arith.mulf %26, %27 : vector<4x256xf32>
    %29 = arith.addf %23, %28 : vector<4x256xf32>
    %30 = vector.extract_strided_slice %10 {offsets = [0, 2], sizes = [4, 1], strides = [1, 1]} : vector<4x36xf32> to vector<4x1xf32>
    %31 = vector.extract_strided_slice %17 {offsets = [2, 0], sizes = [1, 256], strides = [1, 1]} : vector<4x256xf32> to vector<1x256xf32>
    %32 = vector.broadcast %30 : vector<4x1xf32> to vector<4x256xf32>
    %33 = vector.broadcast %31 : vector<1x256xf32> to vector<4x256xf32>
    %34 = arith.mulf %32, %33 : vector<4x256xf32>
    %35 = arith.addf %29, %34 : vector<4x256xf32>
    %36 = vector.extract_strided_slice %10 {offsets = [0, 3], sizes = [4, 1], strides = [1, 1]} : vector<4x36xf32> to vector<4x1xf32>
    %37 = vector.extract_strided_slice %17 {offsets = [3, 0], sizes = [1, 256], strides = [1, 1]} : vector<4x256xf32> to vector<1x256xf32>
    %38 = vector.broadcast %36 : vector<4x1xf32> to vector<4x256xf32>
    %39 = vector.broadcast %37 : vector<1x256xf32> to vector<4x256xf32>
    %40 = arith.mulf %38, %39 : vector<4x256xf32>
    %41 = arith.addf %35, %40 : vector<4x256xf32>
    %c16_i32 = arith.constant 16 : i32
    %42 = tpu.dynamic_rotate %9 by %c16_i32 dim 1 : vector<4x256xf32>, i32 -> vector<4x256xf32>
    %43 = vector.extract_strided_slice %0 {offsets = [1, 0], sizes = [1, 256], strides = [1, 1]} : vector<9x256xf32> to vector<1x256xf32>
    %44 = vector.broadcast %43 : vector<1x256xf32> to vector<4x256xf32>
    %45 = arith.mulf %42, %44 : vector<4x256xf32>
    %46 = vector.extract_strided_slice %10 {offsets = [0, 4], sizes = [4, 1], strides = [1, 1]} : vector<4x36xf32> to vector<4x1xf32>
    %47 = vector.extract_strided_slice %45 {offsets = [0, 0], sizes = [1, 256], strides = [1, 1]} : vector<4x256xf32> to vector<1x256xf32>
    %48 = vector.broadcast %46 : vector<4x1xf32> to vector<4x256xf32>
    %49 = vector.broadcast %47 : vector<1x256xf32> to vector<4x256xf32>
    %50 = arith.mulf %48, %49 : vector<4x256xf32>
    %51 = arith.addf %41, %50 : vector<4x256xf32>
    %52 = vector.extract_strided_slice %10 {offsets = [0, 5], sizes = [4, 1], strides = [1, 1]} : vector<4x36xf32> to vector<4x1xf32>
    %53 = vector.extract_strided_slice %45 {offsets = [1, 0], sizes = [1, 256], strides = [1, 1]} : vector<4x256xf32> to vector<1x256xf32>
    %54 = vector.broadcast %52 : vector<4x1xf32> to vector<4x256xf32>
    %55 = vector.broadcast %53 : vector<1x256xf32> to vector<4x256xf32>
    %56 = arith.mulf %54, %55 : vector<4x256xf32>
    %57 = arith.addf %51, %56 : vector<4x256xf32>
    %58 = vector.extract_strided_slice %10 {offsets = [0, 6], sizes = [4, 1], strides = [1, 1]} : vector<4x36xf32> to vector<4x1xf32>
    %59 = vector.extract_strided_slice %45 {offsets = [2, 0], sizes = [1, 256], strides = [1, 1]} : vector<4x256xf32> to vector<1x256xf32>
    %60 = vector.broadcast %58 : vector<4x1xf32> to vector<4x256xf32>
    %61 = vector.broadcast %59 : vector<1x256xf32> to vector<4x256xf32>
    %62 = arith.mulf %60, %61 : vector<4x256xf32>
    %63 = arith.addf %57, %62 : vector<4x256xf32>
    %64 = vector.extract_strided_slice %10 {offsets = [0, 7], sizes = [4, 1], strides = [1, 1]} : vector<4x36xf32> to vector<4x1xf32>
    %65 = vector.extract_strided_slice %45 {offsets = [3, 0], sizes = [1, 256], strides = [1, 1]} : vector<4x256xf32> to vector<1x256xf32>
    %66 = vector.broadcast %64 : vector<4x1xf32> to vector<4x256xf32>
    %67 = vector.broadcast %65 : vector<1x256xf32> to vector<4x256xf32>
    %68 = arith.mulf %66, %67 : vector<4x256xf32>
    %69 = arith.addf %63, %68 : vector<4x256xf32>
    %c15_i32 = arith.constant 15 : i32
    %70 = tpu.dynamic_rotate %9 by %c15_i32 dim 1 : vector<4x256xf32>, i32 -> vector<4x256xf32>
    %71 = vector.extract_strided_slice %0 {offsets = [2, 0], sizes = [1, 256], strides = [1, 1]} : vector<9x256xf32> to vector<1x256xf32>
    %72 = vector.broadcast %71 : vector<1x256xf32> to vector<4x256xf32>
    %73 = arith.mulf %70, %72 : vector<4x256xf32>
    %74 = vector.extract_strided_slice %10 {offsets = [0, 8], sizes = [4, 1], strides = [1, 1]} : vector<4x36xf32> to vector<4x1xf32>
    %75 = vector.extract_strided_slice %73 {offsets = [0, 0], sizes = [1, 256], strides = [1, 1]} : vector<4x256xf32> to vector<1x256xf32>
    %76 = vector.broadcast %74 : vector<4x1xf32> to vector<4x256xf32>
    %77 = vector.broadcast %75 : vector<1x256xf32> to vector<4x256xf32>
    %78 = arith.mulf %76, %77 : vector<4x256xf32>
    %79 = arith.addf %69, %78 : vector<4x256xf32>
    %80 = vector.extract_strided_slice %10 {offsets = [0, 9], sizes = [4, 1], strides = [1, 1]} : vector<4x36xf32> to vector<4x1xf32>
    %81 = vector.extract_strided_slice %73 {offsets = [1, 0], sizes = [1, 256], strides = [1, 1]} : vector<4x256xf32> to vector<1x256xf32>
    %82 = vector.broadcast %80 : vector<4x1xf32> to vector<4x256xf32>
    %83 = vector.broadcast %81 : vector<1x256xf32> to vector<4x256xf32>
    %84 = arith.mulf %82, %83 : vector<4x256xf32>
    %85 = arith.addf %79, %84 : vector<4x256xf32>
    %86 = vector.extract_strided_slice %10 {offsets = [0, 10], sizes = [4, 1], strides = [1, 1]} : vector<4x36xf32> to vector<4x1xf32>
    %87 = vector.extract_strided_slice %73 {offsets = [2, 0], sizes = [1, 256], strides = [1, 1]} : vector<4x256xf32> to vector<1x256xf32>
    %88 = vector.broadcast %86 : vector<4x1xf32> to vector<4x256xf32>
    %89 = vector.broadcast %87 : vector<1x256xf32> to vector<4x256xf32>
    %90 = arith.mulf %88, %89 : vector<4x256xf32>
    %91 = arith.addf %85, %90 : vector<4x256xf32>
    %92 = vector.extract_strided_slice %10 {offsets = [0, 11], sizes = [4, 1], strides = [1, 1]} : vector<4x36xf32> to vector<4x1xf32>
    %93 = vector.extract_strided_slice %73 {offsets = [3, 0], sizes = [1, 256], strides = [1, 1]} : vector<4x256xf32> to vector<1x256xf32>
    %94 = vector.broadcast %92 : vector<4x1xf32> to vector<4x256xf32>
    %95 = vector.broadcast %93 : vector<1x256xf32> to vector<4x256xf32>
    %96 = arith.mulf %94, %95 : vector<4x256xf32>
    %97 = arith.addf %91, %96 : vector<4x256xf32>
    %c1_i32 = arith.constant 1 : i32
    %98 = tpu.dynamic_rotate %9 by %c1_i32 dim 1 : vector<4x256xf32>, i32 -> vector<4x256xf32>
    %99 = vector.extract_strided_slice %0 {offsets = [3, 0], sizes = [1, 256], strides = [1, 1]} : vector<9x256xf32> to vector<1x256xf32>
    %100 = vector.broadcast %99 : vector<1x256xf32> to vector<4x256xf32>
    %101 = arith.mulf %98, %100 : vector<4x256xf32>
    %102 = vector.extract_strided_slice %10 {offsets = [0, 12], sizes = [4, 1], strides = [1, 1]} : vector<4x36xf32> to vector<4x1xf32>
    %103 = vector.extract_strided_slice %101 {offsets = [0, 0], sizes = [1, 256], strides = [1, 1]} : vector<4x256xf32> to vector<1x256xf32>
    %104 = vector.broadcast %102 : vector<4x1xf32> to vector<4x256xf32>
    %105 = vector.broadcast %103 : vector<1x256xf32> to vector<4x256xf32>
    %106 = arith.mulf %104, %105 : vector<4x256xf32>
    %107 = arith.addf %97, %106 : vector<4x256xf32>
    %108 = vector.extract_strided_slice %10 {offsets = [0, 13], sizes = [4, 1], strides = [1, 1]} : vector<4x36xf32> to vector<4x1xf32>
    %109 = vector.extract_strided_slice %101 {offsets = [1, 0], sizes = [1, 256], strides = [1, 1]} : vector<4x256xf32> to vector<1x256xf32>
    %110 = vector.broadcast %108 : vector<4x1xf32> to vector<4x256xf32>
    %111 = vector.broadcast %109 : vector<1x256xf32> to vector<4x256xf32>
    %112 = arith.mulf %110, %111 : vector<4x256xf32>
    %113 = arith.addf %107, %112 : vector<4x256xf32>
    %114 = vector.extract_strided_slice %10 {offsets = [0, 14], sizes = [4, 1], strides = [1, 1]} : vector<4x36xf32> to vector<4x1xf32>
    %115 = vector.extract_strided_slice %101 {offsets = [2, 0], sizes = [1, 256], strides = [1, 1]} : vector<4x256xf32> to vector<1x256xf32>
    %116 = vector.broadcast %114 : vector<4x1xf32> to vector<4x256xf32>
    %117 = vector.broadcast %115 : vector<1x256xf32> to vector<4x256xf32>
    %118 = arith.mulf %116, %117 : vector<4x256xf32>
    %119 = arith.addf %113, %118 : vector<4x256xf32>
    %120 = vector.extract_strided_slice %10 {offsets = [0, 15], sizes = [4, 1], strides = [1, 1]} : vector<4x36xf32> to vector<4x1xf32>
    %121 = vector.extract_strided_slice %101 {offsets = [3, 0], sizes = [1, 256], strides = [1, 1]} : vector<4x256xf32> to vector<1x256xf32>
    %122 = vector.broadcast %120 : vector<4x1xf32> to vector<4x256xf32>
    %123 = vector.broadcast %121 : vector<1x256xf32> to vector<4x256xf32>
    %124 = arith.mulf %122, %123 : vector<4x256xf32>
    %125 = arith.addf %119, %124 : vector<4x256xf32>
    %126 = vector.extract_strided_slice %10 {offsets = [0, 16], sizes = [4, 1], strides = [1, 1]} : vector<4x36xf32> to vector<4x1xf32>
    %127 = vector.extract_strided_slice %9 {offsets = [0, 0], sizes = [1, 256], strides = [1, 1]} : vector<4x256xf32> to vector<1x256xf32>
    %128 = vector.broadcast %126 : vector<4x1xf32> to vector<4x256xf32>
    %129 = vector.broadcast %127 : vector<1x256xf32> to vector<4x256xf32>
    %130 = arith.mulf %128, %129 : vector<4x256xf32>
    %131 = arith.addf %125, %130 : vector<4x256xf32>
    %132 = vector.extract_strided_slice %10 {offsets = [0, 17], sizes = [4, 1], strides = [1, 1]} : vector<4x36xf32> to vector<4x1xf32>
    %133 = vector.extract_strided_slice %9 {offsets = [1, 0], sizes = [1, 256], strides = [1, 1]} : vector<4x256xf32> to vector<1x256xf32>
    %134 = vector.broadcast %132 : vector<4x1xf32> to vector<4x256xf32>
    %135 = vector.broadcast %133 : vector<1x256xf32> to vector<4x256xf32>
    %136 = arith.mulf %134, %135 : vector<4x256xf32>
    %137 = arith.addf %131, %136 : vector<4x256xf32>
    %138 = vector.extract_strided_slice %10 {offsets = [0, 18], sizes = [4, 1], strides = [1, 1]} : vector<4x36xf32> to vector<4x1xf32>
    %139 = vector.extract_strided_slice %9 {offsets = [2, 0], sizes = [1, 256], strides = [1, 1]} : vector<4x256xf32> to vector<1x256xf32>
    %140 = vector.broadcast %138 : vector<4x1xf32> to vector<4x256xf32>
    %141 = vector.broadcast %139 : vector<1x256xf32> to vector<4x256xf32>
    %142 = arith.mulf %140, %141 : vector<4x256xf32>
    %143 = arith.addf %137, %142 : vector<4x256xf32>
    %144 = vector.extract_strided_slice %10 {offsets = [0, 19], sizes = [4, 1], strides = [1, 1]} : vector<4x36xf32> to vector<4x1xf32>
    %145 = vector.extract_strided_slice %9 {offsets = [3, 0], sizes = [1, 256], strides = [1, 1]} : vector<4x256xf32> to vector<1x256xf32>
    %146 = vector.broadcast %144 : vector<4x1xf32> to vector<4x256xf32>
    %147 = vector.broadcast %145 : vector<1x256xf32> to vector<4x256xf32>
    %148 = arith.mulf %146, %147 : vector<4x256xf32>
    %149 = arith.addf %143, %148 : vector<4x256xf32>
    %c255_i32 = arith.constant 255 : i32
    %150 = tpu.dynamic_rotate %9 by %c255_i32 dim 1 : vector<4x256xf32>, i32 -> vector<4x256xf32>
    %151 = vector.extract_strided_slice %0 {offsets = [5, 0], sizes = [1, 256], strides = [1, 1]} : vector<9x256xf32> to vector<1x256xf32>
    %152 = vector.broadcast %151 : vector<1x256xf32> to vector<4x256xf32>
    %153 = arith.mulf %150, %152 : vector<4x256xf32>
    %154 = vector.extract_strided_slice %10 {offsets = [0, 20], sizes = [4, 1], strides = [1, 1]} : vector<4x36xf32> to vector<4x1xf32>
    %155 = vector.extract_strided_slice %153 {offsets = [0, 0], sizes = [1, 256], strides = [1, 1]} : vector<4x256xf32> to vector<1x256xf32>
    %156 = vector.broadcast %154 : vector<4x1xf32> to vector<4x256xf32>
    %157 = vector.broadcast %155 : vector<1x256xf32> to vector<4x256xf32>
    %158 = arith.mulf %156, %157 : vector<4x256xf32>
    %159 = arith.addf %149, %158 : vector<4x256xf32>
    %160 = vector.extract_strided_slice %10 {offsets = [0, 21], sizes = [4, 1], strides = [1, 1]} : vector<4x36xf32> to vector<4x1xf32>
    %161 = vector.extract_strided_slice %153 {offsets = [1, 0], sizes = [1, 256], strides = [1, 1]} : vector<4x256xf32> to vector<1x256xf32>
    %162 = vector.broadcast %160 : vector<4x1xf32> to vector<4x256xf32>
    %163 = vector.broadcast %161 : vector<1x256xf32> to vector<4x256xf32>
    %164 = arith.mulf %162, %163 : vector<4x256xf32>
    %165 = arith.addf %159, %164 : vector<4x256xf32>
    %166 = vector.extract_strided_slice %10 {offsets = [0, 22], sizes = [4, 1], strides = [1, 1]} : vector<4x36xf32> to vector<4x1xf32>
    %167 = vector.extract_strided_slice %153 {offsets = [2, 0], sizes = [1, 256], strides = [1, 1]} : vector<4x256xf32> to vector<1x256xf32>
    %168 = vector.broadcast %166 : vector<4x1xf32> to vector<4x256xf32>
    %169 = vector.broadcast %167 : vector<1x256xf32> to vector<4x256xf32>
    %170 = arith.mulf %168, %169 : vector<4x256xf32>
    %171 = arith.addf %165, %170 : vector<4x256xf32>
    %172 = vector.extract_strided_slice %10 {offsets = [0, 23], sizes = [4, 1], strides = [1, 1]} : vector<4x36xf32> to vector<4x1xf32>
    %173 = vector.extract_strided_slice %153 {offsets = [3, 0], sizes = [1, 256], strides = [1, 1]} : vector<4x256xf32> to vector<1x256xf32>
    %174 = vector.broadcast %172 : vector<4x1xf32> to vector<4x256xf32>
    %175 = vector.broadcast %173 : vector<1x256xf32> to vector<4x256xf32>
    %176 = arith.mulf %174, %175 : vector<4x256xf32>
    %177 = arith.addf %171, %176 : vector<4x256xf32>
    %c241_i32 = arith.constant 241 : i32
    %178 = tpu.dynamic_rotate %9 by %c241_i32 dim 1 : vector<4x256xf32>, i32 -> vector<4x256xf32>
    %179 = vector.extract_strided_slice %0 {offsets = [6, 0], sizes = [1, 256], strides = [1, 1]} : vector<9x256xf32> to vector<1x256xf32>
    %180 = vector.broadcast %179 : vector<1x256xf32> to vector<4x256xf32>
    %181 = arith.mulf %178, %180 : vector<4x256xf32>
    %182 = vector.extract_strided_slice %10 {offsets = [0, 24], sizes = [4, 1], strides = [1, 1]} : vector<4x36xf32> to vector<4x1xf32>
    %183 = vector.extract_strided_slice %181 {offsets = [0, 0], sizes = [1, 256], strides = [1, 1]} : vector<4x256xf32> to vector<1x256xf32>
    %184 = vector.broadcast %182 : vector<4x1xf32> to vector<4x256xf32>
    %185 = vector.broadcast %183 : vector<1x256xf32> to vector<4x256xf32>
    %186 = arith.mulf %184, %185 : vector<4x256xf32>
    %187 = arith.addf %177, %186 : vector<4x256xf32>
    %188 = vector.extract_strided_slice %10 {offsets = [0, 25], sizes = [4, 1], strides = [1, 1]} : vector<4x36xf32> to vector<4x1xf32>
    %189 = vector.extract_strided_slice %181 {offsets = [1, 0], sizes = [1, 256], strides = [1, 1]} : vector<4x256xf32> to vector<1x256xf32>
    %190 = vector.broadcast %188 : vector<4x1xf32> to vector<4x256xf32>
    %191 = vector.broadcast %189 : vector<1x256xf32> to vector<4x256xf32>
    %192 = arith.mulf %190, %191 : vector<4x256xf32>
    %193 = arith.addf %187, %192 : vector<4x256xf32>
    %194 = vector.extract_strided_slice %10 {offsets = [0, 26], sizes = [4, 1], strides = [1, 1]} : vector<4x36xf32> to vector<4x1xf32>
    %195 = vector.extract_strided_slice %181 {offsets = [2, 0], sizes = [1, 256], strides = [1, 1]} : vector<4x256xf32> to vector<1x256xf32>
    %196 = vector.broadcast %194 : vector<4x1xf32> to vector<4x256xf32>
    %197 = vector.broadcast %195 : vector<1x256xf32> to vector<4x256xf32>
    %198 = arith.mulf %196, %197 : vector<4x256xf32>
    %199 = arith.addf %193, %198 : vector<4x256xf32>
    %200 = vector.extract_strided_slice %10 {offsets = [0, 27], sizes = [4, 1], strides = [1, 1]} : vector<4x36xf32> to vector<4x1xf32>
    %201 = vector.extract_strided_slice %181 {offsets = [3, 0], sizes = [1, 256], strides = [1, 1]} : vector<4x256xf32> to vector<1x256xf32>
    %202 = vector.broadcast %200 : vector<4x1xf32> to vector<4x256xf32>
    %203 = vector.broadcast %201 : vector<1x256xf32> to vector<4x256xf32>
    %204 = arith.mulf %202, %203 : vector<4x256xf32>
    %205 = arith.addf %199, %204 : vector<4x256xf32>
    %c240_i32 = arith.constant 240 : i32
    %206 = tpu.dynamic_rotate %9 by %c240_i32 dim 1 : vector<4x256xf32>, i32 -> vector<4x256xf32>
    %207 = vector.extract_strided_slice %0 {offsets = [7, 0], sizes = [1, 256], strides = [1, 1]} : vector<9x256xf32> to vector<1x256xf32>
    %208 = vector.broadcast %207 : vector<1x256xf32> to vector<4x256xf32>
    %209 = arith.mulf %206, %208 : vector<4x256xf32>
    %210 = vector.extract_strided_slice %10 {offsets = [0, 28], sizes = [4, 1], strides = [1, 1]} : vector<4x36xf32> to vector<4x1xf32>
    %211 = vector.extract_strided_slice %209 {offsets = [0, 0], sizes = [1, 256], strides = [1, 1]} : vector<4x256xf32> to vector<1x256xf32>
    %212 = vector.broadcast %210 : vector<4x1xf32> to vector<4x256xf32>
    %213 = vector.broadcast %211 : vector<1x256xf32> to vector<4x256xf32>
    %214 = arith.mulf %212, %213 : vector<4x256xf32>
    %215 = arith.addf %205, %214 : vector<4x256xf32>
    %216 = vector.extract_strided_slice %10 {offsets = [0, 29], sizes = [4, 1], strides = [1, 1]} : vector<4x36xf32> to vector<4x1xf32>
    %217 = vector.extract_strided_slice %209 {offsets = [1, 0], sizes = [1, 256], strides = [1, 1]} : vector<4x256xf32> to vector<1x256xf32>
    %218 = vector.broadcast %216 : vector<4x1xf32> to vector<4x256xf32>
    %219 = vector.broadcast %217 : vector<1x256xf32> to vector<4x256xf32>
    %220 = arith.mulf %218, %219 : vector<4x256xf32>
    %221 = arith.addf %215, %220 : vector<4x256xf32>
    %222 = vector.extract_strided_slice %10 {offsets = [0, 30], sizes = [4, 1], strides = [1, 1]} : vector<4x36xf32> to vector<4x1xf32>
    %223 = vector.extract_strided_slice %209 {offsets = [2, 0], sizes = [1, 256], strides = [1, 1]} : vector<4x256xf32> to vector<1x256xf32>
    %224 = vector.broadcast %222 : vector<4x1xf32> to vector<4x256xf32>
    %225 = vector.broadcast %223 : vector<1x256xf32> to vector<4x256xf32>
    %226 = arith.mulf %224, %225 : vector<4x256xf32>
    %227 = arith.addf %221, %226 : vector<4x256xf32>
    %228 = vector.extract_strided_slice %10 {offsets = [0, 31], sizes = [4, 1], strides = [1, 1]} : vector<4x36xf32> to vector<4x1xf32>
    %229 = vector.extract_strided_slice %209 {offsets = [3, 0], sizes = [1, 256], strides = [1, 1]} : vector<4x256xf32> to vector<1x256xf32>
    %230 = vector.broadcast %228 : vector<4x1xf32> to vector<4x256xf32>
    %231 = vector.broadcast %229 : vector<1x256xf32> to vector<4x256xf32>
    %232 = arith.mulf %230, %231 : vector<4x256xf32>
    %233 = arith.addf %227, %232 : vector<4x256xf32>
    %c239_i32 = arith.constant 239 : i32
    %234 = tpu.dynamic_rotate %9 by %c239_i32 dim 1 : vector<4x256xf32>, i32 -> vector<4x256xf32>
    %235 = vector.extract_strided_slice %0 {offsets = [8, 0], sizes = [1, 256], strides = [1, 1]} : vector<9x256xf32> to vector<1x256xf32>
    %236 = vector.broadcast %235 : vector<1x256xf32> to vector<4x256xf32>
    %237 = arith.mulf %234, %236 : vector<4x256xf32>
    %238 = vector.extract_strided_slice %10 {offsets = [0, 32], sizes = [4, 1], strides = [1, 1]} : vector<4x36xf32> to vector<4x1xf32>
    %239 = vector.extract_strided_slice %237 {offsets = [0, 0], sizes = [1, 256], strides = [1, 1]} : vector<4x256xf32> to vector<1x256xf32>
    %240 = vector.broadcast %238 : vector<4x1xf32> to vector<4x256xf32>
    %241 = vector.broadcast %239 : vector<1x256xf32> to vector<4x256xf32>
    %242 = arith.mulf %240, %241 : vector<4x256xf32>
    %243 = arith.addf %233, %242 : vector<4x256xf32>
    %244 = vector.extract_strided_slice %10 {offsets = [0, 33], sizes = [4, 1], strides = [1, 1]} : vector<4x36xf32> to vector<4x1xf32>
    %245 = vector.extract_strided_slice %237 {offsets = [1, 0], sizes = [1, 256], strides = [1, 1]} : vector<4x256xf32> to vector<1x256xf32>
    %246 = vector.broadcast %244 : vector<4x1xf32> to vector<4x256xf32>
    %247 = vector.broadcast %245 : vector<1x256xf32> to vector<4x256xf32>
    %248 = arith.mulf %246, %247 : vector<4x256xf32>
    %249 = arith.addf %243, %248 : vector<4x256xf32>
    %250 = vector.extract_strided_slice %10 {offsets = [0, 34], sizes = [4, 1], strides = [1, 1]} : vector<4x36xf32> to vector<4x1xf32>
    %251 = vector.extract_strided_slice %237 {offsets = [2, 0], sizes = [1, 256], strides = [1, 1]} : vector<4x256xf32> to vector<1x256xf32>
    %252 = vector.broadcast %250 : vector<4x1xf32> to vector<4x256xf32>
    %253 = vector.broadcast %251 : vector<1x256xf32> to vector<4x256xf32>
    %254 = arith.mulf %252, %253 : vector<4x256xf32>
    %255 = arith.addf %249, %254 : vector<4x256xf32>
    %256 = vector.extract_strided_slice %10 {offsets = [0, 35], sizes = [4, 1], strides = [1, 1]} : vector<4x36xf32> to vector<4x1xf32>
    %257 = vector.extract_strided_slice %237 {offsets = [3, 0], sizes = [1, 256], strides = [1, 1]} : vector<4x256xf32> to vector<1x256xf32>
    %258 = vector.broadcast %256 : vector<4x1xf32> to vector<4x256xf32>
    %259 = vector.broadcast %257 : vector<1x256xf32> to vector<4x256xf32>
    %260 = arith.mulf %258, %259 : vector<4x256xf32>
    %261 = arith.addf %255, %260 : vector<4x256xf32>
    %cst = arith.constant 0.000000e+00 : f32
    %262 = vector.broadcast %cst : f32 to vector<4x256xf32>
    %263 = arith.cmpf oge, %261, %262 : vector<4x256xf32>
    %cst_17 = arith.constant 2.000000e-01 : f32
    %264 = vector.broadcast %cst_17 : f32 to vector<4x256xf32>
    %265 = arith.mulf %264, %261 : vector<4x256xf32>
    %266 = arith.select %263, %261, %265 : vector<4x256xi1>, vector<4x256xf32>
    %267 = arith.addf %266, %4 : vector<4x256xf32>
    %268 = arith.subf %6, %267 : vector<4x256xf32>
    %c0_18 = arith.constant 0 : index
    %c0_19 = arith.constant 0 : index
    %269 = vector.load %arg8[%c0_18, %c0_19] : memref<4x36xf32, #tpu.memory_space<vmem>>, vector<4x36xf32>
    %c0_20 = arith.constant 0 : index
    %c0_21 = arith.constant 0 : index
    %270 = vector.load %arg9[%c0_20, %c0_21] : memref<4x1xf32, #tpu.memory_space<vmem>>, vector<4x1xf32>
    %271 = vector.shape_cast %270 : vector<4x1xf32> to vector<4x1xf32>
    %272 = vector.broadcast %271 : vector<4x1xf32> to vector<4x256xf32>
    %c17_i32_22 = arith.constant 17 : i32
    %273 = tpu.dynamic_rotate %268 by %c17_i32_22 dim 1 : vector<4x256xf32>, i32 -> vector<4x256xf32>
    %274 = vector.extract_strided_slice %0 {offsets = [0, 0], sizes = [1, 256], strides = [1, 1]} : vector<9x256xf32> to vector<1x256xf32>
    %275 = vector.broadcast %274 : vector<1x256xf32> to vector<4x256xf32>
    %276 = arith.mulf %273, %275 : vector<4x256xf32>
    %277 = vector.extract_strided_slice %269 {offsets = [0, 0], sizes = [4, 1], strides = [1, 1]} : vector<4x36xf32> to vector<4x1xf32>
    %278 = vector.extract_strided_slice %276 {offsets = [0, 0], sizes = [1, 256], strides = [1, 1]} : vector<4x256xf32> to vector<1x256xf32>
    %279 = vector.broadcast %277 : vector<4x1xf32> to vector<4x256xf32>
    %280 = vector.broadcast %278 : vector<1x256xf32> to vector<4x256xf32>
    %281 = arith.mulf %279, %280 : vector<4x256xf32>
    %282 = arith.addf %272, %281 : vector<4x256xf32>
    %283 = vector.extract_strided_slice %269 {offsets = [0, 1], sizes = [4, 1], strides = [1, 1]} : vector<4x36xf32> to vector<4x1xf32>
    %284 = vector.extract_strided_slice %276 {offsets = [1, 0], sizes = [1, 256], strides = [1, 1]} : vector<4x256xf32> to vector<1x256xf32>
    %285 = vector.broadcast %283 : vector<4x1xf32> to vector<4x256xf32>
    %286 = vector.broadcast %284 : vector<1x256xf32> to vector<4x256xf32>
    %287 = arith.mulf %285, %286 : vector<4x256xf32>
    %288 = arith.addf %282, %287 : vector<4x256xf32>
    %289 = vector.extract_strided_slice %269 {offsets = [0, 2], sizes = [4, 1], strides = [1, 1]} : vector<4x36xf32> to vector<4x1xf32>
    %290 = vector.extract_strided_slice %276 {offsets = [2, 0], sizes = [1, 256], strides = [1, 1]} : vector<4x256xf32> to vector<1x256xf32>
    %291 = vector.broadcast %289 : vector<4x1xf32> to vector<4x256xf32>
    %292 = vector.broadcast %290 : vector<1x256xf32> to vector<4x256xf32>
    %293 = arith.mulf %291, %292 : vector<4x256xf32>
    %294 = arith.addf %288, %293 : vector<4x256xf32>
    %295 = vector.extract_strided_slice %269 {offsets = [0, 3], sizes = [4, 1], strides = [1, 1]} : vector<4x36xf32> to vector<4x1xf32>
    %296 = vector.extract_strided_slice %276 {offsets = [3, 0], sizes = [1, 256], strides = [1, 1]} : vector<4x256xf32> to vector<1x256xf32>
    %297 = vector.broadcast %295 : vector<4x1xf32> to vector<4x256xf32>
    %298 = vector.broadcast %296 : vector<1x256xf32> to vector<4x256xf32>
    %299 = arith.mulf %297, %298 : vector<4x256xf32>
    %300 = arith.addf %294, %299 : vector<4x256xf32>
    %c16_i32_23 = arith.constant 16 : i32
    %301 = tpu.dynamic_rotate %268 by %c16_i32_23 dim 1 : vector<4x256xf32>, i32 -> vector<4x256xf32>
    %302 = vector.extract_strided_slice %0 {offsets = [1, 0], sizes = [1, 256], strides = [1, 1]} : vector<9x256xf32> to vector<1x256xf32>
    %303 = vector.broadcast %302 : vector<1x256xf32> to vector<4x256xf32>
    %304 = arith.mulf %301, %303 : vector<4x256xf32>
    %305 = vector.extract_strided_slice %269 {offsets = [0, 4], sizes = [4, 1], strides = [1, 1]} : vector<4x36xf32> to vector<4x1xf32>
    %306 = vector.extract_strided_slice %304 {offsets = [0, 0], sizes = [1, 256], strides = [1, 1]} : vector<4x256xf32> to vector<1x256xf32>
    %307 = vector.broadcast %305 : vector<4x1xf32> to vector<4x256xf32>
    %308 = vector.broadcast %306 : vector<1x256xf32> to vector<4x256xf32>
    %309 = arith.mulf %307, %308 : vector<4x256xf32>
    %310 = arith.addf %300, %309 : vector<4x256xf32>
    %311 = vector.extract_strided_slice %269 {offsets = [0, 5], sizes = [4, 1], strides = [1, 1]} : vector<4x36xf32> to vector<4x1xf32>
    %312 = vector.extract_strided_slice %304 {offsets = [1, 0], sizes = [1, 256], strides = [1, 1]} : vector<4x256xf32> to vector<1x256xf32>
    %313 = vector.broadcast %311 : vector<4x1xf32> to vector<4x256xf32>
    %314 = vector.broadcast %312 : vector<1x256xf32> to vector<4x256xf32>
    %315 = arith.mulf %313, %314 : vector<4x256xf32>
    %316 = arith.addf %310, %315 : vector<4x256xf32>
    %317 = vector.extract_strided_slice %269 {offsets = [0, 6], sizes = [4, 1], strides = [1, 1]} : vector<4x36xf32> to vector<4x1xf32>
    %318 = vector.extract_strided_slice %304 {offsets = [2, 0], sizes = [1, 256], strides = [1, 1]} : vector<4x256xf32> to vector<1x256xf32>
    %319 = vector.broadcast %317 : vector<4x1xf32> to vector<4x256xf32>
    %320 = vector.broadcast %318 : vector<1x256xf32> to vector<4x256xf32>
    %321 = arith.mulf %319, %320 : vector<4x256xf32>
    %322 = arith.addf %316, %321 : vector<4x256xf32>
    %323 = vector.extract_strided_slice %269 {offsets = [0, 7], sizes = [4, 1], strides = [1, 1]} : vector<4x36xf32> to vector<4x1xf32>
    %324 = vector.extract_strided_slice %304 {offsets = [3, 0], sizes = [1, 256], strides = [1, 1]} : vector<4x256xf32> to vector<1x256xf32>
    %325 = vector.broadcast %323 : vector<4x1xf32> to vector<4x256xf32>
    %326 = vector.broadcast %324 : vector<1x256xf32> to vector<4x256xf32>
    %327 = arith.mulf %325, %326 : vector<4x256xf32>
    %328 = arith.addf %322, %327 : vector<4x256xf32>
    %c15_i32_24 = arith.constant 15 : i32
    %329 = tpu.dynamic_rotate %268 by %c15_i32_24 dim 1 : vector<4x256xf32>, i32 -> vector<4x256xf32>
    %330 = vector.extract_strided_slice %0 {offsets = [2, 0], sizes = [1, 256], strides = [1, 1]} : vector<9x256xf32> to vector<1x256xf32>
    %331 = vector.broadcast %330 : vector<1x256xf32> to vector<4x256xf32>
    %332 = arith.mulf %329, %331 : vector<4x256xf32>
    %333 = vector.extract_strided_slice %269 {offsets = [0, 8], sizes = [4, 1], strides = [1, 1]} : vector<4x36xf32> to vector<4x1xf32>
    %334 = vector.extract_strided_slice %332 {offsets = [0, 0], sizes = [1, 256], strides = [1, 1]} : vector<4x256xf32> to vector<1x256xf32>
    %335 = vector.broadcast %333 : vector<4x1xf32> to vector<4x256xf32>
    %336 = vector.broadcast %334 : vector<1x256xf32> to vector<4x256xf32>
    %337 = arith.mulf %335, %336 : vector<4x256xf32>
    %338 = arith.addf %328, %337 : vector<4x256xf32>
    %339 = vector.extract_strided_slice %269 {offsets = [0, 9], sizes = [4, 1], strides = [1, 1]} : vector<4x36xf32> to vector<4x1xf32>
    %340 = vector.extract_strided_slice %332 {offsets = [1, 0], sizes = [1, 256], strides = [1, 1]} : vector<4x256xf32> to vector<1x256xf32>
    %341 = vector.broadcast %339 : vector<4x1xf32> to vector<4x256xf32>
    %342 = vector.broadcast %340 : vector<1x256xf32> to vector<4x256xf32>
    %343 = arith.mulf %341, %342 : vector<4x256xf32>
    %344 = arith.addf %338, %343 : vector<4x256xf32>
    %345 = vector.extract_strided_slice %269 {offsets = [0, 10], sizes = [4, 1], strides = [1, 1]} : vector<4x36xf32> to vector<4x1xf32>
    %346 = vector.extract_strided_slice %332 {offsets = [2, 0], sizes = [1, 256], strides = [1, 1]} : vector<4x256xf32> to vector<1x256xf32>
    %347 = vector.broadcast %345 : vector<4x1xf32> to vector<4x256xf32>
    %348 = vector.broadcast %346 : vector<1x256xf32> to vector<4x256xf32>
    %349 = arith.mulf %347, %348 : vector<4x256xf32>
    %350 = arith.addf %344, %349 : vector<4x256xf32>
    %351 = vector.extract_strided_slice %269 {offsets = [0, 11], sizes = [4, 1], strides = [1, 1]} : vector<4x36xf32> to vector<4x1xf32>
    %352 = vector.extract_strided_slice %332 {offsets = [3, 0], sizes = [1, 256], strides = [1, 1]} : vector<4x256xf32> to vector<1x256xf32>
    %353 = vector.broadcast %351 : vector<4x1xf32> to vector<4x256xf32>
    %354 = vector.broadcast %352 : vector<1x256xf32> to vector<4x256xf32>
    %355 = arith.mulf %353, %354 : vector<4x256xf32>
    %356 = arith.addf %350, %355 : vector<4x256xf32>
    %c1_i32_25 = arith.constant 1 : i32
    %357 = tpu.dynamic_rotate %268 by %c1_i32_25 dim 1 : vector<4x256xf32>, i32 -> vector<4x256xf32>
    %358 = vector.extract_strided_slice %0 {offsets = [3, 0], sizes = [1, 256], strides = [1, 1]} : vector<9x256xf32> to vector<1x256xf32>
    %359 = vector.broadcast %358 : vector<1x256xf32> to vector<4x256xf32>
    %360 = arith.mulf %357, %359 : vector<4x256xf32>
    %361 = vector.extract_strided_slice %269 {offsets = [0, 12], sizes = [4, 1], strides = [1, 1]} : vector<4x36xf32> to vector<4x1xf32>
    %362 = vector.extract_strided_slice %360 {offsets = [0, 0], sizes = [1, 256], strides = [1, 1]} : vector<4x256xf32> to vector<1x256xf32>
    %363 = vector.broadcast %361 : vector<4x1xf32> to vector<4x256xf32>
    %364 = vector.broadcast %362 : vector<1x256xf32> to vector<4x256xf32>
    %365 = arith.mulf %363, %364 : vector<4x256xf32>
    %366 = arith.addf %356, %365 : vector<4x256xf32>
    %367 = vector.extract_strided_slice %269 {offsets = [0, 13], sizes = [4, 1], strides = [1, 1]} : vector<4x36xf32> to vector<4x1xf32>
    %368 = vector.extract_strided_slice %360 {offsets = [1, 0], sizes = [1, 256], strides = [1, 1]} : vector<4x256xf32> to vector<1x256xf32>
    %369 = vector.broadcast %367 : vector<4x1xf32> to vector<4x256xf32>
    %370 = vector.broadcast %368 : vector<1x256xf32> to vector<4x256xf32>
    %371 = arith.mulf %369, %370 : vector<4x256xf32>
    %372 = arith.addf %366, %371 : vector<4x256xf32>
    %373 = vector.extract_strided_slice %269 {offsets = [0, 14], sizes = [4, 1], strides = [1, 1]} : vector<4x36xf32> to vector<4x1xf32>
    %374 = vector.extract_strided_slice %360 {offsets = [2, 0], sizes = [1, 256], strides = [1, 1]} : vector<4x256xf32> to vector<1x256xf32>
    %375 = vector.broadcast %373 : vector<4x1xf32> to vector<4x256xf32>
    %376 = vector.broadcast %374 : vector<1x256xf32> to vector<4x256xf32>
    %377 = arith.mulf %375, %376 : vector<4x256xf32>
    %378 = arith.addf %372, %377 : vector<4x256xf32>
    %379 = vector.extract_strided_slice %269 {offsets = [0, 15], sizes = [4, 1], strides = [1, 1]} : vector<4x36xf32> to vector<4x1xf32>
    %380 = vector.extract_strided_slice %360 {offsets = [3, 0], sizes = [1, 256], strides = [1, 1]} : vector<4x256xf32> to vector<1x256xf32>
    %381 = vector.broadcast %379 : vector<4x1xf32> to vector<4x256xf32>
    %382 = vector.broadcast %380 : vector<1x256xf32> to vector<4x256xf32>
    %383 = arith.mulf %381, %382 : vector<4x256xf32>
    %384 = arith.addf %378, %383 : vector<4x256xf32>
    %385 = vector.extract_strided_slice %269 {offsets = [0, 16], sizes = [4, 1], strides = [1, 1]} : vector<4x36xf32> to vector<4x1xf32>
    %386 = vector.extract_strided_slice %268 {offsets = [0, 0], sizes = [1, 256], strides = [1, 1]} : vector<4x256xf32> to vector<1x256xf32>
    %387 = vector.broadcast %385 : vector<4x1xf32> to vector<4x256xf32>
    %388 = vector.broadcast %386 : vector<1x256xf32> to vector<4x256xf32>
    %389 = arith.mulf %387, %388 : vector<4x256xf32>
    %390 = arith.addf %384, %389 : vector<4x256xf32>
    %391 = vector.extract_strided_slice %269 {offsets = [0, 17], sizes = [4, 1], strides = [1, 1]} : vector<4x36xf32> to vector<4x1xf32>
    %392 = vector.extract_strided_slice %268 {offsets = [1, 0], sizes = [1, 256], strides = [1, 1]} : vector<4x256xf32> to vector<1x256xf32>
    %393 = vector.broadcast %391 : vector<4x1xf32> to vector<4x256xf32>
    %394 = vector.broadcast %392 : vector<1x256xf32> to vector<4x256xf32>
    %395 = arith.mulf %393, %394 : vector<4x256xf32>
    %396 = arith.addf %390, %395 : vector<4x256xf32>
    %397 = vector.extract_strided_slice %269 {offsets = [0, 18], sizes = [4, 1], strides = [1, 1]} : vector<4x36xf32> to vector<4x1xf32>
    %398 = vector.extract_strided_slice %268 {offsets = [2, 0], sizes = [1, 256], strides = [1, 1]} : vector<4x256xf32> to vector<1x256xf32>
    %399 = vector.broadcast %397 : vector<4x1xf32> to vector<4x256xf32>
    %400 = vector.broadcast %398 : vector<1x256xf32> to vector<4x256xf32>
    %401 = arith.mulf %399, %400 : vector<4x256xf32>
    %402 = arith.addf %396, %401 : vector<4x256xf32>
    %403 = vector.extract_strided_slice %269 {offsets = [0, 19], sizes = [4, 1], strides = [1, 1]} : vector<4x36xf32> to vector<4x1xf32>
    %404 = vector.extract_strided_slice %268 {offsets = [3, 0], sizes = [1, 256], strides = [1, 1]} : vector<4x256xf32> to vector<1x256xf32>
    %405 = vector.broadcast %403 : vector<4x1xf32> to vector<4x256xf32>
    %406 = vector.broadcast %404 : vector<1x256xf32> to vector<4x256xf32>
    %407 = arith.mulf %405, %406 : vector<4x256xf32>
    %408 = arith.addf %402, %407 : vector<4x256xf32>
    %c255_i32_26 = arith.constant 255 : i32
    %409 = tpu.dynamic_rotate %268 by %c255_i32_26 dim 1 : vector<4x256xf32>, i32 -> vector<4x256xf32>
    %410 = vector.extract_strided_slice %0 {offsets = [5, 0], sizes = [1, 256], strides = [1, 1]} : vector<9x256xf32> to vector<1x256xf32>
    %411 = vector.broadcast %410 : vector<1x256xf32> to vector<4x256xf32>
    %412 = arith.mulf %409, %411 : vector<4x256xf32>
    %413 = vector.extract_strided_slice %269 {offsets = [0, 20], sizes = [4, 1], strides = [1, 1]} : vector<4x36xf32> to vector<4x1xf32>
    %414 = vector.extract_strided_slice %412 {offsets = [0, 0], sizes = [1, 256], strides = [1, 1]} : vector<4x256xf32> to vector<1x256xf32>
    %415 = vector.broadcast %413 : vector<4x1xf32> to vector<4x256xf32>
    %416 = vector.broadcast %414 : vector<1x256xf32> to vector<4x256xf32>
    %417 = arith.mulf %415, %416 : vector<4x256xf32>
    %418 = arith.addf %408, %417 : vector<4x256xf32>
    %419 = vector.extract_strided_slice %269 {offsets = [0, 21], sizes = [4, 1], strides = [1, 1]} : vector<4x36xf32> to vector<4x1xf32>
    %420 = vector.extract_strided_slice %412 {offsets = [1, 0], sizes = [1, 256], strides = [1, 1]} : vector<4x256xf32> to vector<1x256xf32>
    %421 = vector.broadcast %419 : vector<4x1xf32> to vector<4x256xf32>
    %422 = vector.broadcast %420 : vector<1x256xf32> to vector<4x256xf32>
    %423 = arith.mulf %421, %422 : vector<4x256xf32>
    %424 = arith.addf %418, %423 : vector<4x256xf32>
    %425 = vector.extract_strided_slice %269 {offsets = [0, 22], sizes = [4, 1], strides = [1, 1]} : vector<4x36xf32> to vector<4x1xf32>
    %426 = vector.extract_strided_slice %412 {offsets = [2, 0], sizes = [1, 256], strides = [1, 1]} : vector<4x256xf32> to vector<1x256xf32>
    %427 = vector.broadcast %425 : vector<4x1xf32> to vector<4x256xf32>
    %428 = vector.broadcast %426 : vector<1x256xf32> to vector<4x256xf32>
    %429 = arith.mulf %427, %428 : vector<4x256xf32>
    %430 = arith.addf %424, %429 : vector<4x256xf32>
    %431 = vector.extract_strided_slice %269 {offsets = [0, 23], sizes = [4, 1], strides = [1, 1]} : vector<4x36xf32> to vector<4x1xf32>
    %432 = vector.extract_strided_slice %412 {offsets = [3, 0], sizes = [1, 256], strides = [1, 1]} : vector<4x256xf32> to vector<1x256xf32>
    %433 = vector.broadcast %431 : vector<4x1xf32> to vector<4x256xf32>
    %434 = vector.broadcast %432 : vector<1x256xf32> to vector<4x256xf32>
    %435 = arith.mulf %433, %434 : vector<4x256xf32>
    %436 = arith.addf %430, %435 : vector<4x256xf32>
    %c241_i32_27 = arith.constant 241 : i32
    %437 = tpu.dynamic_rotate %268 by %c241_i32_27 dim 1 : vector<4x256xf32>, i32 -> vector<4x256xf32>
    %438 = vector.extract_strided_slice %0 {offsets = [6, 0], sizes = [1, 256], strides = [1, 1]} : vector<9x256xf32> to vector<1x256xf32>
    %439 = vector.broadcast %438 : vector<1x256xf32> to vector<4x256xf32>
    %440 = arith.mulf %437, %439 : vector<4x256xf32>
    %441 = vector.extract_strided_slice %269 {offsets = [0, 24], sizes = [4, 1], strides = [1, 1]} : vector<4x36xf32> to vector<4x1xf32>
    %442 = vector.extract_strided_slice %440 {offsets = [0, 0], sizes = [1, 256], strides = [1, 1]} : vector<4x256xf32> to vector<1x256xf32>
    %443 = vector.broadcast %441 : vector<4x1xf32> to vector<4x256xf32>
    %444 = vector.broadcast %442 : vector<1x256xf32> to vector<4x256xf32>
    %445 = arith.mulf %443, %444 : vector<4x256xf32>
    %446 = arith.addf %436, %445 : vector<4x256xf32>
    %447 = vector.extract_strided_slice %269 {offsets = [0, 25], sizes = [4, 1], strides = [1, 1]} : vector<4x36xf32> to vector<4x1xf32>
    %448 = vector.extract_strided_slice %440 {offsets = [1, 0], sizes = [1, 256], strides = [1, 1]} : vector<4x256xf32> to vector<1x256xf32>
    %449 = vector.broadcast %447 : vector<4x1xf32> to vector<4x256xf32>
    %450 = vector.broadcast %448 : vector<1x256xf32> to vector<4x256xf32>
    %451 = arith.mulf %449, %450 : vector<4x256xf32>
    %452 = arith.addf %446, %451 : vector<4x256xf32>
    %453 = vector.extract_strided_slice %269 {offsets = [0, 26], sizes = [4, 1], strides = [1, 1]} : vector<4x36xf32> to vector<4x1xf32>
    %454 = vector.extract_strided_slice %440 {offsets = [2, 0], sizes = [1, 256], strides = [1, 1]} : vector<4x256xf32> to vector<1x256xf32>
    %455 = vector.broadcast %453 : vector<4x1xf32> to vector<4x256xf32>
    %456 = vector.broadcast %454 : vector<1x256xf32> to vector<4x256xf32>
    %457 = arith.mulf %455, %456 : vector<4x256xf32>
    %458 = arith.addf %452, %457 : vector<4x256xf32>
    %459 = vector.extract_strided_slice %269 {offsets = [0, 27], sizes = [4, 1], strides = [1, 1]} : vector<4x36xf32> to vector<4x1xf32>
    %460 = vector.extract_strided_slice %440 {offsets = [3, 0], sizes = [1, 256], strides = [1, 1]} : vector<4x256xf32> to vector<1x256xf32>
    %461 = vector.broadcast %459 : vector<4x1xf32> to vector<4x256xf32>
    %462 = vector.broadcast %460 : vector<1x256xf32> to vector<4x256xf32>
    %463 = arith.mulf %461, %462 : vector<4x256xf32>
    %464 = arith.addf %458, %463 : vector<4x256xf32>
    %c240_i32_28 = arith.constant 240 : i32
    %465 = tpu.dynamic_rotate %268 by %c240_i32_28 dim 1 : vector<4x256xf32>, i32 -> vector<4x256xf32>
    %466 = vector.extract_strided_slice %0 {offsets = [7, 0], sizes = [1, 256], strides = [1, 1]} : vector<9x256xf32> to vector<1x256xf32>
    %467 = vector.broadcast %466 : vector<1x256xf32> to vector<4x256xf32>
    %468 = arith.mulf %465, %467 : vector<4x256xf32>
    %469 = vector.extract_strided_slice %269 {offsets = [0, 28], sizes = [4, 1], strides = [1, 1]} : vector<4x36xf32> to vector<4x1xf32>
    %470 = vector.extract_strided_slice %468 {offsets = [0, 0], sizes = [1, 256], strides = [1, 1]} : vector<4x256xf32> to vector<1x256xf32>
    %471 = vector.broadcast %469 : vector<4x1xf32> to vector<4x256xf32>
    %472 = vector.broadcast %470 : vector<1x256xf32> to vector<4x256xf32>
    %473 = arith.mulf %471, %472 : vector<4x256xf32>
    %474 = arith.addf %464, %473 : vector<4x256xf32>
    %475 = vector.extract_strided_slice %269 {offsets = [0, 29], sizes = [4, 1], strides = [1, 1]} : vector<4x36xf32> to vector<4x1xf32>
    %476 = vector.extract_strided_slice %468 {offsets = [1, 0], sizes = [1, 256], strides = [1, 1]} : vector<4x256xf32> to vector<1x256xf32>
    %477 = vector.broadcast %475 : vector<4x1xf32> to vector<4x256xf32>
    %478 = vector.broadcast %476 : vector<1x256xf32> to vector<4x256xf32>
    %479 = arith.mulf %477, %478 : vector<4x256xf32>
    %480 = arith.addf %474, %479 : vector<4x256xf32>
    %481 = vector.extract_strided_slice %269 {offsets = [0, 30], sizes = [4, 1], strides = [1, 1]} : vector<4x36xf32> to vector<4x1xf32>
    %482 = vector.extract_strided_slice %468 {offsets = [2, 0], sizes = [1, 256], strides = [1, 1]} : vector<4x256xf32> to vector<1x256xf32>
    %483 = vector.broadcast %481 : vector<4x1xf32> to vector<4x256xf32>
    %484 = vector.broadcast %482 : vector<1x256xf32> to vector<4x256xf32>
    %485 = arith.mulf %483, %484 : vector<4x256xf32>
    %486 = arith.addf %480, %485 : vector<4x256xf32>
    %487 = vector.extract_strided_slice %269 {offsets = [0, 31], sizes = [4, 1], strides = [1, 1]} : vector<4x36xf32> to vector<4x1xf32>
    %488 = vector.extract_strided_slice %468 {offsets = [3, 0], sizes = [1, 256], strides = [1, 1]} : vector<4x256xf32> to vector<1x256xf32>
    %489 = vector.broadcast %487 : vector<4x1xf32> to vector<4x256xf32>
    %490 = vector.broadcast %488 : vector<1x256xf32> to vector<4x256xf32>
    %491 = arith.mulf %489, %490 : vector<4x256xf32>
    %492 = arith.addf %486, %491 : vector<4x256xf32>
    %c239_i32_29 = arith.constant 239 : i32
    %493 = tpu.dynamic_rotate %268 by %c239_i32_29 dim 1 : vector<4x256xf32>, i32 -> vector<4x256xf32>
    %494 = vector.extract_strided_slice %0 {offsets = [8, 0], sizes = [1, 256], strides = [1, 1]} : vector<9x256xf32> to vector<1x256xf32>
    %495 = vector.broadcast %494 : vector<1x256xf32> to vector<4x256xf32>
    %496 = arith.mulf %493, %495 : vector<4x256xf32>
    %497 = vector.extract_strided_slice %269 {offsets = [0, 32], sizes = [4, 1], strides = [1, 1]} : vector<4x36xf32> to vector<4x1xf32>
    %498 = vector.extract_strided_slice %496 {offsets = [0, 0], sizes = [1, 256], strides = [1, 1]} : vector<4x256xf32> to vector<1x256xf32>
    %499 = vector.broadcast %497 : vector<4x1xf32> to vector<4x256xf32>
    %500 = vector.broadcast %498 : vector<1x256xf32> to vector<4x256xf32>
    %501 = arith.mulf %499, %500 : vector<4x256xf32>
    %502 = arith.addf %492, %501 : vector<4x256xf32>
    %503 = vector.extract_strided_slice %269 {offsets = [0, 33], sizes = [4, 1], strides = [1, 1]} : vector<4x36xf32> to vector<4x1xf32>
    %504 = vector.extract_strided_slice %496 {offsets = [1, 0], sizes = [1, 256], strides = [1, 1]} : vector<4x256xf32> to vector<1x256xf32>
    %505 = vector.broadcast %503 : vector<4x1xf32> to vector<4x256xf32>
    %506 = vector.broadcast %504 : vector<1x256xf32> to vector<4x256xf32>
    %507 = arith.mulf %505, %506 : vector<4x256xf32>
    %508 = arith.addf %502, %507 : vector<4x256xf32>
    %509 = vector.extract_strided_slice %269 {offsets = [0, 34], sizes = [4, 1], strides = [1, 1]} : vector<4x36xf32> to vector<4x1xf32>
    %510 = vector.extract_strided_slice %496 {offsets = [2, 0], sizes = [1, 256], strides = [1, 1]} : vector<4x256xf32> to vector<1x256xf32>
    %511 = vector.broadcast %509 : vector<4x1xf32> to vector<4x256xf32>
    %512 = vector.broadcast %510 : vector<1x256xf32> to vector<4x256xf32>
    %513 = arith.mulf %511, %512 : vector<4x256xf32>
    %514 = arith.addf %508, %513 : vector<4x256xf32>
    %515 = vector.extract_strided_slice %269 {offsets = [0, 35], sizes = [4, 1], strides = [1, 1]} : vector<4x36xf32> to vector<4x1xf32>
    %516 = vector.extract_strided_slice %496 {offsets = [3, 0], sizes = [1, 256], strides = [1, 1]} : vector<4x256xf32> to vector<1x256xf32>
    %517 = vector.broadcast %515 : vector<4x1xf32> to vector<4x256xf32>
    %518 = vector.broadcast %516 : vector<1x256xf32> to vector<4x256xf32>
    %519 = arith.mulf %517, %518 : vector<4x256xf32>
    %520 = arith.addf %514, %519 : vector<4x256xf32>
    %cst_30 = arith.constant 0.000000e+00 : f32
    %521 = vector.broadcast %cst_30 : f32 to vector<4x256xf32>
    %522 = arith.cmpf oge, %520, %521 : vector<4x256xf32>
    %cst_31 = arith.constant 2.000000e-01 : f32
    %523 = vector.broadcast %cst_31 : f32 to vector<4x256xf32>
    %524 = arith.mulf %523, %520 : vector<4x256xf32>
    %525 = arith.select %522, %520, %524 : vector<4x256xi1>, vector<4x256xf32>
    %526 = arith.addf %525, %6 : vector<4x256xf32>
    %527 = vector.extract_strided_slice %526 {offsets = [0, 0], sizes = [1, 256], strides = [1, 1]} : vector<4x256xf32> to vector<1x256xf32>
    %528 = vector.extract_strided_slice %526 {offsets = [1, 0], sizes = [1, 256], strides = [1, 1]} : vector<4x256xf32> to vector<1x256xf32>
    %529 = arith.maximumf %527, %528 : vector<1x256xf32>
    %530 = vector.extract_strided_slice %526 {offsets = [2, 0], sizes = [1, 256], strides = [1, 1]} : vector<4x256xf32> to vector<1x256xf32>
    %531 = arith.maximumf %529, %530 : vector<1x256xf32>
    %532 = vector.extract_strided_slice %526 {offsets = [3, 0], sizes = [1, 256], strides = [1, 1]} : vector<4x256xf32> to vector<1x256xf32>
    %533 = arith.maximumf %531, %532 : vector<1x256xf32>
    %534 = vector.broadcast %533 : vector<1x256xf32> to vector<4x256xf32>
    %535 = arith.subf %526, %534 : vector<4x256xf32>
    %536 = math.exp %535 : vector<4x256xf32>
    %537 = vector.extract_strided_slice %536 {offsets = [0, 0], sizes = [1, 256], strides = [1, 1]} : vector<4x256xf32> to vector<1x256xf32>
    %538 = vector.extract_strided_slice %536 {offsets = [1, 0], sizes = [1, 256], strides = [1, 1]} : vector<4x256xf32> to vector<1x256xf32>
    %539 = arith.addf %537, %538 : vector<1x256xf32>
    %540 = vector.extract_strided_slice %536 {offsets = [2, 0], sizes = [1, 256], strides = [1, 1]} : vector<4x256xf32> to vector<1x256xf32>
    %541 = arith.addf %539, %540 : vector<1x256xf32>
    %542 = vector.extract_strided_slice %536 {offsets = [3, 0], sizes = [1, 256], strides = [1, 1]} : vector<4x256xf32> to vector<1x256xf32>
    %543 = arith.addf %541, %542 : vector<1x256xf32>
    %544 = tpu.reciprocal %543 {approx = true} : vector<1x256xf32> -> vector<1x256xf32>
    %545 = vector.broadcast %544 : vector<1x256xf32> to vector<4x256xf32>
    %546 = arith.mulf %536, %545 : vector<4x256xf32>
    %547 = arith.mulf %546, %8 : vector<4x256xf32>
    %c0_32 = arith.constant 0 : index
    %c0_33 = arith.constant 0 : index
    %548 = vector.load %arg10[%c0_32, %c0_33] : memref<4x36xf32, #tpu.memory_space<vmem>>, vector<4x36xf32>
    %c0_34 = arith.constant 0 : index
    %c0_35 = arith.constant 0 : index
    %549 = vector.load %arg11[%c0_34, %c0_35] : memref<4x1xf32, #tpu.memory_space<vmem>>, vector<4x1xf32>
    %550 = vector.shape_cast %549 : vector<4x1xf32> to vector<4x1xf32>
    %551 = vector.broadcast %550 : vector<4x1xf32> to vector<4x256xf32>
    %c17_i32_36 = arith.constant 17 : i32
    %552 = tpu.dynamic_rotate %547 by %c17_i32_36 dim 1 : vector<4x256xf32>, i32 -> vector<4x256xf32>
    %553 = vector.extract_strided_slice %0 {offsets = [0, 0], sizes = [1, 256], strides = [1, 1]} : vector<9x256xf32> to vector<1x256xf32>
    %554 = vector.broadcast %553 : vector<1x256xf32> to vector<4x256xf32>
    %555 = arith.mulf %552, %554 : vector<4x256xf32>
    %556 = vector.extract_strided_slice %548 {offsets = [0, 0], sizes = [4, 1], strides = [1, 1]} : vector<4x36xf32> to vector<4x1xf32>
    %557 = vector.extract_strided_slice %555 {offsets = [0, 0], sizes = [1, 256], strides = [1, 1]} : vector<4x256xf32> to vector<1x256xf32>
    %558 = vector.broadcast %556 : vector<4x1xf32> to vector<4x256xf32>
    %559 = vector.broadcast %557 : vector<1x256xf32> to vector<4x256xf32>
    %560 = arith.mulf %558, %559 : vector<4x256xf32>
    %561 = arith.addf %551, %560 : vector<4x256xf32>
    %562 = vector.extract_strided_slice %548 {offsets = [0, 1], sizes = [4, 1], strides = [1, 1]} : vector<4x36xf32> to vector<4x1xf32>
    %563 = vector.extract_strided_slice %555 {offsets = [1, 0], sizes = [1, 256], strides = [1, 1]} : vector<4x256xf32> to vector<1x256xf32>
    %564 = vector.broadcast %562 : vector<4x1xf32> to vector<4x256xf32>
    %565 = vector.broadcast %563 : vector<1x256xf32> to vector<4x256xf32>
    %566 = arith.mulf %564, %565 : vector<4x256xf32>
    %567 = arith.addf %561, %566 : vector<4x256xf32>
    %568 = vector.extract_strided_slice %548 {offsets = [0, 2], sizes = [4, 1], strides = [1, 1]} : vector<4x36xf32> to vector<4x1xf32>
    %569 = vector.extract_strided_slice %555 {offsets = [2, 0], sizes = [1, 256], strides = [1, 1]} : vector<4x256xf32> to vector<1x256xf32>
    %570 = vector.broadcast %568 : vector<4x1xf32> to vector<4x256xf32>
    %571 = vector.broadcast %569 : vector<1x256xf32> to vector<4x256xf32>
    %572 = arith.mulf %570, %571 : vector<4x256xf32>
    %573 = arith.addf %567, %572 : vector<4x256xf32>
    %574 = vector.extract_strided_slice %548 {offsets = [0, 3], sizes = [4, 1], strides = [1, 1]} : vector<4x36xf32> to vector<4x1xf32>
    %575 = vector.extract_strided_slice %555 {offsets = [3, 0], sizes = [1, 256], strides = [1, 1]} : vector<4x256xf32> to vector<1x256xf32>
    %576 = vector.broadcast %574 : vector<4x1xf32> to vector<4x256xf32>
    %577 = vector.broadcast %575 : vector<1x256xf32> to vector<4x256xf32>
    %578 = arith.mulf %576, %577 : vector<4x256xf32>
    %579 = arith.addf %573, %578 : vector<4x256xf32>
    %c16_i32_37 = arith.constant 16 : i32
    %580 = tpu.dynamic_rotate %547 by %c16_i32_37 dim 1 : vector<4x256xf32>, i32 -> vector<4x256xf32>
    %581 = vector.extract_strided_slice %0 {offsets = [1, 0], sizes = [1, 256], strides = [1, 1]} : vector<9x256xf32> to vector<1x256xf32>
    %582 = vector.broadcast %581 : vector<1x256xf32> to vector<4x256xf32>
    %583 = arith.mulf %580, %582 : vector<4x256xf32>
    %584 = vector.extract_strided_slice %548 {offsets = [0, 4], sizes = [4, 1], strides = [1, 1]} : vector<4x36xf32> to vector<4x1xf32>
    %585 = vector.extract_strided_slice %583 {offsets = [0, 0], sizes = [1, 256], strides = [1, 1]} : vector<4x256xf32> to vector<1x256xf32>
    %586 = vector.broadcast %584 : vector<4x1xf32> to vector<4x256xf32>
    %587 = vector.broadcast %585 : vector<1x256xf32> to vector<4x256xf32>
    %588 = arith.mulf %586, %587 : vector<4x256xf32>
    %589 = arith.addf %579, %588 : vector<4x256xf32>
    %590 = vector.extract_strided_slice %548 {offsets = [0, 5], sizes = [4, 1], strides = [1, 1]} : vector<4x36xf32> to vector<4x1xf32>
    %591 = vector.extract_strided_slice %583 {offsets = [1, 0], sizes = [1, 256], strides = [1, 1]} : vector<4x256xf32> to vector<1x256xf32>
    %592 = vector.broadcast %590 : vector<4x1xf32> to vector<4x256xf32>
    %593 = vector.broadcast %591 : vector<1x256xf32> to vector<4x256xf32>
    %594 = arith.mulf %592, %593 : vector<4x256xf32>
    %595 = arith.addf %589, %594 : vector<4x256xf32>
    %596 = vector.extract_strided_slice %548 {offsets = [0, 6], sizes = [4, 1], strides = [1, 1]} : vector<4x36xf32> to vector<4x1xf32>
    %597 = vector.extract_strided_slice %583 {offsets = [2, 0], sizes = [1, 256], strides = [1, 1]} : vector<4x256xf32> to vector<1x256xf32>
    %598 = vector.broadcast %596 : vector<4x1xf32> to vector<4x256xf32>
    %599 = vector.broadcast %597 : vector<1x256xf32> to vector<4x256xf32>
    %600 = arith.mulf %598, %599 : vector<4x256xf32>
    %601 = arith.addf %595, %600 : vector<4x256xf32>
    %602 = vector.extract_strided_slice %548 {offsets = [0, 7], sizes = [4, 1], strides = [1, 1]} : vector<4x36xf32> to vector<4x1xf32>
    %603 = vector.extract_strided_slice %583 {offsets = [3, 0], sizes = [1, 256], strides = [1, 1]} : vector<4x256xf32> to vector<1x256xf32>
    %604 = vector.broadcast %602 : vector<4x1xf32> to vector<4x256xf32>
    %605 = vector.broadcast %603 : vector<1x256xf32> to vector<4x256xf32>
    %606 = arith.mulf %604, %605 : vector<4x256xf32>
    %607 = arith.addf %601, %606 : vector<4x256xf32>
    %c15_i32_38 = arith.constant 15 : i32
    %608 = tpu.dynamic_rotate %547 by %c15_i32_38 dim 1 : vector<4x256xf32>, i32 -> vector<4x256xf32>
    %609 = vector.extract_strided_slice %0 {offsets = [2, 0], sizes = [1, 256], strides = [1, 1]} : vector<9x256xf32> to vector<1x256xf32>
    %610 = vector.broadcast %609 : vector<1x256xf32> to vector<4x256xf32>
    %611 = arith.mulf %608, %610 : vector<4x256xf32>
    %612 = vector.extract_strided_slice %548 {offsets = [0, 8], sizes = [4, 1], strides = [1, 1]} : vector<4x36xf32> to vector<4x1xf32>
    %613 = vector.extract_strided_slice %611 {offsets = [0, 0], sizes = [1, 256], strides = [1, 1]} : vector<4x256xf32> to vector<1x256xf32>
    %614 = vector.broadcast %612 : vector<4x1xf32> to vector<4x256xf32>
    %615 = vector.broadcast %613 : vector<1x256xf32> to vector<4x256xf32>
    %616 = arith.mulf %614, %615 : vector<4x256xf32>
    %617 = arith.addf %607, %616 : vector<4x256xf32>
    %618 = vector.extract_strided_slice %548 {offsets = [0, 9], sizes = [4, 1], strides = [1, 1]} : vector<4x36xf32> to vector<4x1xf32>
    %619 = vector.extract_strided_slice %611 {offsets = [1, 0], sizes = [1, 256], strides = [1, 1]} : vector<4x256xf32> to vector<1x256xf32>
    %620 = vector.broadcast %618 : vector<4x1xf32> to vector<4x256xf32>
    %621 = vector.broadcast %619 : vector<1x256xf32> to vector<4x256xf32>
    %622 = arith.mulf %620, %621 : vector<4x256xf32>
    %623 = arith.addf %617, %622 : vector<4x256xf32>
    %624 = vector.extract_strided_slice %548 {offsets = [0, 10], sizes = [4, 1], strides = [1, 1]} : vector<4x36xf32> to vector<4x1xf32>
    %625 = vector.extract_strided_slice %611 {offsets = [2, 0], sizes = [1, 256], strides = [1, 1]} : vector<4x256xf32> to vector<1x256xf32>
    %626 = vector.broadcast %624 : vector<4x1xf32> to vector<4x256xf32>
    %627 = vector.broadcast %625 : vector<1x256xf32> to vector<4x256xf32>
    %628 = arith.mulf %626, %627 : vector<4x256xf32>
    %629 = arith.addf %623, %628 : vector<4x256xf32>
    %630 = vector.extract_strided_slice %548 {offsets = [0, 11], sizes = [4, 1], strides = [1, 1]} : vector<4x36xf32> to vector<4x1xf32>
    %631 = vector.extract_strided_slice %611 {offsets = [3, 0], sizes = [1, 256], strides = [1, 1]} : vector<4x256xf32> to vector<1x256xf32>
    %632 = vector.broadcast %630 : vector<4x1xf32> to vector<4x256xf32>
    %633 = vector.broadcast %631 : vector<1x256xf32> to vector<4x256xf32>
    %634 = arith.mulf %632, %633 : vector<4x256xf32>
    %635 = arith.addf %629, %634 : vector<4x256xf32>
    %c1_i32_39 = arith.constant 1 : i32
    %636 = tpu.dynamic_rotate %547 by %c1_i32_39 dim 1 : vector<4x256xf32>, i32 -> vector<4x256xf32>
    %637 = vector.extract_strided_slice %0 {offsets = [3, 0], sizes = [1, 256], strides = [1, 1]} : vector<9x256xf32> to vector<1x256xf32>
    %638 = vector.broadcast %637 : vector<1x256xf32> to vector<4x256xf32>
    %639 = arith.mulf %636, %638 : vector<4x256xf32>
    %640 = vector.extract_strided_slice %548 {offsets = [0, 12], sizes = [4, 1], strides = [1, 1]} : vector<4x36xf32> to vector<4x1xf32>
    %641 = vector.extract_strided_slice %639 {offsets = [0, 0], sizes = [1, 256], strides = [1, 1]} : vector<4x256xf32> to vector<1x256xf32>
    %642 = vector.broadcast %640 : vector<4x1xf32> to vector<4x256xf32>
    %643 = vector.broadcast %641 : vector<1x256xf32> to vector<4x256xf32>
    %644 = arith.mulf %642, %643 : vector<4x256xf32>
    %645 = arith.addf %635, %644 : vector<4x256xf32>
    %646 = vector.extract_strided_slice %548 {offsets = [0, 13], sizes = [4, 1], strides = [1, 1]} : vector<4x36xf32> to vector<4x1xf32>
    %647 = vector.extract_strided_slice %639 {offsets = [1, 0], sizes = [1, 256], strides = [1, 1]} : vector<4x256xf32> to vector<1x256xf32>
    %648 = vector.broadcast %646 : vector<4x1xf32> to vector<4x256xf32>
    %649 = vector.broadcast %647 : vector<1x256xf32> to vector<4x256xf32>
    %650 = arith.mulf %648, %649 : vector<4x256xf32>
    %651 = arith.addf %645, %650 : vector<4x256xf32>
    %652 = vector.extract_strided_slice %548 {offsets = [0, 14], sizes = [4, 1], strides = [1, 1]} : vector<4x36xf32> to vector<4x1xf32>
    %653 = vector.extract_strided_slice %639 {offsets = [2, 0], sizes = [1, 256], strides = [1, 1]} : vector<4x256xf32> to vector<1x256xf32>
    %654 = vector.broadcast %652 : vector<4x1xf32> to vector<4x256xf32>
    %655 = vector.broadcast %653 : vector<1x256xf32> to vector<4x256xf32>
    %656 = arith.mulf %654, %655 : vector<4x256xf32>
    %657 = arith.addf %651, %656 : vector<4x256xf32>
    %658 = vector.extract_strided_slice %548 {offsets = [0, 15], sizes = [4, 1], strides = [1, 1]} : vector<4x36xf32> to vector<4x1xf32>
    %659 = vector.extract_strided_slice %639 {offsets = [3, 0], sizes = [1, 256], strides = [1, 1]} : vector<4x256xf32> to vector<1x256xf32>
    %660 = vector.broadcast %658 : vector<4x1xf32> to vector<4x256xf32>
    %661 = vector.broadcast %659 : vector<1x256xf32> to vector<4x256xf32>
    %662 = arith.mulf %660, %661 : vector<4x256xf32>
    %663 = arith.addf %657, %662 : vector<4x256xf32>
    %664 = vector.extract_strided_slice %548 {offsets = [0, 16], sizes = [4, 1], strides = [1, 1]} : vector<4x36xf32> to vector<4x1xf32>
    %665 = vector.extract_strided_slice %547 {offsets = [0, 0], sizes = [1, 256], strides = [1, 1]} : vector<4x256xf32> to vector<1x256xf32>
    %666 = vector.broadcast %664 : vector<4x1xf32> to vector<4x256xf32>
    %667 = vector.broadcast %665 : vector<1x256xf32> to vector<4x256xf32>
    %668 = arith.mulf %666, %667 : vector<4x256xf32>
    %669 = arith.addf %663, %668 : vector<4x256xf32>
    %670 = vector.extract_strided_slice %548 {offsets = [0, 17], sizes = [4, 1], strides = [1, 1]} : vector<4x36xf32> to vector<4x1xf32>
    %671 = vector.extract_strided_slice %547 {offsets = [1, 0], sizes = [1, 256], strides = [1, 1]} : vector<4x256xf32> to vector<1x256xf32>
    %672 = vector.broadcast %670 : vector<4x1xf32> to vector<4x256xf32>
    %673 = vector.broadcast %671 : vector<1x256xf32> to vector<4x256xf32>
    %674 = arith.mulf %672, %673 : vector<4x256xf32>
    %675 = arith.addf %669, %674 : vector<4x256xf32>
    %676 = vector.extract_strided_slice %548 {offsets = [0, 18], sizes = [4, 1], strides = [1, 1]} : vector<4x36xf32> to vector<4x1xf32>
    %677 = vector.extract_strided_slice %547 {offsets = [2, 0], sizes = [1, 256], strides = [1, 1]} : vector<4x256xf32> to vector<1x256xf32>
    %678 = vector.broadcast %676 : vector<4x1xf32> to vector<4x256xf32>
    %679 = vector.broadcast %677 : vector<1x256xf32> to vector<4x256xf32>
    %680 = arith.mulf %678, %679 : vector<4x256xf32>
    %681 = arith.addf %675, %680 : vector<4x256xf32>
    %682 = vector.extract_strided_slice %548 {offsets = [0, 19], sizes = [4, 1], strides = [1, 1]} : vector<4x36xf32> to vector<4x1xf32>
    %683 = vector.extract_strided_slice %547 {offsets = [3, 0], sizes = [1, 256], strides = [1, 1]} : vector<4x256xf32> to vector<1x256xf32>
    %684 = vector.broadcast %682 : vector<4x1xf32> to vector<4x256xf32>
    %685 = vector.broadcast %683 : vector<1x256xf32> to vector<4x256xf32>
    %686 = arith.mulf %684, %685 : vector<4x256xf32>
    %687 = arith.addf %681, %686 : vector<4x256xf32>
    %c255_i32_40 = arith.constant 255 : i32
    %688 = tpu.dynamic_rotate %547 by %c255_i32_40 dim 1 : vector<4x256xf32>, i32 -> vector<4x256xf32>
    %689 = vector.extract_strided_slice %0 {offsets = [5, 0], sizes = [1, 256], strides = [1, 1]} : vector<9x256xf32> to vector<1x256xf32>
    %690 = vector.broadcast %689 : vector<1x256xf32> to vector<4x256xf32>
    %691 = arith.mulf %688, %690 : vector<4x256xf32>
    %692 = vector.extract_strided_slice %548 {offsets = [0, 20], sizes = [4, 1], strides = [1, 1]} : vector<4x36xf32> to vector<4x1xf32>
    %693 = vector.extract_strided_slice %691 {offsets = [0, 0], sizes = [1, 256], strides = [1, 1]} : vector<4x256xf32> to vector<1x256xf32>
    %694 = vector.broadcast %692 : vector<4x1xf32> to vector<4x256xf32>
    %695 = vector.broadcast %693 : vector<1x256xf32> to vector<4x256xf32>
    %696 = arith.mulf %694, %695 : vector<4x256xf32>
    %697 = arith.addf %687, %696 : vector<4x256xf32>
    %698 = vector.extract_strided_slice %548 {offsets = [0, 21], sizes = [4, 1], strides = [1, 1]} : vector<4x36xf32> to vector<4x1xf32>
    %699 = vector.extract_strided_slice %691 {offsets = [1, 0], sizes = [1, 256], strides = [1, 1]} : vector<4x256xf32> to vector<1x256xf32>
    %700 = vector.broadcast %698 : vector<4x1xf32> to vector<4x256xf32>
    %701 = vector.broadcast %699 : vector<1x256xf32> to vector<4x256xf32>
    %702 = arith.mulf %700, %701 : vector<4x256xf32>
    %703 = arith.addf %697, %702 : vector<4x256xf32>
    %704 = vector.extract_strided_slice %548 {offsets = [0, 22], sizes = [4, 1], strides = [1, 1]} : vector<4x36xf32> to vector<4x1xf32>
    %705 = vector.extract_strided_slice %691 {offsets = [2, 0], sizes = [1, 256], strides = [1, 1]} : vector<4x256xf32> to vector<1x256xf32>
    %706 = vector.broadcast %704 : vector<4x1xf32> to vector<4x256xf32>
    %707 = vector.broadcast %705 : vector<1x256xf32> to vector<4x256xf32>
    %708 = arith.mulf %706, %707 : vector<4x256xf32>
    %709 = arith.addf %703, %708 : vector<4x256xf32>
    %710 = vector.extract_strided_slice %548 {offsets = [0, 23], sizes = [4, 1], strides = [1, 1]} : vector<4x36xf32> to vector<4x1xf32>
    %711 = vector.extract_strided_slice %691 {offsets = [3, 0], sizes = [1, 256], strides = [1, 1]} : vector<4x256xf32> to vector<1x256xf32>
    %712 = vector.broadcast %710 : vector<4x1xf32> to vector<4x256xf32>
    %713 = vector.broadcast %711 : vector<1x256xf32> to vector<4x256xf32>
    %714 = arith.mulf %712, %713 : vector<4x256xf32>
    %715 = arith.addf %709, %714 : vector<4x256xf32>
    %c241_i32_41 = arith.constant 241 : i32
    %716 = tpu.dynamic_rotate %547 by %c241_i32_41 dim 1 : vector<4x256xf32>, i32 -> vector<4x256xf32>
    %717 = vector.extract_strided_slice %0 {offsets = [6, 0], sizes = [1, 256], strides = [1, 1]} : vector<9x256xf32> to vector<1x256xf32>
    %718 = vector.broadcast %717 : vector<1x256xf32> to vector<4x256xf32>
    %719 = arith.mulf %716, %718 : vector<4x256xf32>
    %720 = vector.extract_strided_slice %548 {offsets = [0, 24], sizes = [4, 1], strides = [1, 1]} : vector<4x36xf32> to vector<4x1xf32>
    %721 = vector.extract_strided_slice %719 {offsets = [0, 0], sizes = [1, 256], strides = [1, 1]} : vector<4x256xf32> to vector<1x256xf32>
    %722 = vector.broadcast %720 : vector<4x1xf32> to vector<4x256xf32>
    %723 = vector.broadcast %721 : vector<1x256xf32> to vector<4x256xf32>
    %724 = arith.mulf %722, %723 : vector<4x256xf32>
    %725 = arith.addf %715, %724 : vector<4x256xf32>
    %726 = vector.extract_strided_slice %548 {offsets = [0, 25], sizes = [4, 1], strides = [1, 1]} : vector<4x36xf32> to vector<4x1xf32>
    %727 = vector.extract_strided_slice %719 {offsets = [1, 0], sizes = [1, 256], strides = [1, 1]} : vector<4x256xf32> to vector<1x256xf32>
    %728 = vector.broadcast %726 : vector<4x1xf32> to vector<4x256xf32>
    %729 = vector.broadcast %727 : vector<1x256xf32> to vector<4x256xf32>
    %730 = arith.mulf %728, %729 : vector<4x256xf32>
    %731 = arith.addf %725, %730 : vector<4x256xf32>
    %732 = vector.extract_strided_slice %548 {offsets = [0, 26], sizes = [4, 1], strides = [1, 1]} : vector<4x36xf32> to vector<4x1xf32>
    %733 = vector.extract_strided_slice %719 {offsets = [2, 0], sizes = [1, 256], strides = [1, 1]} : vector<4x256xf32> to vector<1x256xf32>
    %734 = vector.broadcast %732 : vector<4x1xf32> to vector<4x256xf32>
    %735 = vector.broadcast %733 : vector<1x256xf32> to vector<4x256xf32>
    %736 = arith.mulf %734, %735 : vector<4x256xf32>
    %737 = arith.addf %731, %736 : vector<4x256xf32>
    %738 = vector.extract_strided_slice %548 {offsets = [0, 27], sizes = [4, 1], strides = [1, 1]} : vector<4x36xf32> to vector<4x1xf32>
    %739 = vector.extract_strided_slice %719 {offsets = [3, 0], sizes = [1, 256], strides = [1, 1]} : vector<4x256xf32> to vector<1x256xf32>
    %740 = vector.broadcast %738 : vector<4x1xf32> to vector<4x256xf32>
    %741 = vector.broadcast %739 : vector<1x256xf32> to vector<4x256xf32>
    %742 = arith.mulf %740, %741 : vector<4x256xf32>
    %743 = arith.addf %737, %742 : vector<4x256xf32>
    %c240_i32_42 = arith.constant 240 : i32
    %744 = tpu.dynamic_rotate %547 by %c240_i32_42 dim 1 : vector<4x256xf32>, i32 -> vector<4x256xf32>
    %745 = vector.extract_strided_slice %0 {offsets = [7, 0], sizes = [1, 256], strides = [1, 1]} : vector<9x256xf32> to vector<1x256xf32>
    %746 = vector.broadcast %745 : vector<1x256xf32> to vector<4x256xf32>
    %747 = arith.mulf %744, %746 : vector<4x256xf32>
    %748 = vector.extract_strided_slice %548 {offsets = [0, 28], sizes = [4, 1], strides = [1, 1]} : vector<4x36xf32> to vector<4x1xf32>
    %749 = vector.extract_strided_slice %747 {offsets = [0, 0], sizes = [1, 256], strides = [1, 1]} : vector<4x256xf32> to vector<1x256xf32>
    %750 = vector.broadcast %748 : vector<4x1xf32> to vector<4x256xf32>
    %751 = vector.broadcast %749 : vector<1x256xf32> to vector<4x256xf32>
    %752 = arith.mulf %750, %751 : vector<4x256xf32>
    %753 = arith.addf %743, %752 : vector<4x256xf32>
    %754 = vector.extract_strided_slice %548 {offsets = [0, 29], sizes = [4, 1], strides = [1, 1]} : vector<4x36xf32> to vector<4x1xf32>
    %755 = vector.extract_strided_slice %747 {offsets = [1, 0], sizes = [1, 256], strides = [1, 1]} : vector<4x256xf32> to vector<1x256xf32>
    %756 = vector.broadcast %754 : vector<4x1xf32> to vector<4x256xf32>
    %757 = vector.broadcast %755 : vector<1x256xf32> to vector<4x256xf32>
    %758 = arith.mulf %756, %757 : vector<4x256xf32>
    %759 = arith.addf %753, %758 : vector<4x256xf32>
    %760 = vector.extract_strided_slice %548 {offsets = [0, 30], sizes = [4, 1], strides = [1, 1]} : vector<4x36xf32> to vector<4x1xf32>
    %761 = vector.extract_strided_slice %747 {offsets = [2, 0], sizes = [1, 256], strides = [1, 1]} : vector<4x256xf32> to vector<1x256xf32>
    %762 = vector.broadcast %760 : vector<4x1xf32> to vector<4x256xf32>
    %763 = vector.broadcast %761 : vector<1x256xf32> to vector<4x256xf32>
    %764 = arith.mulf %762, %763 : vector<4x256xf32>
    %765 = arith.addf %759, %764 : vector<4x256xf32>
    %766 = vector.extract_strided_slice %548 {offsets = [0, 31], sizes = [4, 1], strides = [1, 1]} : vector<4x36xf32> to vector<4x1xf32>
    %767 = vector.extract_strided_slice %747 {offsets = [3, 0], sizes = [1, 256], strides = [1, 1]} : vector<4x256xf32> to vector<1x256xf32>
    %768 = vector.broadcast %766 : vector<4x1xf32> to vector<4x256xf32>
    %769 = vector.broadcast %767 : vector<1x256xf32> to vector<4x256xf32>
    %770 = arith.mulf %768, %769 : vector<4x256xf32>
    %771 = arith.addf %765, %770 : vector<4x256xf32>
    %c239_i32_43 = arith.constant 239 : i32
    %772 = tpu.dynamic_rotate %547 by %c239_i32_43 dim 1 : vector<4x256xf32>, i32 -> vector<4x256xf32>
    %773 = vector.extract_strided_slice %0 {offsets = [8, 0], sizes = [1, 256], strides = [1, 1]} : vector<9x256xf32> to vector<1x256xf32>
    %774 = vector.broadcast %773 : vector<1x256xf32> to vector<4x256xf32>
    %775 = arith.mulf %772, %774 : vector<4x256xf32>
    %776 = vector.extract_strided_slice %548 {offsets = [0, 32], sizes = [4, 1], strides = [1, 1]} : vector<4x36xf32> to vector<4x1xf32>
    %777 = vector.extract_strided_slice %775 {offsets = [0, 0], sizes = [1, 256], strides = [1, 1]} : vector<4x256xf32> to vector<1x256xf32>
    %778 = vector.broadcast %776 : vector<4x1xf32> to vector<4x256xf32>
    %779 = vector.broadcast %777 : vector<1x256xf32> to vector<4x256xf32>
    %780 = arith.mulf %778, %779 : vector<4x256xf32>
    %781 = arith.addf %771, %780 : vector<4x256xf32>
    %782 = vector.extract_strided_slice %548 {offsets = [0, 33], sizes = [4, 1], strides = [1, 1]} : vector<4x36xf32> to vector<4x1xf32>
    %783 = vector.extract_strided_slice %775 {offsets = [1, 0], sizes = [1, 256], strides = [1, 1]} : vector<4x256xf32> to vector<1x256xf32>
    %784 = vector.broadcast %782 : vector<4x1xf32> to vector<4x256xf32>
    %785 = vector.broadcast %783 : vector<1x256xf32> to vector<4x256xf32>
    %786 = arith.mulf %784, %785 : vector<4x256xf32>
    %787 = arith.addf %781, %786 : vector<4x256xf32>
    %788 = vector.extract_strided_slice %548 {offsets = [0, 34], sizes = [4, 1], strides = [1, 1]} : vector<4x36xf32> to vector<4x1xf32>
    %789 = vector.extract_strided_slice %775 {offsets = [2, 0], sizes = [1, 256], strides = [1, 1]} : vector<4x256xf32> to vector<1x256xf32>
    %790 = vector.broadcast %788 : vector<4x1xf32> to vector<4x256xf32>
    %791 = vector.broadcast %789 : vector<1x256xf32> to vector<4x256xf32>
    %792 = arith.mulf %790, %791 : vector<4x256xf32>
    %793 = arith.addf %787, %792 : vector<4x256xf32>
    %794 = vector.extract_strided_slice %548 {offsets = [0, 35], sizes = [4, 1], strides = [1, 1]} : vector<4x36xf32> to vector<4x1xf32>
    %795 = vector.extract_strided_slice %775 {offsets = [3, 0], sizes = [1, 256], strides = [1, 1]} : vector<4x256xf32> to vector<1x256xf32>
    %796 = vector.broadcast %794 : vector<4x1xf32> to vector<4x256xf32>
    %797 = vector.broadcast %795 : vector<1x256xf32> to vector<4x256xf32>
    %798 = arith.mulf %796, %797 : vector<4x256xf32>
    %799 = arith.addf %793, %798 : vector<4x256xf32>
    %cst_44 = arith.constant 0.000000e+00 : f32
    %800 = vector.broadcast %cst_44 : f32 to vector<4x256xf32>
    %801 = arith.cmpf oge, %799, %800 : vector<4x256xf32>
    %cst_45 = arith.constant 2.000000e-01 : f32
    %802 = vector.broadcast %cst_45 : f32 to vector<4x256xf32>
    %803 = arith.mulf %802, %799 : vector<4x256xf32>
    %804 = arith.select %801, %799, %803 : vector<4x256xi1>, vector<4x256xf32>
    %805 = arith.addf %804, %8 : vector<4x256xf32>
    %c0_46 = arith.constant 0 : index
    %c0_47 = arith.constant 0 : index
    %c0_48 = arith.constant 0 : index
    %806 = vector.load %arg12[%c0_46, %c0_47, %c0_48] : memref<1x4x256xf32, #tpu.memory_space<vmem>>, vector<1x4x256xf32>
    %807 = vector.shape_cast %806 : vector<1x4x256xf32> to vector<4x256xf32>
    %808 = vector.shape_cast %805 : vector<4x256xf32> to vector<1x4x256xf32>
    tpu.vector_store %arg12[%c0_46, %c0_47, %c0_48], %808 {strides = array<i32>} : memref<1x4x256xf32, #tpu.memory_space<vmem>>, vector<1x4x256xf32>,
    return
  }
  func.func @transform_0(%arg0: i32) -> (i32, i32) {
    %c0_i32 = arith.constant 0 : i32
    %c0_i32_0 = arith.constant 0 : i32
    %c0_i32_1 = arith.constant 0 : i32
    return %c0_i32, %c0_i32_0 : i32, i32
  }
  func.func @transform_1(%arg0: i32) -> (i32, i32, i32) {
    %c0_i32 = arith.constant 0 : i32
    %c0_i32_0 = arith.constant 0 : i32
    %c0_i32_1 = arith.constant 0 : i32
    return %arg0, %c0_i32, %c0_i32_0 : i32, i32, i32
  }
  func.func @transform_2(%arg0: i32) -> (i32, i32, i32) {
    %c0_i32 = arith.constant 0 : i32
    %c0_i32_0 = arith.constant 0 : i32
    %c0_i32_1 = arith.constant 0 : i32
    return %arg0, %c0_i32, %c0_i32_0 : i32, i32, i32
  }
  func.func @transform_3(%arg0: i32) -> (i32, i32, i32) {
    %c0_i32 = arith.constant 0 : i32
    %c0_i32_0 = arith.constant 0 : i32
    %c0_i32_1 = arith.constant 0 : i32
    return %arg0, %c0_i32, %c0_i32_0 : i32, i32, i32
  }
  func.func @transform_4(%arg0: i32) -> (i32, i32, i32) {
    %c0_i32 = arith.constant 0 : i32
    %c0_i32_0 = arith.constant 0 : i32
    %c0_i32_1 = arith.constant 0 : i32
    return %arg0, %c0_i32, %c0_i32_0 : i32, i32, i32
  }
  func.func @transform_5(%arg0: i32) -> (i32, i32) {
    %c0_i32 = arith.constant 0 : i32
    %c0_i32_0 = arith.constant 0 : i32
    %c0_i32_1 = arith.constant 0 : i32
    return %c0_i32, %c0_i32_0 : i32, i32
  }
  func.func @transform_6(%arg0: i32) -> (i32, i32) {
    %c0_i32 = arith.constant 0 : i32
    %c0_i32_0 = arith.constant 0 : i32
    %c0_i32_1 = arith.constant 0 : i32
    return %c0_i32, %c0_i32_0 : i32, i32
  }
  func.func @transform_7(%arg0: i32) -> (i32, i32) {
    %c0_i32 = arith.constant 0 : i32
    %c0_i32_0 = arith.constant 0 : i32
    %c0_i32_1 = arith.constant 0 : i32
    return %c0_i32, %c0_i32_0 : i32, i32
  }
  func.func @transform_8(%arg0: i32) -> (i32, i32) {
    %c0_i32 = arith.constant 0 : i32
    %c0_i32_0 = arith.constant 0 : i32
    %c0_i32_1 = arith.constant 0 : i32
    return %c0_i32, %c0_i32_0 : i32, i32
  }
  func.func @transform_9(%arg0: i32) -> (i32, i32) {
    %c0_i32 = arith.constant 0 : i32
    %c0_i32_0 = arith.constant 0 : i32
    %c0_i32_1 = arith.constant 0 : i32
    return %c0_i32, %c0_i32_0 : i32, i32
  }
  func.func @transform_10(%arg0: i32) -> (i32, i32) {
    %c0_i32 = arith.constant 0 : i32
    %c0_i32_0 = arith.constant 0 : i32
    %c0_i32_1 = arith.constant 0 : i32
    return %c0_i32, %c0_i32_0 : i32, i32
  }
  func.func @transform_11(%arg0: i32) -> (i32, i32, i32) {
    %c0_i32 = arith.constant 0 : i32
    %c0_i32_0 = arith.constant 0 : i32
    %c0_i32_1 = arith.constant 0 : i32
    return %arg0, %c0_i32, %c0_i32_0 : i32, i32, i32
  }
}

</mosaic_0001>

<llo_original>
// kernel: gate_forward.1
$region0: #{gate_forward.1}
  #allocation0 [shape = 'u32[]', space=smem, size = 0x4, offset = 0x4, fixed_abs, tag = 'smem constant byte address 0x4 - core index']
  #allocation1 [shape = 'u32[144,128]{1,0:T(1,128)}', space=vmem, size = 0x12000, scoped, tag = 'internal scratch']
  %s0 = inlined_call_operand.vmem [shape: f32[9,256], index: 0, kind: input, shape index: {}]
  %s1 = inlined_call_operand.vmem [shape: f32[2,4,256], index: 1, kind: input, shape index: {}]
  %s2 = inlined_call_operand.vmem [shape: f32[2,4,256], index: 2, kind: input, shape index: {}]
  %s3 = inlined_call_operand.vmem [shape: f32[2,4,256], index: 3, kind: input, shape index: {}]
  %s4 = inlined_call_operand.vmem [shape: f32[2,4,256], index: 4, kind: input, shape index: {}]
  %s5 = inlined_call_operand.vmem [shape: f32[4,36], index: 5, kind: input, shape index: {}]
  %s6 = inlined_call_operand.vmem [shape: f32[4,1], index: 6, kind: input, shape index: {}]
  %s7 = inlined_call_operand.vmem [shape: f32[4,36], index: 7, kind: input, shape index: {}]
  %s8 = inlined_call_operand.vmem [shape: f32[4,1], index: 8, kind: input, shape index: {}]
  %s9 = inlined_call_operand.vmem [shape: f32[4,36], index: 9, kind: input, shape index: {}]
  %s10 = inlined_call_operand.vmem [shape: f32[4,1], index: 10, kind: input, shape index: {}]
  %s11 = inlined_call_operand.vmem [shape: f32[2,4,256], index: 11, kind: output, shape index: {}]
  %s12 = sld [smem:[#allocation0]]
  $region77: #{gate_forward.1} parent=0
    _
  %s14 = ssub.s32 1, %s12
  %s15 = scalar_select 0, %s14, %s12
  loop: start=0, step=1, limit=4
  $region2: #{gate_forward.1} parent=0 // loop_pre_header
    _
  $region3: #{gate_forward.1} parent=0 // loop_header
    %s17 = sphi 0, %s21
    %p18 = scmp.ge.s32.totalorder %s17, 4
    %s25 = sphi 0, %s25
    %s27 = sphi 0, %s25
    %s28 = sphi 0, %s27
    %s42 = sphi 0, %s28
    %s48 = sphi 0, %s50
    %s51 = sphi 0, %s48
    %s52 = sphi 0, %s51
    %s68 = sphi 0, %s52
    %s74 = sphi 0, %s76
    %s77 = sphi 0, %s74
    %s78 = sphi 0, %s77
    %s94 = sphi 0, %s78
    %s100 = sphi 0, %s102
    %s103 = sphi 0, %s100
    %s104 = sphi 0, %s103
    %s120 = sphi 0, %s104
    %s126 = sphi 0, %s128
    %s129 = sphi 0, %s126
    %s130 = sphi 0, %s129
    %s146 = sphi 0, %s130
    %s150 = sphi 0, %s150
    %s152 = sphi 0, %s150
    %s153 = sphi 0, %s152
    %s167 = sphi 0, %s153
    %s171 = sphi 0, %s171
    %s173 = sphi 0, %s171
    %s174 = sphi 0, %s173
    %s188 = sphi 0, %s174
    %s192 = sphi 0, %s192
    %s194 = sphi 0, %s192
    %s195 = sphi 0, %s194
    %s209 = sphi 0, %s195
    %s213 = sphi 0, %s213
    %s215 = sphi 0, %s213
    %s216 = sphi 0, %s215
    %s230 = sphi 0, %s216
    %s234 = sphi 0, %s234
    %s236 = sphi 0, %s234
    %s237 = sphi 0, %s236
    %s251 = sphi 0, %s237
    %s255 = sphi 0, %s255
    %s257 = sphi 0, %s255
    %s258 = sphi 0, %s257
    %s272 = sphi 0, %s258
    %s278 = sphi 0, %s280
    %s281 = sphi 0, %s278
    %s282 = sphi 0, %s281
    %s298 = sphi 0, %s282
  $region4: #{gate_forward.1} parent=0 // loop_header_branch
    %20 = sbr.rel (%p18) target = $region8
  $region5: #{gate_forward.1} parent=0 // loop_body
    %s22 = ssub.s32 %s17, 1
    %s23 = ssub.s32 %s17, 2
    %s24 = sadd.s32 %s17, 1
    %s26 = sadd.s32 %s25, 1
    %p29 = scmp.eq.s32.totalorder %s17, 1
    %p30 = scmp.ne.s32.totalorder %s25, %s27
    %p31 = scmp.eq.s32.totalorder %s17, 0
    %p32 = por %p30, %p31
    %p33 = scmp.ne.s32.totalorder %s25, %s27
    %p34 = scmp.eq.s32.totalorder %s22, 1
    %p35 = por %p33, %p34
    %p36 = scmp.ne.s32.totalorder %s27, %s28
    %p37 = scmp.eq.s32.totalorder %s22, 0
    %p38 = por %p36, %p37
    %p39 = scmp.ne.s32.totalorder %s27, %s28
    %p40 = scmp.eq.s32.totalorder %s23, 1
    %p41 = por %p39, %p40
    %p43 = scmp.ne.s32.totalorder %s28, %s42
    %p44 = scmp.eq.s32.totalorder %s23, 0
    %p45 = por %p43, %p44
    %s46 = ssub.s32 %s17, %s24
    %p47 = scmp.eq.s32.totalorder %s46, 0
    %s49 = sadd.s32 %s48, 1
    %s50 = scalar_select %p47, %s48, %s49
    %p53 = pneg %p47
    %p54 = scmp.eq.s32.totalorder %s17, 1
    %p55 = por %p53, %p54
    %p56 = scmp.ne.s32.totalorder %s48, %s51
    %p57 = scmp.eq.s32.totalorder %s17, 0
    %p58 = por %p56, %p57
    %p59 = scmp.ne.s32.totalorder %s48, %s51
    %p60 = scmp.eq.s32.totalorder %s22, 1
    %p61 = por %p59, %p60
    %p62 = scmp.ne.s32.totalorder %s51, %s52
    %p63 = scmp.eq.s32.totalorder %s22, 0
    %p64 = por %p62, %p63
    %p65 = scmp.ne.s32.totalorder %s51, %s52
    %p66 = scmp.eq.s32.totalorder %s23, 1
    %p67 = por %p65, %p66
    %p69 = scmp.ne.s32.totalorder %s52, %s68
    %p70 = scmp.eq.s32.totalorder %s23, 0
    %p71 = por %p69, %p70
    %s72 = ssub.s32 %s17, %s24
    %p73 = scmp.eq.s32.totalorder %s72, 0
    %s75 = sadd.s32 %s74, 1
    %s76 = scalar_select %p73, %s74, %s75
    %p79 = pneg %p73
    %p80 = scmp.eq.s32.totalorder %s17, 1
    %p81 = por %p79, %p80
    %p82 = scmp.ne.s32.totalorder %s74, %s77
    %p83 = scmp.eq.s32.totalorder %s17, 0
    %p84 = por %p82, %p83
    %p85 = scmp.ne.s32.totalorder %s74, %s77
    %p86 = scmp.eq.s32.totalorder %s22, 1
    %p87 = por %p85, %p86
    %p88 = scmp.ne.s32.totalorder %s77, %s78
    %p89 = scmp.eq.s32.totalorder %s22, 0
    %p90 = por %p88, %p89
    %p91 = scmp.ne.s32.totalorder %s77, %s78
    %p92 = scmp.eq.s32.totalorder %s23, 1
    %p93 = por %p91, %p92
    %p95 = scmp.ne.s32.totalorder %s78, %s94
    %p96 = scmp.eq.s32.totalorder %s23, 0
    %p97 = por %p95, %p96
    %s98 = ssub.s32 %s17, %s24
    %p99 = scmp.eq.s32.totalorder %s98, 0
    %s101 = sadd.s32 %s100, 1
    %s102 = scalar_select %p99, %s100, %s101
    %p105 = pneg %p99
    %p106 = scmp.eq.s32.totalorder %s17, 1
    %p107 = por %p105, %p106
    %p108 = scmp.ne.s32.totalorder %s100, %s103
    %p109 = scmp.eq.s32.totalorder %s17, 0
    %p110 = por %p108, %p109
    %p111 = scmp.ne.s32.totalorder %s100, %s103
    %p112 = scmp.eq.s32.totalorder %s22, 1
    %p113 = por %p111, %p112
    %p114 = scmp.ne.s32.totalorder %s103, %s104
    %p115 = scmp.eq.s32.totalorder %s22, 0
    %p116 = por %p114, %p115
    %p117 = scmp.ne.s32.totalorder %s103, %s104
    %p118 = scmp.eq.s32.totalorder %s23, 1
    %p119 = por %p117, %p118
    %p121 = scmp.ne.s32.totalorder %s104, %s120
    %p122 = scmp.eq.s32.totalorder %s23, 0
    %p123 = por %p121, %p122
    %s124 = ssub.s32 %s17, %s24
    %p125 = scmp.eq.s32.totalorder %s124, 0
    %s127 = sadd.s32 %s126, 1
    %s128 = scalar_select %p125, %s126, %s127
    %p131 = pneg %p125
    %p132 = scmp.eq.s32.totalorder %s17, 1
    %p133 = por %p131, %p132
    %p134 = scmp.ne.s32.totalorder %s126, %s129
    %p135 = scmp.eq.s32.totalorder %s17, 0
    %p136 = por %p134, %p135
    %p137 = scmp.ne.s32.totalorder %s126, %s129
    %p138 = scmp.eq.s32.totalorder %s22, 1
    %p139 = por %p137, %p138
    %p140 = scmp.ne.s32.totalorder %s129, %s130
    %p141 = scmp.eq.s32.totalorder %s22, 0
    %p142 = por %p140, %p141
    %p143 = scmp.ne.s32.totalorder %s129, %s130
    %p144 = scmp.eq.s32.totalorder %s23, 1
    %p145 = por %p143, %p144
    %p147 = scmp.ne.s32.totalorder %s130, %s146
    %p148 = scmp.eq.s32.totalorder %s23, 0
    %p149 = por %p147, %p148
    %s151 = sadd.s32 %s150, 1
    %p154 = scmp.eq.s32.totalorder %s17, 1
    %p155 = scmp.ne.s32.totalorder %s150, %s152
    %p156 = scmp.eq.s32.totalorder %s17, 0
    %p157 = por %p155, %p156
    %p158 = scmp.ne.s32.totalorder %s150, %s152
    %p159 = scmp.eq.s32.totalorder %s22, 1
    %p160 = por %p158, %p159
    %p161 = scmp.ne.s32.totalorder %s152, %s153
    %p162 = scmp.eq.s32.totalorder %s22, 0
    %p163 = por %p161, %p162
    %p164 = scmp.ne.s32.totalorder %s152, %s153
    %p165 = scmp.eq.s32.totalorder %s23, 1
    %p166 = por %p164, %p165
    %p168 = scmp.ne.s32.totalorder %s153, %s167
    %p169 = scmp.eq.s32.totalorder %s23, 0
    %p170 = por %p168, %p169
    %s172 = sadd.s32 %s171, 1
    %p175 = scmp.eq.s32.totalorder %s17, 1
    %p176 = scmp.ne.s32.totalorder %s171, %s173
    %p177 = scmp.eq.s32.totalorder %s17, 0
    %p178 = por %p176, %p177
    %p179 = scmp.ne.s32.totalorder %s171, %s173
    %p180 = scmp.eq.s32.totalorder %s22, 1
    %p181 = por %p179, %p180
    %p182 = scmp.ne.s32.totalorder %s173, %s174
    %p183 = scmp.eq.s32.totalorder %s22, 0
    %p184 = por %p182, %p183
    %p185 = scmp.ne.s32.totalorder %s173, %s174
    %p186 = scmp.eq.s32.totalorder %s23, 1
    %p187 = por %p185, %p186
    %p189 = scmp.ne.s32.totalorder %s174, %s188
    %p190 = scmp.eq.s32.totalorder %s23, 0
    %p191 = por %p189, %p190
    %s193 = sadd.s32 %s192, 1
    %p196 = scmp.eq.s32.totalorder %s17, 1
    %p197 = scmp.ne.s32.totalorder %s192, %s194
    %p198 = scmp.eq.s32.totalorder %s17, 0
    %p199 = por %p197, %p198
    %p200 = scmp.ne.s32.totalorder %s192, %s194
    %p201 = scmp.eq.s32.totalorder %s22, 1
    %p202 = por %p200, %p201
    %p203 = scmp.ne.s32.totalorder %s194, %s195
    %p204 = scmp.eq.s32.totalorder %s22, 0
    %p205 = por %p203, %p204
    %p206 = scmp.ne.s32.totalorder %s194, %s195
    %p207 = scmp.eq.s32.totalorder %s23, 1
    %p208 = por %p206, %p207
    %p210 = scmp.ne.s32.totalorder %s195, %s209
    %p211 = scmp.eq.s32.totalorder %s23, 0
    %p212 = por %p210, %p211
    %s214 = sadd.s32 %s213, 1
    %p217 = scmp.eq.s32.totalorder %s17, 1
    %p218 = scmp.ne.s32.totalorder %s213, %s215
    %p219 = scmp.eq.s32.totalorder %s17, 0
    %p220 = por %p218, %p219
    %p221 = scmp.ne.s32.totalorder %s213, %s215
    %p222 = scmp.eq.s32.totalorder %s22, 1
    %p223 = por %p221, %p222
    %p224 = scmp.ne.s32.totalorder %s215, %s216
    %p225 = scmp.eq.s32.totalorder %s22, 0
    %p226 = por %p224, %p225
    %p227 = scmp.ne.s32.totalorder %s215, %s216
    %p228 = scmp.eq.s32.totalorder %s23, 1
    %p229 = por %p227, %p228
    %p231 = scmp.ne.s32.totalorder %s216, %s230
    %p232 = scmp.eq.s32.totalorder %s23, 0
    %p233 = por %p231, %p232
    %s235 = sadd.s32 %s234, 1
    %p238 = scmp.eq.s32.totalorder %s17, 1
    %p239 = scmp.ne.s32.totalorder %s234, %s236
    %p240 = scmp.eq.s32.totalorder %s17, 0
    %p241 = por %p239, %p240
    %p242 = scmp.ne.s32.totalorder %s234, %s236
    %p243 = scmp.eq.s32.totalorder %s22, 1
    %p244 = por %p242, %p243
    %p245 = scmp.ne.s32.totalorder %s236, %s237
    %p246 = scmp.eq.s32.totalorder %s22, 0
    %p247 = por %p245, %p246
    %p248 = scmp.ne.s32.totalorder %s236, %s237
    %p249 = scmp.eq.s32.totalorder %s23, 1
    %p250 = por %p248, %p249
    %p252 = scmp.ne.s32.totalorder %s237, %s251
    %p253 = scmp.eq.s32.totalorder %s23, 0
    %p254 = por %p252, %p253
    %s256 = sadd.s32 %s255, 1
    %p259 = scmp.eq.s32.totalorder %s17, 1
    %p260 = scmp.ne.s32.totalorder %s255, %s257
    %p261 = scmp.eq.s32.totalorder %s17, 0
    %p262 = por %p260, %p261
    %p263 = scmp.ne.s32.totalorder %s255, %s257
    %p264 = scmp.eq.s32.totalorder %s22, 1
    %p265 = por %p263, %p264
    %p266 = scmp.ne.s32.totalorder %s257, %s258
    %p267 = scmp.eq.s32.totalorder %s22, 0
    %p268 = por %p266, %p267
    %p269 = scmp.ne.s32.totalorder %s257, %s258
    %p270 = scmp.eq.s32.totalorder %s23, 1
    %p271 = por %p269, %p270
    %p273 = scmp.ne.s32.totalorder %s258, %s272
    %p274 = scmp.eq.s32.totalorder %s23, 0
    %p275 = por %p273, %p274
    %s276 = ssub.s32 %s17, %s24
    %p277 = scmp.eq.s32.totalorder %s276, 0
    %s279 = sadd.s32 %s278, 1
    %s280 = scalar_select %p277, %s278, %s279
    %p283 = pneg %p277
    %p284 = scmp.eq.s32.totalorder %s17, 1
    %p285 = por %p283, %p284
    %p286 = scmp.ne.s32.totalorder %s278, %s281
    %p287 = scmp.eq.s32.totalorder %s17, 0
    %p288 = por %p286, %p287
    %p289 = scmp.ne.s32.totalorder %s278, %s281
    %p290 = scmp.eq.s32.totalorder %s22, 1
    %p291 = por %p289, %p290
    %p292 = scmp.ne.s32.totalorder %s281, %s282
    %p293 = scmp.eq.s32.totalorder %s22, 0
    %p294 = por %p292, %p293
    %p295 = scmp.ne.s32.totalorder %s281, %s282
    %p296 = scmp.eq.s32.totalorder %s23, 1
    %p297 = por %p295, %p296
    %p299 = scmp.ne.s32.totalorder %s282, %s298
    %p300 = scmp.eq.s32.totalorder %s23, 0
    %p301 = por %p299, %p300
    %p302 = scmp.le.s32.totalorder 1, %s17
    %p303 = scmp.lt.s32.totalorder %s17, 3
    %p304 = pnand %p302, %p303
    %p305 = pneg %p304
    // Predicated region
    $region9: #{gate_forward.1} parent=5 // pred_check
      _
    $region10: #{gate_forward.1} parent=5 // pred_check_branch
      %307 = sbr.rel (%p304) target = $region12
    $region11: #{gate_forward.1} parent=5 // pred_region
      %s308 = ssub.s32 %s17, 1
      // Predicated region
      $region13: #{gate_forward.1} parent=11 // pred_check
        %p309 = pneg %p38
      $region14: #{gate_forward.1} parent=11 // pred_check_branch
        %311 = sbr.rel (%p309) target = $region16
      $region15: #{gate_forward.1} parent=11 // pred_region
        _
      $region16: #{gate_forward.1} parent=11 // pred_fallthru
        _
      // Predicated region
      $region17: #{gate_forward.1} parent=11 // pred_check
        %p312 = pneg %p163
      $region18: #{gate_forward.1} parent=11 // pred_check_branch
        %314 = sbr.rel (%p312) target = $region20
      $region19: #{gate_forward.1} parent=11 // pred_region
        _
      $region20: #{gate_forward.1} parent=11 // pred_fallthru
        _
      // Predicated region
      $region21: #{gate_forward.1} parent=11 // pred_check
        %p315 = pneg %p184
      $region22: #{gate_forward.1} parent=11 // pred_check_branch
        %317 = sbr.rel (%p315) target = $region24
      $region23: #{gate_forward.1} parent=11 // pred_region
        _
      $region24: #{gate_forward.1} parent=11 // pred_fallthru
        _
      // Predicated region
      $region25: #{gate_forward.1} parent=11 // pred_check
        %p318 = pneg %p205
      $region26: #{gate_forward.1} parent=11 // pred_check_branch
        %320 = sbr.rel (%p318) target = $region28
      $region27: #{gate_forward.1} parent=11 // pred_region
        _
      $region28: #{gate_forward.1} parent=11 // pred_fallthru
        _
      // Predicated region
      $region29: #{gate_forward.1} parent=11 // pred_check
        %p321 = pneg %p226
      $region30: #{gate_forward.1} parent=11 // pred_check_branch
        %323 = sbr.rel (%p321) target = $region32
      $region31: #{gate_forward.1} parent=11 // pred_region
        _
      $region32: #{gate_forward.1} parent=11 // pred_fallthru
        _
      // Predicated region
      $region33: #{gate_forward.1} parent=11 // pred_check
        %p324 = pneg %p247
      $region34: #{gate_forward.1} parent=11 // pred_check_branch
        %326 = sbr.rel (%p324) target = $region36
      $region35: #{gate_forward.1} parent=11 // pred_region
        _
      $region36: #{gate_forward.1} parent=11 // pred_fallthru
        _
      // Predicated region
      $region37: #{gate_forward.1} parent=11 // pred_check
        %p327 = pneg %p268
      $region38: #{gate_forward.1} parent=11 // pred_check_branch
        %329 = sbr.rel (%p327) target = $region40
      $region39: #{gate_forward.1} parent=11 // pred_region
        _
      $region40: #{gate_forward.1} parent=11 // pred_fallthru
        _
    $region12: #{gate_forward.1} parent=5 // pred_fallthru
      _
    %p330 = scmp.lt.s32.totalorder %s17, 2
    // Predicated region
    $region41: #{gate_forward.1} parent=5 // pred_check
      %p331 = pneg %p330
    $region42: #{gate_forward.1} parent=5 // pred_check_branch
      %333 = sbr.rel (%p331) target = $region44
    $region43: #{gate_forward.1} parent=5 // pred_region
      // Predicated region
      $region45: #{gate_forward.1} parent=43 // pred_check
        %p334 = pneg %p58
      $region46: #{gate_forward.1} parent=43 // pred_check_branch
        %336 = sbr.rel (%p334) target = $region48
      $region47: #{gate_forward.1} parent=43 // pred_region
        %p337 = scmp.lt.s32.totalorder %s17, 1
        %s338 = scalar_select %p337, %s17, 1
        %s339 = smul.addr %s338, 2
        %s340 = smul.addr %s339, 4
        %s341 = scalar_lea.vmem %s1, %s340
      $region48: #{gate_forward.1} parent=43 // pred_fallthru
        _
      // Predicated region
      $region49: #{gate_forward.1} parent=43 // pred_check
        %p342 = pneg %p84
      $region50: #{gate_forward.1} parent=43 // pred_check_branch
        %344 = sbr.rel (%p342) target = $region52
      $region51: #{gate_forward.1} parent=43 // pred_region
        %p345 = scmp.lt.s32.totalorder %s17, 1
        %s346 = scalar_select %p345, %s17, 1
        %s347 = smul.addr %s346, 2
        %s348 = smul.addr %s347, 4
        %s349 = scalar_lea.vmem %s2, %s348
      $region52: #{gate_forward.1} parent=43 // pred_fallthru
        _
      // Predicated region
      $region53: #{gate_forward.1} parent=43 // pred_check
        %p350 = pneg %p110
      $region54: #{gate_forward.1} parent=43 // pred_check_branch
        %352 = sbr.rel (%p350) target = $region56
      $region55: #{gate_forward.1} parent=43 // pred_region
        %p353 = scmp.lt.s32.totalorder %s17, 1
        %s354 = scalar_select %p353, %s17, 1
        %s355 = smul.addr %s354, 2
        %s356 = smul.addr %s355, 4
        %s357 = scalar_lea.vmem %s3, %s356
      $region56: #{gate_forward.1} parent=43 // pred_fallthru
        _
      // Predicated region
      $region57: #{gate_forward.1} parent=43 // pred_check
        %p358 = pneg %p136
      $region58: #{gate_forward.1} parent=43 // pred_check_branch
        %360 = sbr.rel (%p358) target = $region60
      $region59: #{gate_forward.1} parent=43 // pred_region
        %p361 = scmp.lt.s32.totalorder %s17, 1
        %s362 = scalar_select %p361, %s17, 1
        %s363 = smul.addr %s362, 2
        %s364 = smul.addr %s363, 4
        %s365 = scalar_lea.vmem %s4, %s364
      $region60: #{gate_forward.1} parent=43 // pred_fallthru
        _
    $region44: #{gate_forward.1} parent=5 // pred_fallthru
      _
    %p366 = scmp.le.s32.totalorder 1, %s17
    %p367 = scmp.lt.s32.totalorder %s17, 3
    %p368 = pnand %p366, %p367
    %p369 = pneg %p368
    // Predicated region
    $region61: #{gate_forward.1} parent=5 // pred_check
      _
    $region62: #{gate_forward.1} parent=5 // pred_check_branch
      %371 = sbr.rel (%p368) target = $region64
    $region63: #{gate_forward.1} parent=5 // pred_region
      %s372 = ssub.s32 %s17, 1
      %p373 = pneg %p38
      %p374 = pneg %p35
      %p375 = scmp.lt.s32.totalorder %s22, 1
      %s376 = scalar_select %p375, %s22, 1
      %s377 = smul.addr %s376, 2
      %s378 = smul.addr %s377, 4
      %s379 = scalar_lea.vmem %s1, %s378
      %p380 = pneg %p64
      %p381 = pneg %p61
      %p382 = scmp.lt.s32.totalorder %s22, 1
      %s383 = scalar_select %p382, %s22, 1
      %s384 = smul.addr %s383, 2
      %s385 = smul.addr %s384, 4
      %s386 = scalar_lea.vmem %s2, %s385
      %p387 = pneg %p90
      %p388 = pneg %p87
      %p389 = scmp.lt.s32.totalorder %s22, 1
      %s390 = scalar_select %p389, %s22, 1
      %s391 = smul.addr %s390, 2
      %s392 = smul.addr %s391, 4
      %s393 = scalar_lea.vmem %s3, %s392
      %p394 = pneg %p116
      %p395 = pneg %p113
      %p396 = scmp.lt.s32.totalorder %s22, 1
      %s397 = scalar_select %p396, %s22, 1
      %s398 = smul.addr %s397, 2
      %s399 = smul.addr %s398, 4
      %s400 = scalar_lea.vmem %s4, %s399
      %p401 = pneg %p142
      %p402 = pneg %p139
      %p403 = pneg %p163
      %p404 = pneg %p160
      %p405 = pneg %p184
      %p406 = pneg %p181
      %p407 = pneg %p205
      %p408 = pneg %p202
      %p409 = pneg %p226
      %p410 = pneg %p223
      %p411 = pneg %p247
      %p412 = pneg %p244
      %p413 = pneg %p268
      %p414 = pneg %p265
      %p415 = pneg %p294
      %p416 = pneg %p291
      %p417 = scmp.lt.s32.totalorder %s22, 1
      %s418 = scalar_select %p417, %s22, 1
      %s419 = smul.addr %s418, 2
      %s420 = smul.addr %s419, 4
      %s421 = scalar_lea.vmem %s11, %s420
      %p422 = scmp.lt.s32.totalorder %s22, 1
      %s423 = scalar_select %p422, %s22, 1
      %s424 = smul.addr %s423, 2
      %s425 = smul.addr %s424, 4
      %s426 = scalar_lea.vmem %s1, %s425
      %p427 = scmp.lt.s32.totalorder %s22, 1
      %s428 = scalar_select %p427, %s22, 1
      %s429 = smul.addr %s428, 2
      %s430 = smul.addr %s429, 4
      %s431 = scalar_lea.vmem %s2, %s430
      %p432 = scmp.lt.s32.totalorder %s22, 1
      %s433 = scalar_select %p432, %s22, 1
      %s434 = smul.addr %s433, 2
      %s435 = smul.addr %s434, 4
      %s436 = scalar_lea.vmem %s3, %s435
      %p437 = scmp.lt.s32.totalorder %s22, 1
      %s438 = scalar_select %p437, %s22, 1
      %s439 = smul.addr %s438, 2
      %s440 = smul.addr %s439, 4
      %s441 = scalar_lea.vmem %s4, %s440
      %p442 = scmp.lt.s32.totalorder %s22, 1
      %s443 = scalar_select %p442, %s22, 1
      %s444 = smul.addr %s443, 2
      %s445 = smul.addr %s444, 4
      %s446 = scalar_lea.vmem %s11, %s445
      %v447 = vld [vmem:[%s0] sm:$0xff]
      %v448 = vld [vmem:[%s0 + $0x8] sm:$0xff]
      %v449 = vld [vmem:[%s0 + $0x10] sm:$0x1]
      %v450 = vld [vmem:[%s0 + $0x18] sm:$0x1]
      %v451 = vld [vmem:[%s426] sm:$0xff]
      %v452 = vld [vmem:[%s431] sm:$0xff]
      %v453 = vld [vmem:[%s436] sm:$0xff]
      %v454 = vld [vmem:[%s441] sm:$0xff]
      %v455 = vsub.f32 %v452, %v451
      %v456 = vld [vmem:[%s5] sm:$0xf]
      %v457 = vld [vmem:[%s6] sm:$0xf]
      %459 = vset.pattern.permute.xlu0 0
      %460 = vperm.xlu0 %459, %v457
      %v461 = vpop.permute.xlu0 %460
      %v464 = vcombine.high %v455, %v455
      %466 = vrot.lane.b32.xlu0 %v455, 17
      %v467 = vpop.permute.xlu0 %466
      %468 = vrot.lane.b32.xlu0 %v464, 17
      %v469 = vpop.permute.xlu0 %468
      %v470 = vlaneseq
      %v471 = vand.u32 %v470, 127
      %vm472 = vcmp.lt.s32.totalorder %v471, 17
      %v473 = vsel %vm472, %v467, %v469
      %v474 = vsel %vm472, %v469, %v467
      %v475 = vlaneseq
      %v476 = vshrl.u32 %v475, 7
      %v477 = vsub.s32 0, %v476
      %v478 = vrot.slane %v447, %v477
      %v479 = vlaneseq
      %v480 = vshrl.u32 %v479, 7
      %v481 = vsub.s32 0, %v480
      %v482 = vrot.slane %v448, %v481
      %v483 = vmul.f32 %v474, %v478
      %v484 = vmul.f32 %v473, %v482
      %486 = vset.pattern.permute.xlu0 0
      %487 = vperm.xlu0 %486, %v456
      %v488 = vpop.permute.xlu0 %487
      %v490 = vlaneseq
      %v491 = vshrl.u32 %v490, 7
      %v492 = vsub.s32 0, %v491
      %v493 = vrot.slane %v483, %v492
      %v494 = vlaneseq
      %v495 = vshrl.u32 %v494, 7
      %v496 = vsub.s32 0, %v495
      %v497 = vrot.slane %v484, %v496
      %v498 = vmul.f32 %v488, %v493
      %v499 = vmul.f32 %v488, %v497
      %v500 = vadd.f32 %v461, %v498
      %v501 = vadd.f32 %v461, %v499
      %502 = vset.pattern.permute.xlu0 1
      %503 = vperm.xlu0 %502, %v456
      %v504 = vpop.permute.xlu0 %503
      %v506 = vlaneseq
      %v507 = vshrl.u32 %v506, 7
      %v508 = vsub.s32 1, %v507
      %v509 = vrot.slane %v483, %v508
      %v510 = vlaneseq
      %v511 = vshrl.u32 %v510, 7
      %v512 = vsub.s32 1, %v511
      %v513 = vrot.slane %v484, %v512
      %v514 = vmul.f32 %v504, %v509
      %v515 = vmul.f32 %v504, %v513
      %v516 = vadd.f32 %v500, %v514
      %v517 = vadd.f32 %v501, %v515
      %518 = vset.pattern.permute.xlu0 2
      %519 = vperm.xlu0 %518, %v456
      %v520 = vpop.permute.xlu0 %519
      %v522 = vlaneseq
      %v523 = vshrl.u32 %v522, 7
      %v524 = vsub.s32 2, %v523
      %v525 = vrot.slane %v483, %v524
      %v526 = vlaneseq
      %v527 = vshrl.u32 %v526, 7
      %v528 = vsub.s32 2, %v527
      %v529 = vrot.slane %v484, %v528
      %v530 = vmul.f32 %v520, %v525
      %v531 = vmul.f32 %v520, %v529
      %v532 = vadd.f32 %v516, %v530
      %v533 = vadd.f32 %v517, %v531
      %534 = vset.pattern.permute.xlu0 3
      %535 = vperm.xlu0 %534, %v456
      %v536 = vpop.permute.xlu0 %535
      %v538 = vlaneseq
      %v539 = vshrl.u32 %v538, 7
      %v540 = vsub.s32 3, %v539
      %v541 = vrot.slane %v483, %v540
      %v542 = vlaneseq
      %v543 = vshrl.u32 %v542, 7
      %v544 = vsub.s32 3, %v543
      %v545 = vrot.slane %v484, %v544
      %v546 = vmul.f32 %v536, %v541
      %v547 = vmul.f32 %v536, %v545
      %v548 = vadd.f32 %v532, %v546
      %v549 = vadd.f32 %v533, %v547
      %550 = vrot.lane.b32.xlu0 %v455, 16
      %v551 = vpop.permute.xlu0 %550
      %552 = vrot.lane.b32.xlu0 %v464, 16
      %v553 = vpop.permute.xlu0 %552
      %vm554 = vcmp.lt.s32.totalorder %v471, 16
      %v555 = vsel %vm554, %v551, %v553
      %v556 = vsel %vm554, %v553, %v551
      %v557 = vlaneseq
      %v558 = vshrl.u32 %v557, 7
      %v559 = vsub.s32 1, %v558
      %v560 = vrot.slane %v447, %v559
      %v561 = vlaneseq
      %v562 = vshrl.u32 %v561, 7
      %v563 = vsub.s32 1, %v562
      %v564 = vrot.slane %v448, %v563
      %v565 = vmul.f32 %v556, %v560
      %v566 = vmul.f32 %v555, %v564
      %567 = vset.pattern.permute.xlu0 4
      %568 = vperm.xlu0 %567, %v456
      %v569 = vpop.permute.xlu0 %568
      %v571 = vlaneseq
      %v572 = vshrl.u32 %v571, 7
      %v573 = vsub.s32 0, %v572
      %v574 = vrot.slane %v565, %v573
      %v575 = vlaneseq
      %v576 = vshrl.u32 %v575, 7
      %v577 = vsub.s32 0, %v576
      %v578 = vrot.slane %v566, %v577
      %v579 = vmul.f32 %v569, %v574
      %v580 = vmul.f32 %v569, %v578
      %v581 = vadd.f32 %v548, %v579
      %v582 = vadd.f32 %v549, %v580
      %583 = vset.pattern.permute.xlu0 5
      %584 = vperm.xlu0 %583, %v456
      %v585 = vpop.permute.xlu0 %584
      %v587 = vlaneseq
      %v588 = vshrl.u32 %v587, 7
      %v589 = vsub.s32 1, %v588
      %v590 = vrot.slane %v565, %v589
      %v591 = vlaneseq
      %v592 = vshrl.u32 %v591, 7
      %v593 = vsub.s32 1, %v592
      %v594 = vrot.slane %v566, %v593
      %v595 = vmul.f32 %v585, %v590
      %v596 = vmul.f32 %v585, %v594
      %v597 = vadd.f32 %v581, %v595
      %v598 = vadd.f32 %v582, %v596
      %599 = vset.pattern.permute.xlu0 6
      %600 = vperm.xlu0 %599, %v456
      %v601 = vpop.permute.xlu0 %600
      %v603 = vlaneseq
      %v604 = vshrl.u32 %v603, 7
      %v605 = vsub.s32 2, %v604
      %v606 = vrot.slane %v565, %v605
      %v607 = vlaneseq
      %v608 = vshrl.u32 %v607, 7
      %v609 = vsub.s32 2, %v608
      %v610 = vrot.slane %v566, %v609
      %v611 = vmul.f32 %v601, %v606
      %v612 = vmul.f32 %v601, %v610
      %v613 = vadd.f32 %v597, %v611
      %v614 = vadd.f32 %v598, %v612
      %615 = vset.pattern.permute.xlu0 7
      %616 = vperm.xlu0 %615, %v456
      %v617 = vpop.permute.xlu0 %616
      %v619 = vlaneseq
      %v620 = vshrl.u32 %v619, 7
      %v621 = vsub.s32 3, %v620
      %v622 = vrot.slane %v565, %v621
      %v623 = vlaneseq
      %v624 = vshrl.u32 %v623, 7
      %v625 = vsub.s32 3, %v624
      %v626 = vrot.slane %v566, %v625
      %v627 = vmul.f32 %v617, %v622
      %v628 = vmul.f32 %v617, %v626
      %v629 = vadd.f32 %v613, %v627
      %v630 = vadd.f32 %v614, %v628
      %631 = vrot.lane.b32.xlu0 %v455, 15
      %v632 = vpop.permute.xlu0 %631
      %633 = vrot.lane.b32.xlu0 %v464, 15
      %v634 = vpop.permute.xlu0 %633
      %vm635 = vcmp.lt.s32.totalorder %v471, 15
      %v636 = vsel %vm635, %v632, %v634
      %v637 = vsel %vm635, %v634, %v632
      %v638 = vlaneseq
      %v639 = vshrl.u32 %v638, 7
      %v640 = vsub.s32 2, %v639
      %v641 = vrot.slane %v447, %v640
      %v642 = vlaneseq
      %v643 = vshrl.u32 %v642, 7
      %v644 = vsub.s32 2, %v643
      %v645 = vrot.slane %v448, %v644
      %v646 = vmul.f32 %v637, %v641
      %v647 = vmul.f32 %v636, %v645
      %648 = vset.pattern.permute.xlu0 8
      %649 = vperm.xlu0 %648, %v456
      %v650 = vpop.permute.xlu0 %649
      %v652 = vlaneseq
      %v653 = vshrl.u32 %v652, 7
      %v654 = vsub.s32 0, %v653
      %v655 = vrot.slane %v646, %v654
      %v656 = vlaneseq
      %v657 = vshrl.u32 %v656, 7
      %v658 = vsub.s32 0, %v657
      %v659 = vrot.slane %v647, %v658
      %v660 = vmul.f32 %v650, %v655
      %v661 = vmul.f32 %v650, %v659
      %v662 = vadd.f32 %v629, %v660
      %v663 = vadd.f32 %v630, %v661
      %664 = vset.pattern.permute.xlu0 9
      %665 = vperm.xlu0 %664, %v456
      %v666 = vpop.permute.xlu0 %665
      %v668 = vlaneseq
      %v669 = vshrl.u32 %v668, 7
      %v670 = vsub.s32 1, %v669
      %v671 = vrot.slane %v646, %v670
      %v672 = vlaneseq
      %v673 = vshrl.u32 %v672, 7
      %v674 = vsub.s32 1, %v673
      %v675 = vrot.slane %v647, %v674
      %v676 = vmul.f32 %v666, %v671
      %v677 = vmul.f32 %v666, %v675
      %v678 = vadd.f32 %v662, %v676
      %v679 = vadd.f32 %v663, %v677
      %680 = vset.pattern.permute.xlu0 10
      %681 = vperm.xlu0 %680, %v456
      %v682 = vpop.permute.xlu0 %681
      %v684 = vlaneseq
      %v685 = vshrl.u32 %v684, 7
      %v686 = vsub.s32 2, %v685
      %v687 = vrot.slane %v646, %v686
      %v688 = vlaneseq
      %v689 = vshrl.u32 %v688, 7
      %v690 = vsub.s32 2, %v689
      %v691 = vrot.slane %v647, %v690
      %v692 = vmul.f32 %v682, %v687
      %v693 = vmul.f32 %v682, %v691
      %v694 = vadd.f32 %v678, %v692
      %v695 = vadd.f32 %v679, %v693
      %696 = vset.pattern.permute.xlu0 11
      %697 = vperm.xlu0 %696, %v456
      %v698 = vpop.permute.xlu0 %697
      %v700 = vlaneseq
      %v701 = vshrl.u32 %v700, 7
      %v702 = vsub.s32 3, %v701
      %v703 = vrot.slane %v646, %v702
      %v704 = vlaneseq
      %v705 = vshrl.u32 %v704, 7
      %v706 = vsub.s32 3, %v705
      %v707 = vrot.slane %v647, %v706
      %v708 = vmul.f32 %v698, %v703
      %v709 = vmul.f32 %v698, %v707
      %v710 = vadd.f32 %v694, %v708
      %v711 = vadd.f32 %v695, %v709
      %712 = vrot.lane.b32.xlu0 %v455, 1
      %v713 = vpop.permute.xlu0 %712
      %714 = vrot.lane.b32.xlu0 %v464, 1
      %v715 = vpop.permute.xlu0 %714
      %vm716 = vcmp.lt.s32.totalorder %v471, 1
      %v717 = vsel %vm716, %v713, %v715
      %v718 = vsel %vm716, %v715, %v713
      %v719 = vlaneseq
      %v720 = vshrl.u32 %v719, 7
      %v721 = vsub.s32 3, %v720
      %v722 = vrot.slane %v447, %v721
      %v723 = vlaneseq
      %v724 = vshrl.u32 %v723, 7
      %v725 = vsub.s32 3, %v724
      %v726 = vrot.slane %v448, %v725
      %v727 = vmul.f32 %v718, %v722
      %v728 = vmul.f32 %v717, %v726
      %729 = vset.pattern.permute.xlu0 12
      %730 = vperm.xlu0 %729, %v456
      %v731 = vpop.permute.xlu0 %730
      %v733 = vlaneseq
      %v734 = vshrl.u32 %v733, 7
      %v735 = vsub.s32 0, %v734
      %v736 = vrot.slane %v727, %v735
      %v737 = vlaneseq
      %v738 = vshrl.u32 %v737, 7
      %v739 = vsub.s32 0, %v738
      %v740 = vrot.slane %v728, %v739
      %v741 = vmul.f32 %v731, %v736
      %v742 = vmul.f32 %v731, %v740
      %v743 = vadd.f32 %v710, %v741
      %v744 = vadd.f32 %v711, %v742
      %745 = vset.pattern.permute.xlu0 13
      %746 = vperm.xlu0 %745, %v456
      %v747 = vpop.permute.xlu0 %746
      %v749 = vlaneseq
      %v750 = vshrl.u32 %v749, 7
      %v751 = vsub.s32 1, %v750
      %v752 = vrot.slane %v727, %v751
      %v753 = vlaneseq
      %v754 = vshrl.u32 %v753, 7
      %v755 = vsub.s32 1, %v754
      %v756 = vrot.slane %v728, %v755
      %v757 = vmul.f32 %v747, %v752
      %v758 = vmul.f32 %v747, %v756
      %v759 = vadd.f32 %v743, %v757
      %v760 = vadd.f32 %v744, %v758
      %761 = vset.pattern.permute.xlu0 14
      %762 = vperm.xlu0 %761, %v456
      %v763 = vpop.permute.xlu0 %762
      %v765 = vlaneseq
      %v766 = vshrl.u32 %v765, 7
      %v767 = vsub.s32 2, %v766
      %v768 = vrot.slane %v727, %v767
      %v769 = vlaneseq
      %v770 = vshrl.u32 %v769, 7
      %v771 = vsub.s32 2, %v770
      %v772 = vrot.slane %v728, %v771
      %v773 = vmul.f32 %v763, %v768
      %v774 = vmul.f32 %v763, %v772
      %v775 = vadd.f32 %v759, %v773
      %v776 = vadd.f32 %v760, %v774
      %777 = vset.pattern.permute.xlu0 15
      %778 = vperm.xlu0 %777, %v456
      %v779 = vpop.permute.xlu0 %778
      %v781 = vlaneseq
      %v782 = vshrl.u32 %v781, 7
      %v783 = vsub.s32 3, %v782
      %v784 = vrot.slane %v727, %v783
      %v785 = vlaneseq
      %v786 = vshrl.u32 %v785, 7
      %v787 = vsub.s32 3, %v786
      %v788 = vrot.slane %v728, %v787
      %v789 = vmul.f32 %v779, %v784
      %v790 = vmul.f32 %v779, %v788
      %v791 = vadd.f32 %v775, %v789
      %v792 = vadd.f32 %v776, %v790
      %793 = vset.pattern.permute.xlu0 16
      %794 = vperm.xlu0 %793, %v456
      %v795 = vpop.permute.xlu0 %794
      %v797 = vlaneseq
      %v798 = vshrl.u32 %v797, 7
      %v799 = vsub.s32 0, %v798
      %v800 = vrot.slane %v455, %v799
      %v801 = vlaneseq
      %v802 = vshrl.u32 %v801, 7
      %v803 = vsub.s32 4, %v802
      %v804 = vrot.slane %v455, %v803
      %v807 = vlaneseq
      %v808 = vshrl.u32 %v807, 7
      %v809 = vsub.s32 0, %v808
      %v810 = vrot.slane %v800, %v809
      %v811 = vlaneseq
      %v812 = vshrl.u32 %v811, 7
      %v813 = vsub.s32 0, %v812
      %v814 = vrot.slane %v804, %v813
      %v815 = vmul.f32 %v795, %v810
      %v816 = vmul.f32 %v795, %v814
      %v817 = vadd.f32 %v791, %v815
      %v818 = vadd.f32 %v792, %v816
      %819 = vset.pattern.permute.xlu0 17
      %820 = vperm.xlu0 %819, %v456
      %v821 = vpop.permute.xlu0 %820
      %v823 = vlaneseq
      %v824 = vshrl.u32 %v823, 7
      %v825 = vsub.s32 1, %v824
      %v826 = vrot.slane %v455, %v825
      %v827 = vlaneseq
      %v828 = vshrl.u32 %v827, 7
      %v829 = vsub.s32 5, %v828
      %v830 = vrot.slane %v455, %v829
      %v833 = vlaneseq
      %v834 = vshrl.u32 %v833, 7
      %v835 = vsub.s32 1, %v834
      %v836 = vrot.slane %v826, %v835
      %v837 = vlaneseq
      %v838 = vshrl.u32 %v837, 7
      %v839 = vsub.s32 1, %v838
      %v840 = vrot.slane %v830, %v839
      %v841 = vmul.f32 %v821, %v836
      %v842 = vmul.f32 %v821, %v840
      %v843 = vadd.f32 %v817, %v841
      %v844 = vadd.f32 %v818, %v842
      %845 = vset.pattern.permute.xlu0 18
      %846 = vperm.xlu0 %845, %v456
      %v847 = vpop.permute.xlu0 %846
      %v849 = vlaneseq
      %v850 = vshrl.u32 %v849, 7
      %v851 = vsub.s32 2, %v850
      %v852 = vrot.slane %v455, %v851
      %v853 = vlaneseq
      %v854 = vshrl.u32 %v853, 7
      %v855 = vsub.s32 6, %v854
      %v856 = vrot.slane %v455, %v855
      %v859 = vlaneseq
      %v860 = vshrl.u32 %v859, 7
      %v861 = vsub.s32 2, %v860
      %v862 = vrot.slane %v852, %v861
      %v863 = vlaneseq
      %v864 = vshrl.u32 %v863, 7
      %v865 = vsub.s32 2, %v864
      %v866 = vrot.slane %v856, %v865
      %v867 = vmul.f32 %v847, %v862
      %v868 = vmul.f32 %v847, %v866
      %v869 = vadd.f32 %v843, %v867
      %v870 = vadd.f32 %v844, %v868
      %871 = vset.pattern.permute.xlu0 19
      %872 = vperm.xlu0 %871, %v456
      %v873 = vpop.permute.xlu0 %872
      %v875 = vlaneseq
      %v876 = vshrl.u32 %v875, 7
      %v877 = vsub.s32 3, %v876
      %v878 = vrot.slane %v455, %v877
      %v879 = vlaneseq
      %v880 = vshrl.u32 %v879, 7
      %v881 = vsub.s32 7, %v880
      %v882 = vrot.slane %v455, %v881
      %v885 = vlaneseq
      %v886 = vshrl.u32 %v885, 7
      %v887 = vsub.s32 3, %v886
      %v888 = vrot.slane %v878, %v887
      %v889 = vlaneseq
      %v890 = vshrl.u32 %v889, 7
      %v891 = vsub.s32 3, %v890
      %v892 = vrot.slane %v882, %v891
      %v893 = vmul.f32 %v873, %v888
      %v894 = vmul.f32 %v873, %v892
      %v895 = vadd.f32 %v869, %v893
      %v896 = vadd.f32 %v870, %v894
      %897 = vrot.lane.b32.xlu0 %v455, 127
      %v898 = vpop.permute.xlu0 %897
      %899 = vrot.lane.b32.xlu0 %v464, 127
      %v900 = vpop.permute.xlu0 %899
      %vm901 = vcmp.lt.s32.totalorder %v471, 127
      %v902 = vsel %vm901, %v898, %v900
      %v903 = vsel %vm901, %v900, %v898
      %v904 = vlaneseq
      %v905 = vshrl.u32 %v904, 7
      %v906 = vsub.s32 5, %v905
      %v907 = vrot.slane %v447, %v906
      %v908 = vlaneseq
      %v909 = vshrl.u32 %v908, 7
      %v910 = vsub.s32 5, %v909
      %v911 = vrot.slane %v448, %v910
      %v912 = vmul.f32 %v902, %v907
      %v913 = vmul.f32 %v903, %v911
      %914 = vset.pattern.permute.xlu0 20
      %915 = vperm.xlu0 %914, %v456
      %v916 = vpop.permute.xlu0 %915
      %v918 = vlaneseq
      %v919 = vshrl.u32 %v918, 7
      %v920 = vsub.s32 0, %v919
      %v921 = vrot.slane %v912, %v920
      %v922 = vlaneseq
      %v923 = vshrl.u32 %v922, 7
      %v924 = vsub.s32 0, %v923
      %v925 = vrot.slane %v913, %v924
      %v926 = vmul.f32 %v916, %v921
      %v927 = vmul.f32 %v916, %v925
      %v928 = vadd.f32 %v895, %v926
      %v929 = vadd.f32 %v896, %v927
      %930 = vset.pattern.permute.xlu0 21
      %931 = vperm.xlu0 %930, %v456
      %v932 = vpop.permute.xlu0 %931
      %v934 = vlaneseq
      %v935 = vshrl.u32 %v934, 7
      %v936 = vsub.s32 1, %v935
      %v937 = vrot.slane %v912, %v936
      %v938 = vlaneseq
      %v939 = vshrl.u32 %v938, 7
      %v940 = vsub.s32 1, %v939
      %v941 = vrot.slane %v913, %v940
      %v942 = vmul.f32 %v932, %v937
      %v943 = vmul.f32 %v932, %v941
      %v944 = vadd.f32 %v928, %v942
      %v945 = vadd.f32 %v929, %v943
      %946 = vset.pattern.permute.xlu0 22
      %947 = vperm.xlu0 %946, %v456
      %v948 = vpop.permute.xlu0 %947
      %v950 = vlaneseq
      %v951 = vshrl.u32 %v950, 7
      %v952 = vsub.s32 2, %v951
      %v953 = vrot.slane %v912, %v952
      %v954 = vlaneseq
      %v955 = vshrl.u32 %v954, 7
      %v956 = vsub.s32 2, %v955
      %v957 = vrot.slane %v913, %v956
      %v958 = vmul.f32 %v948, %v953
      %v959 = vmul.f32 %v948, %v957
      %v960 = vadd.f32 %v944, %v958
      %v961 = vadd.f32 %v945, %v959
      %962 = vset.pattern.permute.xlu0 23
      %963 = vperm.xlu0 %962, %v456
      %v964 = vpop.permute.xlu0 %963
      %v966 = vlaneseq
      %v967 = vshrl.u32 %v966, 7
      %v968 = vsub.s32 3, %v967
      %v969 = vrot.slane %v912, %v968
      %v970 = vlaneseq
      %v971 = vshrl.u32 %v970, 7
      %v972 = vsub.s32 3, %v971
      %v973 = vrot.slane %v913, %v972
      %v974 = vmul.f32 %v964, %v969
      %v975 = vmul.f32 %v964, %v973
      %v976 = vadd.f32 %v960, %v974
      %v977 = vadd.f32 %v961, %v975
      %978 = vrot.lane.b32.xlu0 %v455, 113
      %v979 = vpop.permute.xlu0 %978
      %980 = vrot.lane.b32.xlu0 %v464, 113
      %v981 = vpop.permute.xlu0 %980
      %vm982 = vcmp.lt.s32.totalorder %v471, 113
      %v983 = vsel %vm982, %v979, %v981
      %v984 = vsel %vm982, %v981, %v979
      %v985 = vlaneseq
      %v986 = vshrl.u32 %v985, 7
      %v987 = vsub.s32 6, %v986
      %v988 = vrot.slane %v447, %v987
      %v989 = vlaneseq
      %v990 = vshrl.u32 %v989, 7
      %v991 = vsub.s32 6, %v990
      %v992 = vrot.slane %v448, %v991
      %v993 = vmul.f32 %v983, %v988
      %v994 = vmul.f32 %v984, %v992
      %995 = vset.pattern.permute.xlu0 24
      %996 = vperm.xlu0 %995, %v456
      %v997 = vpop.permute.xlu0 %996
      %v999 = vlaneseq
      %v1000 = vshrl.u32 %v999, 7
      %v1001 = vsub.s32 0, %v1000
      %v1002 = vrot.slane %v993, %v1001
      %v1003 = vlaneseq
      %v1004 = vshrl.u32 %v1003, 7
      %v1005 = vsub.s32 0, %v1004
      %v1006 = vrot.slane %v994, %v1005
      %v1007 = vmul.f32 %v997, %v1002
      %v1008 = vmul.f32 %v997, %v1006
      %v1009 = vadd.f32 %v976, %v1007
      %v1010 = vadd.f32 %v977, %v1008
      %1011 = vset.pattern.permute.xlu0 25
      %1012 = vperm.xlu0 %1011, %v456
      %v1013 = vpop.permute.xlu0 %1012
      %v1015 = vlaneseq
      %v1016 = vshrl.u32 %v1015, 7
      %v1017 = vsub.s32 1, %v1016
      %v1018 = vrot.slane %v993, %v1017
      %v1019 = vlaneseq
      %v1020 = vshrl.u32 %v1019, 7
      %v1021 = vsub.s32 1, %v1020
      %v1022 = vrot.slane %v994, %v1021
      %v1023 = vmul.f32 %v1013, %v1018
      %v1024 = vmul.f32 %v1013, %v1022
      %v1025 = vadd.f32 %v1009, %v1023
      %v1026 = vadd.f32 %v1010, %v1024
      %1027 = vset.pattern.permute.xlu0 26
      %1028 = vperm.xlu0 %1027, %v456
      %v1029 = vpop.permute.xlu0 %1028
      %v1031 = vlaneseq
      %v1032 = vshrl.u32 %v1031, 7
      %v1033 = vsub.s32 2, %v1032
      %v1034 = vrot.slane %v993, %v1033
      %v1035 = vlaneseq
      %v1036 = vshrl.u32 %v1035, 7
      %v1037 = vsub.s32 2, %v1036
      %v1038 = vrot.slane %v994, %v1037
      %v1039 = vmul.f32 %v1029, %v1034
      %v1040 = vmul.f32 %v1029, %v1038
      %v1041 = vadd.f32 %v1025, %v1039
      %v1042 = vadd.f32 %v1026, %v1040
      %1043 = vset.pattern.permute.xlu0 27
      %1044 = vperm.xlu0 %1043, %v456
      %v1045 = vpop.permute.xlu0 %1044
      %v1047 = vlaneseq
      %v1048 = vshrl.u32 %v1047, 7
      %v1049 = vsub.s32 3, %v1048
      %v1050 = vrot.slane %v993, %v1049
      %v1051 = vlaneseq
      %v1052 = vshrl.u32 %v1051, 7
      %v1053 = vsub.s32 3, %v1052
      %v1054 = vrot.slane %v994, %v1053
      %v1055 = vmul.f32 %v1045, %v1050
      %v1056 = vmul.f32 %v1045, %v1054
      %v1057 = vadd.f32 %v1041, %v1055
      %v1058 = vadd.f32 %v1042, %v1056
      %1059 = vrot.lane.b32.xlu0 %v455, 112
      %v1060 = vpop.permute.xlu0 %1059
      %1061 = vrot.lane.b32.xlu0 %v464, 112
      %v1062 = vpop.permute.xlu0 %1061
      %vm1063 = vcmp.lt.s32.totalorder %v471, 112
      %v1064 = vsel %vm1063, %v1060, %v1062
      %v1065 = vsel %vm1063, %v1062, %v1060
      %v1066 = vlaneseq
      %v1067 = vshrl.u32 %v1066, 7
      %v1068 = vsub.s32 7, %v1067
      %v1069 = vrot.slane %v447, %v1068
      %v1070 = vlaneseq
      %v1071 = vshrl.u32 %v1070, 7
      %v1072 = vsub.s32 7, %v1071
      %v1073 = vrot.slane %v448, %v1072
      %v1074 = vmul.f32 %v1064, %v1069
      %v1075 = vmul.f32 %v1065, %v1073
      %1076 = vset.pattern.permute.xlu0 28
      %1077 = vperm.xlu0 %1076, %v456
      %v1078 = vpop.permute.xlu0 %1077
      %v1080 = vlaneseq
      %v1081 = vshrl.u32 %v1080, 7
      %v1082 = vsub.s32 0, %v1081
      %v1083 = vrot.slane %v1074, %v1082
      %v1084 = vlaneseq
      %v1085 = vshrl.u32 %v1084, 7
      %v1086 = vsub.s32 0, %v1085
      %v1087 = vrot.slane %v1075, %v1086
      %v1088 = vmul.f32 %v1078, %v1083
      %v1089 = vmul.f32 %v1078, %v1087
      %v1090 = vadd.f32 %v1057, %v1088
      %v1091 = vadd.f32 %v1058, %v1089
      %1092 = vset.pattern.permute.xlu0 29
      %1093 = vperm.xlu0 %1092, %v456
      %v1094 = vpop.permute.xlu0 %1093
      %v1096 = vlaneseq
      %v1097 = vshrl.u32 %v1096, 7
      %v1098 = vsub.s32 1, %v1097
      %v1099 = vrot.slane %v1074, %v1098
      %v1100 = vlaneseq
      %v1101 = vshrl.u32 %v1100, 7
      %v1102 = vsub.s32 1, %v1101
      %v1103 = vrot.slane %v1075, %v1102
      %v1104 = vmul.f32 %v1094, %v1099
      %v1105 = vmul.f32 %v1094, %v1103
      %v1106 = vadd.f32 %v1090, %v1104
      %v1107 = vadd.f32 %v1091, %v1105
      %1108 = vset.pattern.permute.xlu0 30
      %1109 = vperm.xlu0 %1108, %v456
      %v1110 = vpop.permute.xlu0 %1109
      %v1112 = vlaneseq
      %v1113 = vshrl.u32 %v1112, 7
      %v1114 = vsub.s32 2, %v1113
      %v1115 = vrot.slane %v1074, %v1114
      %v1116 = vlaneseq
      %v1117 = vshrl.u32 %v1116, 7
      %v1118 = vsub.s32 2, %v1117
      %v1119 = vrot.slane %v1075, %v1118
      %v1120 = vmul.f32 %v1110, %v1115
      %v1121 = vmul.f32 %v1110, %v1119
      %v1122 = vadd.f32 %v1106, %v1120
      %v1123 = vadd.f32 %v1107, %v1121
      %1124 = vset.pattern.permute.xlu0 31
      %1125 = vperm.xlu0 %1124, %v456
      %v1126 = vpop.permute.xlu0 %1125
      %v1128 = vlaneseq
      %v1129 = vshrl.u32 %v1128, 7
      %v1130 = vsub.s32 3, %v1129
      %v1131 = vrot.slane %v1074, %v1130
      %v1132 = vlaneseq
      %v1133 = vshrl.u32 %v1132, 7
      %v1134 = vsub.s32 3, %v1133
      %v1135 = vrot.slane %v1075, %v1134
      %v1136 = vmul.f32 %v1126, %v1131
      %v1137 = vmul.f32 %v1126, %v1135
      %v1138 = vadd.f32 %v1122, %v1136
      %v1139 = vadd.f32 %v1123, %v1137
      %1140 = vrot.lane.b32.xlu0 %v455, 111
      %v1141 = vpop.permute.xlu0 %1140
      %1142 = vrot.lane.b32.xlu0 %v464, 111
      %v1143 = vpop.permute.xlu0 %1142
      %vm1144 = vcmp.lt.s32.totalorder %v471, 111
      %v1145 = vsel %vm1144, %v1141, %v1143
      %v1146 = vsel %vm1144, %v1143, %v1141
      %v1147 = vlaneseq
      %v1148 = vshrl.u32 %v1147, 7
      %v1149 = vsub.s32 0, %v1148
      %v1150 = vrot.slane %v449, %v1149
      %v1151 = vlaneseq
      %v1152 = vshrl.u32 %v1151, 7
      %v1153 = vsub.s32 0, %v1152
      %v1154 = vrot.slane %v450, %v1153
      %v1155 = vmul.f32 %v1145, %v1150
      %v1156 = vmul.f32 %v1146, %v1154
      %1157 = vset.pattern.permute.xlu0 32
      %1158 = vperm.xlu0 %1157, %v456
      %v1159 = vpop.permute.xlu0 %1158
      %v1161 = vlaneseq
      %v1162 = vshrl.u32 %v1161, 7
      %v1163 = vsub.s32 0, %v1162
      %v1164 = vrot.slane %v1155, %v1163
      %v1165 = vlaneseq
      %v1166 = vshrl.u32 %v1165, 7
      %v1167 = vsub.s32 0, %v1166
      %v1168 = vrot.slane %v1156, %v1167
      %v1169 = vmul.f32 %v1159, %v1164
      %v1170 = vmul.f32 %v1159, %v1168
      %v1171 = vadd.f32 %v1138, %v1169
      %v1172 = vadd.f32 %v1139, %v1170
      %1173 = vset.pattern.permute.xlu0 33
      %1174 = vperm.xlu0 %1173, %v456
      %v1175 = vpop.permute.xlu0 %1174
      %v1177 = vlaneseq
      %v1178 = vshrl.u32 %v1177, 7
      %v1179 = vsub.s32 1, %v1178
      %v1180 = vrot.slane %v1155, %v1179
      %v1181 = vlaneseq
      %v1182 = vshrl.u32 %v1181, 7
      %v1183 = vsub.s32 1, %v1182
      %v1184 = vrot.slane %v1156, %v1183
      %v1185 = vmul.f32 %v1175, %v1180
      %v1186 = vmul.f32 %v1175, %v1184
      %v1187 = vadd.f32 %v1171, %v1185
      %v1188 = vadd.f32 %v1172, %v1186
      %1189 = vset.pattern.permute.xlu0 34
      %1190 = vperm.xlu0 %1189, %v456
      %v1191 = vpop.permute.xlu0 %1190
      %v1193 = vlaneseq
      %v1194 = vshrl.u32 %v1193, 7
      %v1195 = vsub.s32 2, %v1194
      %v1196 = vrot.slane %v1155, %v1195
      %v1197 = vlaneseq
      %v1198 = vshrl.u32 %v1197, 7
      %v1199 = vsub.s32 2, %v1198
      %v1200 = vrot.slane %v1156, %v1199
      %v1201 = vmul.f32 %v1191, %v1196
      %v1202 = vmul.f32 %v1191, %v1200
      %v1203 = vadd.f32 %v1187, %v1201
      %v1204 = vadd.f32 %v1188, %v1202
      %1205 = vset.pattern.permute.xlu0 35
      %1206 = vperm.xlu0 %1205, %v456
      %v1207 = vpop.permute.xlu0 %1206
      %v1209 = vlaneseq
      %v1210 = vshrl.u32 %v1209, 7
      %v1211 = vsub.s32 3, %v1210
      %v1212 = vrot.slane %v1155, %v1211
      %v1213 = vlaneseq
      %v1214 = vshrl.u32 %v1213, 7
      %v1215 = vsub.s32 3, %v1214
      %v1216 = vrot.slane %v1156, %v1215
      %v1217 = vmul.f32 %v1207, %v1212
      %v1218 = vmul.f32 %v1207, %v1216
      %v1219 = vadd.f32 %v1203, %v1217
      %v1220 = vadd.f32 %v1204, %v1218
      %vm1221 = vcmp.ge.f32.partialorder %v1219, 0.0
      %vm1222 = vcmp.ge.f32.partialorder %v1220, 0.0
      %v1223 = vmul.f32 %v1219, 0.2
      %v1224 = vmul.f32 %v1220, 0.2
      %v1225 = vsel %vm1221, %v1219, %v1223
      %v1226 = vsel %vm1222, %v1220, %v1224
      %v1228 = vcombine.high %v452, %v452
      %v1230 = vadd.f32 %v1225, %v452
      %v1231 = vadd.f32 %v1226, %v1228
      %v1234 = vcombine.low %v1230, %v1231
      %v1236 = vsub.f32 %v453, %v1234
      %v1237 = vld [vmem:[%s7] sm:$0xf]
      %v1238 = vld [vmem:[%s8] sm:$0xf]
      %1240 = vset.pattern.permute.xlu0 0
      %1241 = vperm.xlu0 %1240, %v1238
      %v1242 = vpop.permute.xlu0 %1241
      %v1245 = vcombine.high %v1236, %v1236
      %1247 = vrot.lane.b32.xlu0 %v1236, 17
      %v1248 = vpop.permute.xlu0 %1247
      %1249 = vrot.lane.b32.xlu0 %v1245, 17
      %v1250 = vpop.permute.xlu0 %1249
      %v1251 = vsel %vm472, %v1248, %v1250
      %v1252 = vsel %vm472, %v1250, %v1248
      %v1253 = vmul.f32 %v1252, %v478
      %v1254 = vmul.f32 %v1251, %v482
      %1256 = vset.pattern.permute.xlu0 0
      %1257 = vperm.xlu0 %1256, %v1237
      %v1258 = vpop.permute.xlu0 %1257
      %v1260 = vlaneseq
      %v1261 = vshrl.u32 %v1260, 7
      %v1262 = vsub.s32 0, %v1261
      %v1263 = vrot.slane %v1253, %v1262
      %v1264 = vlaneseq
      %v1265 = vshrl.u32 %v1264, 7
      %v1266 = vsub.s32 0, %v1265
      %v1267 = vrot.slane %v1254, %v1266
      %v1268 = vmul.f32 %v1258, %v1263
      %v1269 = vmul.f32 %v1258, %v1267
      %v1270 = vadd.f32 %v1242, %v1268
      %v1271 = vadd.f32 %v1242, %v1269
      %1272 = vset.pattern.permute.xlu0 1
      %1273 = vperm.xlu0 %1272, %v1237
      %v1274 = vpop.permute.xlu0 %1273
      %v1276 = vlaneseq
      %v1277 = vshrl.u32 %v1276, 7
      %v1278 = vsub.s32 1, %v1277
      %v1279 = vrot.slane %v1253, %v1278
      %v1280 = vlaneseq
      %v1281 = vshrl.u32 %v1280, 7
      %v1282 = vsub.s32 1, %v1281
      %v1283 = vrot.slane %v1254, %v1282
      %v1284 = vmul.f32 %v1274, %v1279
      %v1285 = vmul.f32 %v1274, %v1283
      %v1286 = vadd.f32 %v1270, %v1284
      %v1287 = vadd.f32 %v1271, %v1285
      %1288 = vset.pattern.permute.xlu0 2
      %1289 = vperm.xlu0 %1288, %v1237
      %v1290 = vpop.permute.xlu0 %1289
      %v1292 = vlaneseq
      %v1293 = vshrl.u32 %v1292, 7
      %v1294 = vsub.s32 2, %v1293
      %v1295 = vrot.slane %v1253, %v1294
      %v1296 = vlaneseq
      %v1297 = vshrl.u32 %v1296, 7
      %v1298 = vsub.s32 2, %v1297
      %v1299 = vrot.slane %v1254, %v1298
      %v1300 = vmul.f32 %v1290, %v1295
      %v1301 = vmul.f32 %v1290, %v1299
      %v1302 = vadd.f32 %v1286, %v1300
      %v1303 = vadd.f32 %v1287, %v1301
      %1304 = vset.pattern.permute.xlu0 3
      %1305 = vperm.xlu0 %1304, %v1237
      %v1306 = vpop.permute.xlu0 %1305
      %v1308 = vlaneseq
      %v1309 = vshrl.u32 %v1308, 7
      %v1310 = vsub.s32 3, %v1309
      %v1311 = vrot.slane %v1253, %v1310
      %v1312 = vlaneseq
      %v1313 = vshrl.u32 %v1312, 7
      %v1314 = vsub.s32 3, %v1313
      %v1315 = vrot.slane %v1254, %v1314
      %v1316 = vmul.f32 %v1306, %v1311
      %v1317 = vmul.f32 %v1306, %v1315
      %v1318 = vadd.f32 %v1302, %v1316
      %v1319 = vadd.f32 %v1303, %v1317
      %1320 = vrot.lane.b32.xlu0 %v1236, 16
      %v1321 = vpop.permute.xlu0 %1320
      %1322 = vrot.lane.b32.xlu0 %v1245, 16
      %v1323 = vpop.permute.xlu0 %1322
      %v1324 = vsel %vm554, %v1321, %v1323
      %v1325 = vsel %vm554, %v1323, %v1321
      %v1326 = vmul.f32 %v1325, %v560
      %v1327 = vmul.f32 %v1324, %v564
      %1328 = vset.pattern.permute.xlu0 4
      %1329 = vperm.xlu0 %1328, %v1237
      %v1330 = vpop.permute.xlu0 %1329
      %v1332 = vlaneseq
      %v1333 = vshrl.u32 %v1332, 7
      %v1334 = vsub.s32 0, %v1333
      %v1335 = vrot.slane %v1326, %v1334
      %v1336 = vlaneseq
      %v1337 = vshrl.u32 %v1336, 7
      %v1338 = vsub.s32 0, %v1337
      %v1339 = vrot.slane %v1327, %v1338
      %v1340 = vmul.f32 %v1330, %v1335
      %v1341 = vmul.f32 %v1330, %v1339
      %v1342 = vadd.f32 %v1318, %v1340
      %v1343 = vadd.f32 %v1319, %v1341
      %1344 = vset.pattern.permute.xlu0 5
      %1345 = vperm.xlu0 %1344, %v1237
      %v1346 = vpop.permute.xlu0 %1345
      %v1348 = vlaneseq
      %v1349 = vshrl.u32 %v1348, 7
      %v1350 = vsub.s32 1, %v1349
      %v1351 = vrot.slane %v1326, %v1350
      %v1352 = vlaneseq
      %v1353 = vshrl.u32 %v1352, 7
      %v1354 = vsub.s32 1, %v1353
      %v1355 = vrot.slane %v1327, %v1354
      %v1356 = vmul.f32 %v1346, %v1351
      %v1357 = vmul.f32 %v1346, %v1355
      %v1358 = vadd.f32 %v1342, %v1356
      %v1359 = vadd.f32 %v1343, %v1357
      %1360 = vset.pattern.permute.xlu0 6
      %1361 = vperm.xlu0 %1360, %v1237
      %v1362 = vpop.permute.xlu0 %1361
      %v1364 = vlaneseq
      %v1365 = vshrl.u32 %v1364, 7
      %v1366 = vsub.s32 2, %v1365
      %v1367 = vrot.slane %v1326, %v1366
      %v1368 = vlaneseq
      %v1369 = vshrl.u32 %v1368, 7
      %v1370 = vsub.s32 2, %v1369
      %v1371 = vrot.slane %v1327, %v1370
      %v1372 = vmul.f32 %v1362, %v1367
      %v1373 = vmul.f32 %v1362, %v1371
      %v1374 = vadd.f32 %v1358, %v1372
      %v1375 = vadd.f32 %v1359, %v1373
      %1376 = vset.pattern.permute.xlu0 7
      %1377 = vperm.xlu0 %1376, %v1237
      %v1378 = vpop.permute.xlu0 %1377
      %v1380 = vlaneseq
      %v1381 = vshrl.u32 %v1380, 7
      %v1382 = vsub.s32 3, %v1381
      %v1383 = vrot.slane %v1326, %v1382
      %v1384 = vlaneseq
      %v1385 = vshrl.u32 %v1384, 7
      %v1386 = vsub.s32 3, %v1385
      %v1387 = vrot.slane %v1327, %v1386
      %v1388 = vmul.f32 %v1378, %v1383
      %v1389 = vmul.f32 %v1378, %v1387
      %v1390 = vadd.f32 %v1374, %v1388
      %v1391 = vadd.f32 %v1375, %v1389
      %1392 = vrot.lane.b32.xlu0 %v1236, 15
      %v1393 = vpop.permute.xlu0 %1392
      %1394 = vrot.lane.b32.xlu0 %v1245, 15
      %v1395 = vpop.permute.xlu0 %1394
      %v1396 = vsel %vm635, %v1393, %v1395
      %v1397 = vsel %vm635, %v1395, %v1393
      %v1398 = vmul.f32 %v1397, %v641
      %v1399 = vmul.f32 %v1396, %v645
      %1400 = vset.pattern.permute.xlu0 8
      %1401 = vperm.xlu0 %1400, %v1237
      %v1402 = vpop.permute.xlu0 %1401
      %v1404 = vlaneseq
      %v1405 = vshrl.u32 %v1404, 7
      %v1406 = vsub.s32 0, %v1405
      %v1407 = vrot.slane %v1398, %v1406
      %v1408 = vlaneseq
      %v1409 = vshrl.u32 %v1408, 7
      %v1410 = vsub.s32 0, %v1409
      %v1411 = vrot.slane %v1399, %v1410
      %v1412 = vmul.f32 %v1402, %v1407
      %v1413 = vmul.f32 %v1402, %v1411
      %v1414 = vadd.f32 %v1390, %v1412
      %v1415 = vadd.f32 %v1391, %v1413
      %1416 = vset.pattern.permute.xlu0 9
      %1417 = vperm.xlu0 %1416, %v1237
      %v1418 = vpop.permute.xlu0 %1417
      %v1420 = vlaneseq
      %v1421 = vshrl.u32 %v1420, 7
      %v1422 = vsub.s32 1, %v1421
      %v1423 = vrot.slane %v1398, %v1422
      %v1424 = vlaneseq
      %v1425 = vshrl.u32 %v1424, 7
      %v1426 = vsub.s32 1, %v1425
      %v1427 = vrot.slane %v1399, %v1426
      %v1428 = vmul.f32 %v1418, %v1423
      %v1429 = vmul.f32 %v1418, %v1427
      %v1430 = vadd.f32 %v1414, %v1428
      %v1431 = vadd.f32 %v1415, %v1429
      %1432 = vset.pattern.permute.xlu0 10
      %1433 = vperm.xlu0 %1432, %v1237
      %v1434 = vpop.permute.xlu0 %1433
      %v1436 = vlaneseq
      %v1437 = vshrl.u32 %v1436, 7
      %v1438 = vsub.s32 2, %v1437
      %v1439 = vrot.slane %v1398, %v1438
      %v1440 = vlaneseq
      %v1441 = vshrl.u32 %v1440, 7
      %v1442 = vsub.s32 2, %v1441
      %v1443 = vrot.slane %v1399, %v1442
      %v1444 = vmul.f32 %v1434, %v1439
      %v1445 = vmul.f32 %v1434, %v1443
      %v1446 = vadd.f32 %v1430, %v1444
      %v1447 = vadd.f32 %v1431, %v1445
      %1448 = vset.pattern.permute.xlu0 11
      %1449 = vperm.xlu0 %1448, %v1237
      %v1450 = vpop.permute.xlu0 %1449
      %v1452 = vlaneseq
      %v1453 = vshrl.u32 %v1452, 7
      %v1454 = vsub.s32 3, %v1453
      %v1455 = vrot.slane %v1398, %v1454
      %v1456 = vlaneseq
      %v1457 = vshrl.u32 %v1456, 7
      %v1458 = vsub.s32 3, %v1457
      %v1459 = vrot.slane %v1399, %v1458
      %v1460 = vmul.f32 %v1450, %v1455
      %v1461 = vmul.f32 %v1450, %v1459
      %v1462 = vadd.f32 %v1446, %v1460
      %v1463 = vadd.f32 %v1447, %v1461
      %1464 = vrot.lane.b32.xlu0 %v1236, 1
      %v1465 = vpop.permute.xlu0 %1464
      %1466 = vrot.lane.b32.xlu0 %v1245, 1
      %v1467 = vpop.permute.xlu0 %1466
      %v1468 = vsel %vm716, %v1465, %v1467
      %v1469 = vsel %vm716, %v1467, %v1465
      %v1470 = vmul.f32 %v1469, %v722
      %v1471 = vmul.f32 %v1468, %v726
      %1472 = vset.pattern.permute.xlu0 12
      %1473 = vperm.xlu0 %1472, %v1237
      %v1474 = vpop.permute.xlu0 %1473
      %v1476 = vlaneseq
      %v1477 = vshrl.u32 %v1476, 7
      %v1478 = vsub.s32 0, %v1477
      %v1479 = vrot.slane %v1470, %v1478
      %v1480 = vlaneseq
      %v1481 = vshrl.u32 %v1480, 7
      %v1482 = vsub.s32 0, %v1481
      %v1483 = vrot.slane %v1471, %v1482
      %v1484 = vmul.f32 %v1474, %v1479
      %v1485 = vmul.f32 %v1474, %v1483
      %v1486 = vadd.f32 %v1462, %v1484
      %v1487 = vadd.f32 %v1463, %v1485
      %1488 = vset.pattern.permute.xlu0 13
      %1489 = vperm.xlu0 %1488, %v1237
      %v1490 = vpop.permute.xlu0 %1489
      %v1492 = vlaneseq
      %v1493 = vshrl.u32 %v1492, 7
      %v1494 = vsub.s32 1, %v1493
      %v1495 = vrot.slane %v1470, %v1494
      %v1496 = vlaneseq
      %v1497 = vshrl.u32 %v1496, 7
      %v1498 = vsub.s32 1, %v1497
      %v1499 = vrot.slane %v1471, %v1498
      %v1500 = vmul.f32 %v1490, %v1495
      %v1501 = vmul.f32 %v1490, %v1499
      %v1502 = vadd.f32 %v1486, %v1500
      %v1503 = vadd.f32 %v1487, %v1501
      %1504 = vset.pattern.permute.xlu0 14
      %1505 = vperm.xlu0 %1504, %v1237
      %v1506 = vpop.permute.xlu0 %1505
      %v1508 = vlaneseq
      %v1509 = vshrl.u32 %v1508, 7
      %v1510 = vsub.s32 2, %v1509
      %v1511 = vrot.slane %v1470, %v1510
      %v1512 = vlaneseq
      %v1513 = vshrl.u32 %v1512, 7
      %v1514 = vsub.s32 2, %v1513
      %v1515 = vrot.slane %v1471, %v1514
      %v1516 = vmul.f32 %v1506, %v1511
      %v1517 = vmul.f32 %v1506, %v1515
      %v1518 = vadd.f32 %v1502, %v1516
      %v1519 = vadd.f32 %v1503, %v1517
      %1520 = vset.pattern.permute.xlu0 15
      %1521 = vperm.xlu0 %1520, %v1237
      %v1522 = vpop.permute.xlu0 %1521
      %v1524 = vlaneseq
      %v1525 = vshrl.u32 %v1524, 7
      %v1526 = vsub.s32 3, %v1525
      %v1527 = vrot.slane %v1470, %v1526
      %v1528 = vlaneseq
      %v1529 = vshrl.u32 %v1528, 7
      %v1530 = vsub.s32 3, %v1529
      %v1531 = vrot.slane %v1471, %v1530
      %v1532 = vmul.f32 %v1522, %v1527
      %v1533 = vmul.f32 %v1522, %v1531
      %v1534 = vadd.f32 %v1518, %v1532
      %v1535 = vadd.f32 %v1519, %v1533
      %1536 = vset.pattern.permute.xlu0 16
      %1537 = vperm.xlu0 %1536, %v1237
      %v1538 = vpop.permute.xlu0 %1537
      %v1540 = vlaneseq
      %v1541 = vshrl.u32 %v1540, 7
      %v1542 = vsub.s32 0, %v1541
      %v1543 = vrot.slane %v1236, %v1542
      %v1544 = vlaneseq
      %v1545 = vshrl.u32 %v1544, 7
      %v1546 = vsub.s32 4, %v1545
      %v1547 = vrot.slane %v1236, %v1546
      %v1550 = vlaneseq
      %v1551 = vshrl.u32 %v1550, 7
      %v1552 = vsub.s32 0, %v1551
      %v1553 = vrot.slane %v1543, %v1552
      %v1554 = vlaneseq
      %v1555 = vshrl.u32 %v1554, 7
      %v1556 = vsub.s32 0, %v1555
      %v1557 = vrot.slane %v1547, %v1556
      %v1558 = vmul.f32 %v1538, %v1553
      %v1559 = vmul.f32 %v1538, %v1557
      %v1560 = vadd.f32 %v1534, %v1558
      %v1561 = vadd.f32 %v1535, %v1559
      %1562 = vset.pattern.permute.xlu0 17
      %1563 = vperm.xlu0 %1562, %v1237
      %v1564 = vpop.permute.xlu0 %1563
      %v1566 = vlaneseq
      %v1567 = vshrl.u32 %v1566, 7
      %v1568 = vsub.s32 1, %v1567
      %v1569 = vrot.slane %v1236, %v1568
      %v1570 = vlaneseq
      %v1571 = vshrl.u32 %v1570, 7
      %v1572 = vsub.s32 5, %v1571
      %v1573 = vrot.slane %v1236, %v1572
      %v1576 = vlaneseq
      %v1577 = vshrl.u32 %v1576, 7
      %v1578 = vsub.s32 1, %v1577
      %v1579 = vrot.slane %v1569, %v1578
      %v1580 = vlaneseq
      %v1581 = vshrl.u32 %v1580, 7
      %v1582 = vsub.s32 1, %v1581
      %v1583 = vrot.slane %v1573, %v1582
      %v1584 = vmul.f32 %v1564, %v1579
      %v1585 = vmul.f32 %v1564, %v1583
      %v1586 = vadd.f32 %v1560, %v1584
      %v1587 = vadd.f32 %v1561, %v1585
      %1588 = vset.pattern.permute.xlu0 18
      %1589 = vperm.xlu0 %1588, %v1237
      %v1590 = vpop.permute.xlu0 %1589
      %v1592 = vlaneseq
      %v1593 = vshrl.u32 %v1592, 7
      %v1594 = vsub.s32 2, %v1593
      %v1595 = vrot.slane %v1236, %v1594
      %v1596 = vlaneseq
      %v1597 = vshrl.u32 %v1596, 7
      %v1598 = vsub.s32 6, %v1597
      %v1599 = vrot.slane %v1236, %v1598
      %v1602 = vlaneseq
      %v1603 = vshrl.u32 %v1602, 7
      %v1604 = vsub.s32 2, %v1603
      %v1605 = vrot.slane %v1595, %v1604
      %v1606 = vlaneseq
      %v1607 = vshrl.u32 %v1606, 7
      %v1608 = vsub.s32 2, %v1607
      %v1609 = vrot.slane %v1599, %v1608
      %v1610 = vmul.f32 %v1590, %v1605
      %v1611 = vmul.f32 %v1590, %v1609
      %v1612 = vadd.f32 %v1586, %v1610
      %v1613 = vadd.f32 %v1587, %v1611
      %1614 = vset.pattern.permute.xlu0 19
      %1615 = vperm.xlu0 %1614, %v1237
      %v1616 = vpop.permute.xlu0 %1615
      %v1618 = vlaneseq
      %v1619 = vshrl.u32 %v1618, 7
      %v1620 = vsub.s32 3, %v1619
      %v1621 = vrot.slane %v1236, %v1620
      %v1622 = vlaneseq
      %v1623 = vshrl.u32 %v1622, 7
      %v1624 = vsub.s32 7, %v1623
      %v1625 = vrot.slane %v1236, %v1624
      %v1628 = vlaneseq
      %v1629 = vshrl.u32 %v1628, 7
      %v1630 = vsub.s32 3, %v1629
      %v1631 = vrot.slane %v1621, %v1630
      %v1632 = vlaneseq
      %v1633 = vshrl.u32 %v1632, 7
      %v1634 = vsub.s32 3, %v1633
      %v1635 = vrot.slane %v1625, %v1634
      %v1636 = vmul.f32 %v1616, %v1631
      %v1637 = vmul.f32 %v1616, %v1635
      %v1638 = vadd.f32 %v1612, %v1636
      %v1639 = vadd.f32 %v1613, %v1637
      %1640 = vrot.lane.b32.xlu0 %v1236, 127
      %v1641 = vpop.permute.xlu0 %1640
      %1642 = vrot.lane.b32.xlu0 %v1245, 127
      %v1643 = vpop.permute.xlu0 %1642
      %v1644 = vsel %vm901, %v1641, %v1643
      %v1645 = vsel %vm901, %v1643, %v1641
      %v1646 = vmul.f32 %v1644, %v907
      %v1647 = vmul.f32 %v1645, %v911
      %1648 = vset.pattern.permute.xlu0 20
      %1649 = vperm.xlu0 %1648, %v1237
      %v1650 = vpop.permute.xlu0 %1649
      %v1652 = vlaneseq
      %v1653 = vshrl.u32 %v1652, 7
      %v1654 = vsub.s32 0, %v1653
      %v1655 = vrot.slane %v1646, %v1654
      %v1656 = vlaneseq
      %v1657 = vshrl.u32 %v1656, 7
      %v1658 = vsub.s32 0, %v1657
      %v1659 = vrot.slane %v1647, %v1658
      %v1660 = vmul.f32 %v1650, %v1655
      %v1661 = vmul.f32 %v1650, %v1659
      %v1662 = vadd.f32 %v1638, %v1660
      %v1663 = vadd.f32 %v1639, %v1661
      %1664 = vset.pattern.permute.xlu0 21
      %1665 = vperm.xlu0 %1664, %v1237
      %v1666 = vpop.permute.xlu0 %1665
      %v1668 = vlaneseq
      %v1669 = vshrl.u32 %v1668, 7
      %v1670 = vsub.s32 1, %v1669
      %v1671 = vrot.slane %v1646, %v1670
      %v1672 = vlaneseq
      %v1673 = vshrl.u32 %v1672, 7
      %v1674 = vsub.s32 1, %v1673
      %v1675 = vrot.slane %v1647, %v1674
      %v1676 = vmul.f32 %v1666, %v1671
      %v1677 = vmul.f32 %v1666, %v1675
      %v1678 = vadd.f32 %v1662, %v1676
      %v1679 = vadd.f32 %v1663, %v1677
      %1680 = vset.pattern.permute.xlu0 22
      %1681 = vperm.xlu0 %1680, %v1237
      %v1682 = vpop.permute.xlu0 %1681
      %v1684 = vlaneseq
      %v1685 = vshrl.u32 %v1684, 7
      %v1686 = vsub.s32 2, %v1685
      %v1687 = vrot.slane %v1646, %v1686
      %v1688 = vlaneseq
      %v1689 = vshrl.u32 %v1688, 7
      %v1690 = vsub.s32 2, %v1689
      %v1691 = vrot.slane %v1647, %v1690
      %v1692 = vmul.f32 %v1682, %v1687
      %v1693 = vmul.f32 %v1682, %v1691
      %v1694 = vadd.f32 %v1678, %v1692
      %v1695 = vadd.f32 %v1679, %v1693
      %1696 = vset.pattern.permute.xlu0 23
      %1697 = vperm.xlu0 %1696, %v1237
      %v1698 = vpop.permute.xlu0 %1697
      %v1700 = vlaneseq
      %v1701 = vshrl.u32 %v1700, 7
      %v1702 = vsub.s32 3, %v1701
      %v1703 = vrot.slane %v1646, %v1702
      %v1704 = vlaneseq
      %v1705 = vshrl.u32 %v1704, 7
      %v1706 = vsub.s32 3, %v1705
      %v1707 = vrot.slane %v1647, %v1706
      %v1708 = vmul.f32 %v1698, %v1703
      %v1709 = vmul.f32 %v1698, %v1707
      %v1710 = vadd.f32 %v1694, %v1708
      %v1711 = vadd.f32 %v1695, %v1709
      %1712 = vrot.lane.b32.xlu0 %v1236, 113
      %v1713 = vpop.permute.xlu0 %1712
      %1714 = vrot.lane.b32.xlu0 %v1245, 113
      %v1715 = vpop.permute.xlu0 %1714
      %v1716 = vsel %vm982, %v1713, %v1715
      %v1717 = vsel %vm982, %v1715, %v1713
      %v1718 = vmul.f32 %v1716, %v988
      %v1719 = vmul.f32 %v1717, %v992
      %1720 = vset.pattern.permute.xlu0 24
      %1721 = vperm.xlu0 %1720, %v1237
      %v1722 = vpop.permute.xlu0 %1721
      %v1724 = vlaneseq
      %v1725 = vshrl.u32 %v1724, 7
      %v1726 = vsub.s32 0, %v1725
      %v1727 = vrot.slane %v1718, %v1726
      %v1728 = vlaneseq
      %v1729 = vshrl.u32 %v1728, 7
      %v1730 = vsub.s32 0, %v1729
      %v1731 = vrot.slane %v1719, %v1730
      %v1732 = vmul.f32 %v1722, %v1727
      %v1733 = vmul.f32 %v1722, %v1731
      %v1734 = vadd.f32 %v1710, %v1732
      %v1735 = vadd.f32 %v1711, %v1733
      %1736 = vset.pattern.permute.xlu0 25
      %1737 = vperm.xlu0 %1736, %v1237
      %v1738 = vpop.permute.xlu0 %1737
      %v1740 = vlaneseq
      %v1741 = vshrl.u32 %v1740, 7
      %v1742 = vsub.s32 1, %v1741
      %v1743 = vrot.slane %v1718, %v1742
      %v1744 = vlaneseq
      %v1745 = vshrl.u32 %v1744, 7
      %v1746 = vsub.s32 1, %v1745
      %v1747 = vrot.slane %v1719, %v1746
      %v1748 = vmul.f32 %v1738, %v1743
      %v1749 = vmul.f32 %v1738, %v1747
      %v1750 = vadd.f32 %v1734, %v1748
      %v1751 = vadd.f32 %v1735, %v1749
      %1752 = vset.pattern.permute.xlu0 26
      %1753 = vperm.xlu0 %1752, %v1237
      %v1754 = vpop.permute.xlu0 %1753
      %v1756 = vlaneseq
      %v1757 = vshrl.u32 %v1756, 7
      %v1758 = vsub.s32 2, %v1757
      %v1759 = vrot.slane %v1718, %v1758
      %v1760 = vlaneseq
      %v1761 = vshrl.u32 %v1760, 7
      %v1762 = vsub.s32 2, %v1761
      %v1763 = vrot.slane %v1719, %v1762
      %v1764 = vmul.f32 %v1754, %v1759
      %v1765 = vmul.f32 %v1754, %v1763
      %v1766 = vadd.f32 %v1750, %v1764
      %v1767 = vadd.f32 %v1751, %v1765
      %1768 = vset.pattern.permute.xlu0 27
      %1769 = vperm.xlu0 %1768, %v1237
      %v1770 = vpop.permute.xlu0 %1769
      %v1772 = vlaneseq
      %v1773 = vshrl.u32 %v1772, 7
      %v1774 = vsub.s32 3, %v1773
      %v1775 = vrot.slane %v1718, %v1774
      %v1776 = vlaneseq
      %v1777 = vshrl.u32 %v1776, 7
      %v1778 = vsub.s32 3, %v1777
      %v1779 = vrot.slane %v1719, %v1778
      %v1780 = vmul.f32 %v1770, %v1775
      %v1781 = vmul.f32 %v1770, %v1779
      %v1782 = vadd.f32 %v1766, %v1780
      %v1783 = vadd.f32 %v1767, %v1781
      %1784 = vrot.lane.b32.xlu0 %v1236, 112
      %v1785 = vpop.permute.xlu0 %1784
      %1786 = vrot.lane.b32.xlu0 %v1245, 112
      %v1787 = vpop.permute.xlu0 %1786
      %v1788 = vsel %vm1063, %v1785, %v1787
      %v1789 = vsel %vm1063, %v1787, %v1785
      %v1790 = vmul.f32 %v1788, %v1069
      %v1791 = vmul.f32 %v1789, %v1073
      %1792 = vset.pattern.permute.xlu0 28
      %1793 = vperm.xlu0 %1792, %v1237
      %v1794 = vpop.permute.xlu0 %1793
      %v1796 = vlaneseq
      %v1797 = vshrl.u32 %v1796, 7
      %v1798 = vsub.s32 0, %v1797
      %v1799 = vrot.slane %v1790, %v1798
      %v1800 = vlaneseq
      %v1801 = vshrl.u32 %v1800, 7
      %v1802 = vsub.s32 0, %v1801
      %v1803 = vrot.slane %v1791, %v1802
      %v1804 = vmul.f32 %v1794, %v1799
      %v1805 = vmul.f32 %v1794, %v1803
      %v1806 = vadd.f32 %v1782, %v1804
      %v1807 = vadd.f32 %v1783, %v1805
      %1808 = vset.pattern.permute.xlu0 29
      %1809 = vperm.xlu0 %1808, %v1237
      %v1810 = vpop.permute.xlu0 %1809
      %v1812 = vlaneseq
      %v1813 = vshrl.u32 %v1812, 7
      %v1814 = vsub.s32 1, %v1813
      %v1815 = vrot.slane %v1790, %v1814
      %v1816 = vlaneseq
      %v1817 = vshrl.u32 %v1816, 7
      %v1818 = vsub.s32 1, %v1817
      %v1819 = vrot.slane %v1791, %v1818
      %v1820 = vmul.f32 %v1810, %v1815
      %v1821 = vmul.f32 %v1810, %v1819
      %v1822 = vadd.f32 %v1806, %v1820
      %v1823 = vadd.f32 %v1807, %v1821
      %1824 = vset.pattern.permute.xlu0 30
      %1825 = vperm.xlu0 %1824, %v1237
      %v1826 = vpop.permute.xlu0 %1825
      %v1828 = vlaneseq
      %v1829 = vshrl.u32 %v1828, 7
      %v1830 = vsub.s32 2, %v1829
      %v1831 = vrot.slane %v1790, %v1830
      %v1832 = vlaneseq
      %v1833 = vshrl.u32 %v1832, 7
      %v1834 = vsub.s32 2, %v1833
      %v1835 = vrot.slane %v1791, %v1834
      %v1836 = vmul.f32 %v1826, %v1831
      %v1837 = vmul.f32 %v1826, %v1835
      %v1838 = vadd.f32 %v1822, %v1836
      %v1839 = vadd.f32 %v1823, %v1837
      %1840 = vset.pattern.permute.xlu0 31
      %1841 = vperm.xlu0 %1840, %v1237
      %v1842 = vpop.permute.xlu0 %1841
      %v1844 = vlaneseq
      %v1845 = vshrl.u32 %v1844, 7
      %v1846 = vsub.s32 3, %v1845
      %v1847 = vrot.slane %v1790, %v1846
      %v1848 = vlaneseq
      %v1849 = vshrl.u32 %v1848, 7
      %v1850 = vsub.s32 3, %v1849
      %v1851 = vrot.slane %v1791, %v1850
      %v1852 = vmul.f32 %v1842, %v1847
      %v1853 = vmul.f32 %v1842, %v1851
      %v1854 = vadd.f32 %v1838, %v1852
      %v1855 = vadd.f32 %v1839, %v1853
      %1856 = vrot.lane.b32.xlu0 %v1236, 111
      %v1857 = vpop.permute.xlu0 %1856
      %1858 = vrot.lane.b32.xlu0 %v1245, 111
      %v1859 = vpop.permute.xlu0 %1858
      %v1860 = vsel %vm1144, %v1857, %v1859
      %v1861 = vsel %vm1144, %v1859, %v1857
      %v1862 = vmul.f32 %v1860, %v1150
      %v1863 = vmul.f32 %v1861, %v1154
      %1864 = vset.pattern.permute.xlu0 32
      %1865 = vperm.xlu0 %1864, %v1237
      %v1866 = vpop.permute.xlu0 %1865
      %v1868 = vlaneseq
      %v1869 = vshrl.u32 %v1868, 7
      %v1870 = vsub.s32 0, %v1869
      %v1871 = vrot.slane %v1862, %v1870
      %v1872 = vlaneseq
      %v1873 = vshrl.u32 %v1872, 7
      %v1874 = vsub.s32 0, %v1873
      %v1875 = vrot.slane %v1863, %v1874
      %v1876 = vmul.f32 %v1866, %v1871
      %v1877 = vmul.f32 %v1866, %v1875
      %v1878 = vadd.f32 %v1854, %v1876
      %v1879 = vadd.f32 %v1855, %v1877
      %1880 = vset.pattern.permute.xlu0 33
      %1881 = vperm.xlu0 %1880, %v1237
      %v1882 = vpop.permute.xlu0 %1881
      %v1884 = vlaneseq
      %v1885 = vshrl.u32 %v1884, 7
      %v1886 = vsub.s32 1, %v1885
      %v1887 = vrot.slane %v1862, %v1886
      %v1888 = vlaneseq
      %v1889 = vshrl.u32 %v1888, 7
      %v1890 = vsub.s32 1, %v1889
      %v1891 = vrot.slane %v1863, %v1890
      %v1892 = vmul.f32 %v1882, %v1887
      %v1893 = vmul.f32 %v1882, %v1891
      %v1894 = vadd.f32 %v1878, %v1892
      %v1895 = vadd.f32 %v1879, %v1893
      %1896 = vset.pattern.permute.xlu0 34
      %1897 = vperm.xlu0 %1896, %v1237
      %v1898 = vpop.permute.xlu0 %1897
      %v1900 = vlaneseq
      %v1901 = vshrl.u32 %v1900, 7
      %v1902 = vsub.s32 2, %v1901
      %v1903 = vrot.slane %v1862, %v1902
      %v1904 = vlaneseq
      %v1905 = vshrl.u32 %v1904, 7
      %v1906 = vsub.s32 2, %v1905
      %v1907 = vrot.slane %v1863, %v1906
      %v1908 = vmul.f32 %v1898, %v1903
      %v1909 = vmul.f32 %v1898, %v1907
      %v1910 = vadd.f32 %v1894, %v1908
      %v1911 = vadd.f32 %v1895, %v1909
      %1912 = vset.pattern.permute.xlu0 35
      %1913 = vperm.xlu0 %1912, %v1237
      %v1914 = vpop.permute.xlu0 %1913
      %v1916 = vlaneseq
      %v1917 = vshrl.u32 %v1916, 7
      %v1918 = vsub.s32 3, %v1917
      %v1919 = vrot.slane %v1862, %v1918
      %v1920 = vlaneseq
      %v1921 = vshrl.u32 %v1920, 7
      %v1922 = vsub.s32 3, %v1921
      %v1923 = vrot.slane %v1863, %v1922
      %v1924 = vmul.f32 %v1914, %v1919
      %v1925 = vmul.f32 %v1914, %v1923
      %v1926 = vadd.f32 %v1910, %v1924
      %v1927 = vadd.f32 %v1911, %v1925
      %vm1928 = vcmp.ge.f32.partialorder %v1926, 0.0
      %vm1929 = vcmp.ge.f32.partialorder %v1927, 0.0
      %v1930 = vmul.f32 %v1926, 0.2
      %v1931 = vmul.f32 %v1927, 0.2
      %v1932 = vsel %vm1928, %v1926, %v1930
      %v1933 = vsel %vm1929, %v1927, %v1931
      %v1935 = vcombine.high %v453, %v453
      %v1937 = vadd.f32 %v1932, %v453
      %v1938 = vadd.f32 %v1933, %v1935
      %v1941 = vrot.slane %v1937, 1
      %v1942 = vrot.slane %v1938, 1
      %v1945 = vmax.f32 %v1937, %v1941
      %v1946 = vmax.f32 %v1938, %v1942
      %v1947 = vrot.slane %v1937, 2
      %v1948 = vrot.slane %v1938, 2
      %v1951 = vmax.f32 %v1945, %v1947
      %v1952 = vmax.f32 %v1946, %v1948
      %v1953 = vrot.slane %v1937, 3
      %v1954 = vrot.slane %v1938, 3
      %v1957 = vmax.f32 %v1951, %v1953
      %v1958 = vmax.f32 %v1952, %v1954
      %v1959 = vlaneseq
      %v1960 = vshrl.u32 %v1959, 7
      %v1961 = vsub.s32 0, %v1960
      %v1962 = vrot.slane %v1957, %v1961
      %v1963 = vlaneseq
      %v1964 = vshrl.u32 %v1963, 7
      %v1965 = vsub.s32 0, %v1964
      %v1966 = vrot.slane %v1958, %v1965
      %v1967 = vsub.f32 %v1937, %v1962
      %v1968 = vsub.f32 %v1938, %v1966
      %v1969 = vmul.f32 %v1967, 1.442695
      %v1970 = vpow.pop %v1969
      %v1971 = vmul.f32 %v1968, 1.442695
      %v1972 = vpow.pop %v1971
      %v1975 = vrot.slane %v1970, 1
      %v1976 = vrot.slane %v1972, 1
      %v1979 = vadd.f32 %v1970, %v1975
      %v1980 = vadd.f32 %v1972, %v1976
      %v1981 = vrot.slane %v1970, 2
      %v1982 = vrot.slane %v1972, 2
      %v1985 = vadd.f32 %v1979, %v1981
      %v1986 = vadd.f32 %v1980, %v1982
      %v1987 = vrot.slane %v1970, 3
      %v1988 = vrot.slane %v1972, 3
      %v1991 = vadd.f32 %v1985, %v1987
      %v1992 = vadd.f32 %v1986, %v1988
      %v1993 = vrcp.pop %v1991
      %v1994 = vrcp.pop %v1992
      %v1995 = vlaneseq
      %v1996 = vshrl.u32 %v1995, 7
      %v1997 = vsub.s32 0, %v1996
      %v1998 = vrot.slane %v1993, %v1997
      %v1999 = vlaneseq
      %v2000 = vshrl.u32 %v1999, 7
      %v2001 = vsub.s32 0, %v2000
      %v2002 = vrot.slane %v1994, %v2001
      %v2003 = vmul.f32 %v1970, %v1998
      %v2004 = vmul.f32 %v1972, %v2002
      %v2006 = vcombine.high %v454, %v454
      %v2008 = vmul.f32 %v2003, %v454
      %v2009 = vmul.f32 %v2004, %v2006
      %v2010 = vld [vmem:[%s9] sm:$0xf]
      %v2011 = vld [vmem:[%s10] sm:$0xf]
      %2013 = vset.pattern.permute.xlu0 0
      %2014 = vperm.xlu0 %2013, %v2011
      %v2015 = vpop.permute.xlu0 %2014
      %2017 = vrot.lane.b32.xlu0 %v2008, 17
      %v2018 = vpop.permute.xlu0 %2017
      %2019 = vrot.lane.b32.xlu0 %v2009, 17
      %v2020 = vpop.permute.xlu0 %2019
      %v2021 = vsel %vm472, %v2018, %v2020
      %v2022 = vsel %vm472, %v2020, %v2018
      %v2023 = vmul.f32 %v2022, %v478
      %v2024 = vmul.f32 %v2021, %v482
      %2026 = vset.pattern.permute.xlu0 0
      %2027 = vperm.xlu0 %2026, %v2010
      %v2028 = vpop.permute.xlu0 %2027
      %v2030 = vlaneseq
      %v2031 = vshrl.u32 %v2030, 7
      %v2032 = vsub.s32 0, %v2031
      %v2033 = vrot.slane %v2023, %v2032
      %v2034 = vlaneseq
      %v2035 = vshrl.u32 %v2034, 7
      %v2036 = vsub.s32 0, %v2035
      %v2037 = vrot.slane %v2024, %v2036
      %v2038 = vmul.f32 %v2028, %v2033
      %v2039 = vmul.f32 %v2028, %v2037
      %v2040 = vadd.f32 %v2015, %v2038
      %v2041 = vadd.f32 %v2015, %v2039
      %2042 = vset.pattern.permute.xlu0 1
      %2043 = vperm.xlu0 %2042, %v2010
      %v2044 = vpop.permute.xlu0 %2043
      %v2046 = vlaneseq
      %v2047 = vshrl.u32 %v2046, 7
      %v2048 = vsub.s32 1, %v2047
      %v2049 = vrot.slane %v2023, %v2048
      %v2050 = vlaneseq
      %v2051 = vshrl.u32 %v2050, 7
      %v2052 = vsub.s32 1, %v2051
      %v2053 = vrot.slane %v2024, %v2052
      %v2054 = vmul.f32 %v2044, %v2049
      %v2055 = vmul.f32 %v2044, %v2053
      %v2056 = vadd.f32 %v2040, %v2054
      %v2057 = vadd.f32 %v2041, %v2055
      %2058 = vset.pattern.permute.xlu0 2
      %2059 = vperm.xlu0 %2058, %v2010
      %v2060 = vpop.permute.xlu0 %2059
      %v2062 = vlaneseq
      %v2063 = vshrl.u32 %v2062, 7
      %v2064 = vsub.s32 2, %v2063
      %v2065 = vrot.slane %v2023, %v2064
      %v2066 = vlaneseq
      %v2067 = vshrl.u32 %v2066, 7
      %v2068 = vsub.s32 2, %v2067
      %v2069 = vrot.slane %v2024, %v2068
      %v2070 = vmul.f32 %v2060, %v2065
      %v2071 = vmul.f32 %v2060, %v2069
      %v2072 = vadd.f32 %v2056, %v2070
      %v2073 = vadd.f32 %v2057, %v2071
      %2074 = vset.pattern.permute.xlu0 3
      %2075 = vperm.xlu0 %2074, %v2010
      %v2076 = vpop.permute.xlu0 %2075
      %v2078 = vlaneseq
      %v2079 = vshrl.u32 %v2078, 7
      %v2080 = vsub.s32 3, %v2079
      %v2081 = vrot.slane %v2023, %v2080
      %v2082 = vlaneseq
      %v2083 = vshrl.u32 %v2082, 7
      %v2084 = vsub.s32 3, %v2083
      %v2085 = vrot.slane %v2024, %v2084
      %v2086 = vmul.f32 %v2076, %v2081
      %v2087 = vmul.f32 %v2076, %v2085
      %v2088 = vadd.f32 %v2072, %v2086
      %v2089 = vadd.f32 %v2073, %v2087
      %2090 = vrot.lane.b32.xlu0 %v2008, 16
      %v2091 = vpop.permute.xlu0 %2090
      %2092 = vrot.lane.b32.xlu0 %v2009, 16
      %v2093 = vpop.permute.xlu0 %2092
      %v2094 = vsel %vm554, %v2091, %v2093
      %v2095 = vsel %vm554, %v2093, %v2091
      %v2096 = vmul.f32 %v2095, %v560
      %v2097 = vmul.f32 %v2094, %v564
      %2098 = vset.pattern.permute.xlu0 4
      %2099 = vperm.xlu0 %2098, %v2010
      %v2100 = vpop.permute.xlu0 %2099
      %v2102 = vlaneseq
      %v2103 = vshrl.u32 %v2102, 7
      %v2104 = vsub.s32 0, %v2103
      %v2105 = vrot.slane %v2096, %v2104
      %v2106 = vlaneseq
      %v2107 = vshrl.u32 %v2106, 7
      %v2108 = vsub.s32 0, %v2107
      %v2109 = vrot.slane %v2097, %v2108
      %v2110 = vmul.f32 %v2100, %v2105
      %v2111 = vmul.f32 %v2100, %v2109
      %v2112 = vadd.f32 %v2088, %v2110
      %v2113 = vadd.f32 %v2089, %v2111
      %2114 = vset.pattern.permute.xlu0 5
      %2115 = vperm.xlu0 %2114, %v2010
      %v2116 = vpop.permute.xlu0 %2115
      %v2118 = vlaneseq
      %v2119 = vshrl.u32 %v2118, 7
      %v2120 = vsub.s32 1, %v2119
      %v2121 = vrot.slane %v2096, %v2120
      %v2122 = vlaneseq
      %v2123 = vshrl.u32 %v2122, 7
      %v2124 = vsub.s32 1, %v2123
      %v2125 = vrot.slane %v2097, %v2124
      %v2126 = vmul.f32 %v2116, %v2121
      %v2127 = vmul.f32 %v2116, %v2125
      %v2128 = vadd.f32 %v2112, %v2126
      %v2129 = vadd.f32 %v2113, %v2127
      %2130 = vset.pattern.permute.xlu0 6
      %2131 = vperm.xlu0 %2130, %v2010
      %v2132 = vpop.permute.xlu0 %2131
      %v2134 = vlaneseq
      %v2135 = vshrl.u32 %v2134, 7
      %v2136 = vsub.s32 2, %v2135
      %v2137 = vrot.slane %v2096, %v2136
      %v2138 = vlaneseq
      %v2139 = vshrl.u32 %v2138, 7
      %v2140 = vsub.s32 2, %v2139
      %v2141 = vrot.slane %v2097, %v2140
      %v2142 = vmul.f32 %v2132, %v2137
      %v2143 = vmul.f32 %v2132, %v2141
      %v2144 = vadd.f32 %v2128, %v2142
      %v2145 = vadd.f32 %v2129, %v2143
      %2146 = vset.pattern.permute.xlu0 7
      %2147 = vperm.xlu0 %2146, %v2010
      %v2148 = vpop.permute.xlu0 %2147
      %v2150 = vlaneseq
      %v2151 = vshrl.u32 %v2150, 7
      %v2152 = vsub.s32 3, %v2151
      %v2153 = vrot.slane %v2096, %v2152
      %v2154 = vlaneseq
      %v2155 = vshrl.u32 %v2154, 7
      %v2156 = vsub.s32 3, %v2155
      %v2157 = vrot.slane %v2097, %v2156
      %v2158 = vmul.f32 %v2148, %v2153
      %v2159 = vmul.f32 %v2148, %v2157
      %v2160 = vadd.f32 %v2144, %v2158
      %v2161 = vadd.f32 %v2145, %v2159
      %2162 = vrot.lane.b32.xlu0 %v2008, 15
      %v2163 = vpop.permute.xlu0 %2162
      %2164 = vrot.lane.b32.xlu0 %v2009, 15
      %v2165 = vpop.permute.xlu0 %2164
      %v2166 = vsel %vm635, %v2163, %v2165
      %v2167 = vsel %vm635, %v2165, %v2163
      %v2168 = vmul.f32 %v2167, %v641
      %v2169 = vmul.f32 %v2166, %v645
      %2170 = vset.pattern.permute.xlu0 8
      %2171 = vperm.xlu0 %2170, %v2010
      %v2172 = vpop.permute.xlu0 %2171
      %v2174 = vlaneseq
      %v2175 = vshrl.u32 %v2174, 7
      %v2176 = vsub.s32 0, %v2175
      %v2177 = vrot.slane %v2168, %v2176
      %v2178 = vlaneseq
      %v2179 = vshrl.u32 %v2178, 7
      %v2180 = vsub.s32 0, %v2179
      %v2181 = vrot.slane %v2169, %v2180
      %v2182 = vmul.f32 %v2172, %v2177
      %v2183 = vmul.f32 %v2172, %v2181
      %v2184 = vadd.f32 %v2160, %v2182
      %v2185 = vadd.f32 %v2161, %v2183
      %2186 = vset.pattern.permute.xlu0 9
      %2187 = vperm.xlu0 %2186, %v2010
      %v2188 = vpop.permute.xlu0 %2187
      %v2190 = vlaneseq
      %v2191 = vshrl.u32 %v2190, 7
      %v2192 = vsub.s32 1, %v2191
      %v2193 = vrot.slane %v2168, %v2192
      %v2194 = vlaneseq
      %v2195 = vshrl.u32 %v2194, 7
      %v2196 = vsub.s32 1, %v2195
      %v2197 = vrot.slane %v2169, %v2196
      %v2198 = vmul.f32 %v2188, %v2193
      %v2199 = vmul.f32 %v2188, %v2197
      %v2200 = vadd.f32 %v2184, %v2198
      %v2201 = vadd.f32 %v2185, %v2199
      %2202 = vset.pattern.permute.xlu0 10
      %2203 = vperm.xlu0 %2202, %v2010
      %v2204 = vpop.permute.xlu0 %2203
      %v2206 = vlaneseq
      %v2207 = vshrl.u32 %v2206, 7
      %v2208 = vsub.s32 2, %v2207
      %v2209 = vrot.slane %v2168, %v2208
      %v2210 = vlaneseq
      %v2211 = vshrl.u32 %v2210, 7
      %v2212 = vsub.s32 2, %v2211
      %v2213 = vrot.slane %v2169, %v2212
      %v2214 = vmul.f32 %v2204, %v2209
      %v2215 = vmul.f32 %v2204, %v2213
      %v2216 = vadd.f32 %v2200, %v2214
      %v2217 = vadd.f32 %v2201, %v2215
      %2218 = vset.pattern.permute.xlu0 11
      %2219 = vperm.xlu0 %2218, %v2010
      %v2220 = vpop.permute.xlu0 %2219
      %v2222 = vlaneseq
      %v2223 = vshrl.u32 %v2222, 7
      %v2224 = vsub.s32 3, %v2223
      %v2225 = vrot.slane %v2168, %v2224
      %v2226 = vlaneseq
      %v2227 = vshrl.u32 %v2226, 7
      %v2228 = vsub.s32 3, %v2227
      %v2229 = vrot.slane %v2169, %v2228
      %v2230 = vmul.f32 %v2220, %v2225
      %v2231 = vmul.f32 %v2220, %v2229
      %v2232 = vadd.f32 %v2216, %v2230
      %v2233 = vadd.f32 %v2217, %v2231
      %2234 = vrot.lane.b32.xlu0 %v2008, 1
      %v2235 = vpop.permute.xlu0 %2234
      %2236 = vrot.lane.b32.xlu0 %v2009, 1
      %v2237 = vpop.permute.xlu0 %2236
      %v2238 = vsel %vm716, %v2235, %v2237
      %v2239 = vsel %vm716, %v2237, %v2235
      %v2240 = vmul.f32 %v2239, %v722
      %v2241 = vmul.f32 %v2238, %v726
      %2242 = vset.pattern.permute.xlu0 12
      %2243 = vperm.xlu0 %2242, %v2010
      %v2244 = vpop.permute.xlu0 %2243
      %v2246 = vlaneseq
      %v2247 = vshrl.u32 %v2246, 7
      %v2248 = vsub.s32 0, %v2247
      %v2249 = vrot.slane %v2240, %v2248
      %v2250 = vlaneseq
      %v2251 = vshrl.u32 %v2250, 7
      %v2252 = vsub.s32 0, %v2251
      %v2253 = vrot.slane %v2241, %v2252
      %v2254 = vmul.f32 %v2244, %v2249
      %v2255 = vmul.f32 %v2244, %v2253
      %v2256 = vadd.f32 %v2232, %v2254
      %v2257 = vadd.f32 %v2233, %v2255
      %2258 = vset.pattern.permute.xlu0 13
      %2259 = vperm.xlu0 %2258, %v2010
      %v2260 = vpop.permute.xlu0 %2259
      %v2262 = vlaneseq
      %v2263 = vshrl.u32 %v2262, 7
      %v2264 = vsub.s32 1, %v2263
      %v2265 = vrot.slane %v2240, %v2264
      %v2266 = vlaneseq
      %v2267 = vshrl.u32 %v2266, 7
      %v2268 = vsub.s32 1, %v2267
      %v2269 = vrot.slane %v2241, %v2268
      %v2270 = vmul.f32 %v2260, %v2265
      %v2271 = vmul.f32 %v2260, %v2269
      %v2272 = vadd.f32 %v2256, %v2270
      %v2273 = vadd.f32 %v2257, %v2271
      %2274 = vset.pattern.permute.xlu0 14
      %2275 = vperm.xlu0 %2274, %v2010
      %v2276 = vpop.permute.xlu0 %2275
      %v2278 = vlaneseq
      %v2279 = vshrl.u32 %v2278, 7
      %v2280 = vsub.s32 2, %v2279
      %v2281 = vrot.slane %v2240, %v2280
      %v2282 = vlaneseq
      %v2283 = vshrl.u32 %v2282, 7
      %v2284 = vsub.s32 2, %v2283
      %v2285 = vrot.slane %v2241, %v2284
      %v2286 = vmul.f32 %v2276, %v2281
      %v2287 = vmul.f32 %v2276, %v2285
      %v2288 = vadd.f32 %v2272, %v2286
      %v2289 = vadd.f32 %v2273, %v2287
      %2290 = vset.pattern.permute.xlu0 15
      %2291 = vperm.xlu0 %2290, %v2010
      %v2292 = vpop.permute.xlu0 %2291
      %v2294 = vlaneseq
      %v2295 = vshrl.u32 %v2294, 7
      %v2296 = vsub.s32 3, %v2295
      %v2297 = vrot.slane %v2240, %v2296
      %v2298 = vlaneseq
      %v2299 = vshrl.u32 %v2298, 7
      %v2300 = vsub.s32 3, %v2299
      %v2301 = vrot.slane %v2241, %v2300
      %v2302 = vmul.f32 %v2292, %v2297
      %v2303 = vmul.f32 %v2292, %v2301
      %v2304 = vadd.f32 %v2288, %v2302
      %v2305 = vadd.f32 %v2289, %v2303
      %2306 = vset.pattern.permute.xlu0 16
      %2307 = vperm.xlu0 %2306, %v2010
      %v2308 = vpop.permute.xlu0 %2307
      %v2310 = vlaneseq
      %v2311 = vshrl.u32 %v2310, 7
      %v2312 = vsub.s32 0, %v2311
      %v2313 = vrot.slane %v2008, %v2312
      %v2314 = vlaneseq
      %v2315 = vshrl.u32 %v2314, 7
      %v2316 = vsub.s32 0, %v2315
      %v2317 = vrot.slane %v2009, %v2316
      %v2318 = vmul.f32 %v2308, %v2313
      %v2319 = vmul.f32 %v2308, %v2317
      %v2320 = vadd.f32 %v2304, %v2318
      %v2321 = vadd.f32 %v2305, %v2319
      %2322 = vset.pattern.permute.xlu0 17
      %2323 = vperm.xlu0 %2322, %v2010
      %v2324 = vpop.permute.xlu0 %2323
      %v2326 = vlaneseq
      %v2327 = vshrl.u32 %v2326, 7
      %v2328 = vsub.s32 1, %v2327
      %v2329 = vrot.slane %v2008, %v2328
      %v2330 = vlaneseq
      %v2331 = vshrl.u32 %v2330, 7
      %v2332 = vsub.s32 1, %v2331
      %v2333 = vrot.slane %v2009, %v2332
      %v2334 = vmul.f32 %v2324, %v2329
      %v2335 = vmul.f32 %v2324, %v2333
      %v2336 = vadd.f32 %v2320, %v2334
      %v2337 = vadd.f32 %v2321, %v2335
      %2338 = vset.pattern.permute.xlu0 18
      %2339 = vperm.xlu0 %2338, %v2010
      %v2340 = vpop.permute.xlu0 %2339
      %v2342 = vlaneseq
      %v2343 = vshrl.u32 %v2342, 7
      %v2344 = vsub.s32 2, %v2343
      %v2345 = vrot.slane %v2008, %v2344
      %v2346 = vlaneseq
      %v2347 = vshrl.u32 %v2346, 7
      %v2348 = vsub.s32 2, %v2347
      %v2349 = vrot.slane %v2009, %v2348
      %v2350 = vmul.f32 %v2340, %v2345
      %v2351 = vmul.f32 %v2340, %v2349
      %v2352 = vadd.f32 %v2336, %v2350
      %v2353 = vadd.f32 %v2337, %v2351
      %2354 = vset.pattern.permute.xlu0 19
      %2355 = vperm.xlu0 %2354, %v2010
      %v2356 = vpop.permute.xlu0 %2355
      %v2358 = vlaneseq
      %v2359 = vshrl.u32 %v2358, 7
      %v2360 = vsub.s32 3, %v2359
      %v2361 = vrot.slane %v2008, %v2360
      %v2362 = vlaneseq
      %v2363 = vshrl.u32 %v2362, 7
      %v2364 = vsub.s32 3, %v2363
      %v2365 = vrot.slane %v2009, %v2364
      %v2366 = vmul.f32 %v2356, %v2361
      %v2367 = vmul.f32 %v2356, %v2365
      %v2368 = vadd.f32 %v2352, %v2366
      %v2369 = vadd.f32 %v2353, %v2367
      %2370 = vrot.lane.b32.xlu0 %v2008, 127
      %v2371 = vpop.permute.xlu0 %2370
      %2372 = vrot.lane.b32.xlu0 %v2009, 127
      %v2373 = vpop.permute.xlu0 %2372
      %v2374 = vsel %vm901, %v2371, %v2373
      %v2375 = vsel %vm901, %v2373, %v2371
      %v2376 = vmul.f32 %v2374, %v907
      %v2377 = vmul.f32 %v2375, %v911
      %2378 = vset.pattern.permute.xlu0 20
      %2379 = vperm.xlu0 %2378, %v2010
      %v2380 = vpop.permute.xlu0 %2379
      %v2382 = vlaneseq
      %v2383 = vshrl.u32 %v2382, 7
      %v2384 = vsub.s32 0, %v2383
      %v2385 = vrot.slane %v2376, %v2384
      %v2386 = vlaneseq
      %v2387 = vshrl.u32 %v2386, 7
      %v2388 = vsub.s32 0, %v2387
      %v2389 = vrot.slane %v2377, %v2388
      %v2390 = vmul.f32 %v2380, %v2385
      %v2391 = vmul.f32 %v2380, %v2389
      %v2392 = vadd.f32 %v2368, %v2390
      %v2393 = vadd.f32 %v2369, %v2391
      %2394 = vset.pattern.permute.xlu0 21
      %2395 = vperm.xlu0 %2394, %v2010
      %v2396 = vpop.permute.xlu0 %2395
      %v2398 = vlaneseq
      %v2399 = vshrl.u32 %v2398, 7
      %v2400 = vsub.s32 1, %v2399
      %v2401 = vrot.slane %v2376, %v2400
      %v2402 = vlaneseq
      %v2403 = vshrl.u32 %v2402, 7
      %v2404 = vsub.s32 1, %v2403
      %v2405 = vrot.slane %v2377, %v2404
      %v2406 = vmul.f32 %v2396, %v2401
      %v2407 = vmul.f32 %v2396, %v2405
      %v2408 = vadd.f32 %v2392, %v2406
      %v2409 = vadd.f32 %v2393, %v2407
      %2410 = vset.pattern.permute.xlu0 22
      %2411 = vperm.xlu0 %2410, %v2010
      %v2412 = vpop.permute.xlu0 %2411
      %v2414 = vlaneseq
      %v2415 = vshrl.u32 %v2414, 7
      %v2416 = vsub.s32 2, %v2415
      %v2417 = vrot.slane %v2376, %v2416
      %v2418 = vlaneseq
      %v2419 = vshrl.u32 %v2418, 7
      %v2420 = vsub.s32 2, %v2419
      %v2421 = vrot.slane %v2377, %v2420
      %v2422 = vmul.f32 %v2412, %v2417
      %v2423 = vmul.f32 %v2412, %v2421
      %v2424 = vadd.f32 %v2408, %v2422
      %v2425 = vadd.f32 %v2409, %v2423
      %2426 = vset.pattern.permute.xlu0 23
      %2427 = vperm.xlu0 %2426, %v2010
      %v2428 = vpop.permute.xlu0 %2427
      %v2430 = vlaneseq
      %v2431 = vshrl.u32 %v2430, 7
      %v2432 = vsub.s32 3, %v2431
      %v2433 = vrot.slane %v2376, %v2432
      %v2434 = vlaneseq
      %v2435 = vshrl.u32 %v2434, 7
      %v2436 = vsub.s32 3, %v2435
      %v2437 = vrot.slane %v2377, %v2436
      %v2438 = vmul.f32 %v2428, %v2433
      %v2439 = vmul.f32 %v2428, %v2437
      %v2440 = vadd.f32 %v2424, %v2438
      %v2441 = vadd.f32 %v2425, %v2439
      %2442 = vrot.lane.b32.xlu0 %v2008, 113
      %v2443 = vpop.permute.xlu0 %2442
      %2444 = vrot.lane.b32.xlu0 %v2009, 113
      %v2445 = vpop.permute.xlu0 %2444
      %v2446 = vsel %vm982, %v2443, %v2445
      %v2447 = vsel %vm982, %v2445, %v2443
      %v2448 = vmul.f32 %v2446, %v988
      %v2449 = vmul.f32 %v2447, %v992
      %2450 = vset.pattern.permute.xlu0 24
      %2451 = vperm.xlu0 %2450, %v2010
      %v2452 = vpop.permute.xlu0 %2451
      %v2454 = vlaneseq
      %v2455 = vshrl.u32 %v2454, 7
      %v2456 = vsub.s32 0, %v2455
      %v2457 = vrot.slane %v2448, %v2456
      %v2458 = vlaneseq
      %v2459 = vshrl.u32 %v2458, 7
      %v2460 = vsub.s32 0, %v2459
      %v2461 = vrot.slane %v2449, %v2460
      %v2462 = vmul.f32 %v2452, %v2457
      %v2463 = vmul.f32 %v2452, %v2461
      %v2464 = vadd.f32 %v2440, %v2462
      %v2465 = vadd.f32 %v2441, %v2463
      %2466 = vset.pattern.permute.xlu0 25
      %2467 = vperm.xlu0 %2466, %v2010
      %v2468 = vpop.permute.xlu0 %2467
      %v2470 = vlaneseq
      %v2471 = vshrl.u32 %v2470, 7
      %v2472 = vsub.s32 1, %v2471
      %v2473 = vrot.slane %v2448, %v2472
      %v2474 = vlaneseq
      %v2475 = vshrl.u32 %v2474, 7
      %v2476 = vsub.s32 1, %v2475
      %v2477 = vrot.slane %v2449, %v2476
      %v2478 = vmul.f32 %v2468, %v2473
      %v2479 = vmul.f32 %v2468, %v2477
      %v2480 = vadd.f32 %v2464, %v2478
      %v2481 = vadd.f32 %v2465, %v2479
      %2482 = vset.pattern.permute.xlu0 26
      %2483 = vperm.xlu0 %2482, %v2010
      %v2484 = vpop.permute.xlu0 %2483
      %v2486 = vlaneseq
      %v2487 = vshrl.u32 %v2486, 7
      %v2488 = vsub.s32 2, %v2487
      %v2489 = vrot.slane %v2448, %v2488
      %v2490 = vlaneseq
      %v2491 = vshrl.u32 %v2490, 7
      %v2492 = vsub.s32 2, %v2491
      %v2493 = vrot.slane %v2449, %v2492
      %v2494 = vmul.f32 %v2484, %v2489
      %v2495 = vmul.f32 %v2484, %v2493
      %v2496 = vadd.f32 %v2480, %v2494
      %v2497 = vadd.f32 %v2481, %v2495
      %2498 = vset.pattern.permute.xlu0 27
      %2499 = vperm.xlu0 %2498, %v2010
      %v2500 = vpop.permute.xlu0 %2499
      %v2502 = vlaneseq
      %v2503 = vshrl.u32 %v2502, 7
      %v2504 = vsub.s32 3, %v2503
      %v2505 = vrot.slane %v2448, %v2504
      %v2506 = vlaneseq
      %v2507 = vshrl.u32 %v2506, 7
      %v2508 = vsub.s32 3, %v2507
      %v2509 = vrot.slane %v2449, %v2508
      %v2510 = vmul.f32 %v2500, %v2505
      %v2511 = vmul.f32 %v2500, %v2509
      %v2512 = vadd.f32 %v2496, %v2510
      %v2513 = vadd.f32 %v2497, %v2511
      %2514 = vrot.lane.b32.xlu0 %v2008, 112
      %v2515 = vpop.permute.xlu0 %2514
      %2516 = vrot.lane.b32.xlu0 %v2009, 112
      %v2517 = vpop.permute.xlu0 %2516
      %v2518 = vsel %vm1063, %v2515, %v2517
      %v2519 = vsel %vm1063, %v2517, %v2515
      %v2520 = vmul.f32 %v2518, %v1069
      %v2521 = vmul.f32 %v2519, %v1073
      %2522 = vset.pattern.permute.xlu0 28
      %2523 = vperm.xlu0 %2522, %v2010
      %v2524 = vpop.permute.xlu0 %2523
      %v2526 = vlaneseq
      %v2527 = vshrl.u32 %v2526, 7
      %v2528 = vsub.s32 0, %v2527
      %v2529 = vrot.slane %v2520, %v2528
      %v2530 = vlaneseq
      %v2531 = vshrl.u32 %v2530, 7
      %v2532 = vsub.s32 0, %v2531
      %v2533 = vrot.slane %v2521, %v2532
      %v2534 = vmul.f32 %v2524, %v2529
      %v2535 = vmul.f32 %v2524, %v2533
      %v2536 = vadd.f32 %v2512, %v2534
      %v2537 = vadd.f32 %v2513, %v2535
      %2538 = vset.pattern.permute.xlu0 29
      %2539 = vperm.xlu0 %2538, %v2010
      %v2540 = vpop.permute.xlu0 %2539
      %v2542 = vlaneseq
      %v2543 = vshrl.u32 %v2542, 7
      %v2544 = vsub.s32 1, %v2543
      %v2545 = vrot.slane %v2520, %v2544
      %v2546 = vlaneseq
      %v2547 = vshrl.u32 %v2546, 7
      %v2548 = vsub.s32 1, %v2547
      %v2549 = vrot.slane %v2521, %v2548
      %v2550 = vmul.f32 %v2540, %v2545
      %v2551 = vmul.f32 %v2540, %v2549
      %v2552 = vadd.f32 %v2536, %v2550
      %v2553 = vadd.f32 %v2537, %v2551
      %2554 = vset.pattern.permute.xlu0 30
      %2555 = vperm.xlu0 %2554, %v2010
      %v2556 = vpop.permute.xlu0 %2555
      %v2558 = vlaneseq
      %v2559 = vshrl.u32 %v2558, 7
      %v2560 = vsub.s32 2, %v2559
      %v2561 = vrot.slane %v2520, %v2560
      %v2562 = vlaneseq
      %v2563 = vshrl.u32 %v2562, 7
      %v2564 = vsub.s32 2, %v2563
      %v2565 = vrot.slane %v2521, %v2564
      %v2566 = vmul.f32 %v2556, %v2561
      %v2567 = vmul.f32 %v2556, %v2565
      %v2568 = vadd.f32 %v2552, %v2566
      %v2569 = vadd.f32 %v2553, %v2567
      %2570 = vset.pattern.permute.xlu0 31
      %2571 = vperm.xlu0 %2570, %v2010
      %v2572 = vpop.permute.xlu0 %2571
      %v2574 = vlaneseq
      %v2575 = vshrl.u32 %v2574, 7
      %v2576 = vsub.s32 3, %v2575
      %v2577 = vrot.slane %v2520, %v2576
      %v2578 = vlaneseq
      %v2579 = vshrl.u32 %v2578, 7
      %v2580 = vsub.s32 3, %v2579
      %v2581 = vrot.slane %v2521, %v2580
      %v2582 = vmul.f32 %v2572, %v2577
      %v2583 = vmul.f32 %v2572, %v2581
      %v2584 = vadd.f32 %v2568, %v2582
      %v2585 = vadd.f32 %v2569, %v2583
      %2586 = vrot.lane.b32.xlu0 %v2008, 111
      %v2587 = vpop.permute.xlu0 %2586
      %2588 = vrot.lane.b32.xlu0 %v2009, 111
      %v2589 = vpop.permute.xlu0 %2588
      %v2590 = vsel %vm1144, %v2587, %v2589
      %v2591 = vsel %vm1144, %v2589, %v2587
      %v2592 = vmul.f32 %v2590, %v1150
      %v2593 = vmul.f32 %v2591, %v1154
      %2594 = vset.pattern.permute.xlu0 32
      %2595 = vperm.xlu0 %2594, %v2010
      %v2596 = vpop.permute.xlu0 %2595
      %v2598 = vlaneseq
      %v2599 = vshrl.u32 %v2598, 7
      %v2600 = vsub.s32 0, %v2599
      %v2601 = vrot.slane %v2592, %v2600
      %v2602 = vlaneseq
      %v2603 = vshrl.u32 %v2602, 7
      %v2604 = vsub.s32 0, %v2603
      %v2605 = vrot.slane %v2593, %v2604
      %v2606 = vmul.f32 %v2596, %v2601
      %v2607 = vmul.f32 %v2596, %v2605
      %v2608 = vadd.f32 %v2584, %v2606
      %v2609 = vadd.f32 %v2585, %v2607
      %2610 = vset.pattern.permute.xlu0 33
      %2611 = vperm.xlu0 %2610, %v2010
      %v2612 = vpop.permute.xlu0 %2611
      %v2614 = vlaneseq
      %v2615 = vshrl.u32 %v2614, 7
      %v2616 = vsub.s32 1, %v2615
      %v2617 = vrot.slane %v2592, %v2616
      %v2618 = vlaneseq
      %v2619 = vshrl.u32 %v2618, 7
      %v2620 = vsub.s32 1, %v2619
      %v2621 = vrot.slane %v2593, %v2620
      %v2622 = vmul.f32 %v2612, %v2617
      %v2623 = vmul.f32 %v2612, %v2621
      %v2624 = vadd.f32 %v2608, %v2622
      %v2625 = vadd.f32 %v2609, %v2623
      %2626 = vset.pattern.permute.xlu0 34
      %2627 = vperm.xlu0 %2626, %v2010
      %v2628 = vpop.permute.xlu0 %2627
      %v2630 = vlaneseq
      %v2631 = vshrl.u32 %v2630, 7
      %v2632 = vsub.s32 2, %v2631
      %v2633 = vrot.slane %v2592, %v2632
      %v2634 = vlaneseq
      %v2635 = vshrl.u32 %v2634, 7
      %v2636 = vsub.s32 2, %v2635
      %v2637 = vrot.slane %v2593, %v2636
      %v2638 = vmul.f32 %v2628, %v2633
      %v2639 = vmul.f32 %v2628, %v2637
      %v2640 = vadd.f32 %v2624, %v2638
      %v2641 = vadd.f32 %v2625, %v2639
      %2642 = vset.pattern.permute.xlu0 35
      %2643 = vperm.xlu0 %2642, %v2010
      %v2644 = vpop.permute.xlu0 %2643
      %v2646 = vlaneseq
      %v2647 = vshrl.u32 %v2646, 7
      %v2648 = vsub.s32 3, %v2647
      %v2649 = vrot.slane %v2592, %v2648
      %v2650 = vlaneseq
      %v2651 = vshrl.u32 %v2650, 7
      %v2652 = vsub.s32 3, %v2651
      %v2653 = vrot.slane %v2593, %v2652
      %v2654 = vmul.f32 %v2644, %v2649
      %v2655 = vmul.f32 %v2644, %v2653
      %v2656 = vadd.f32 %v2640, %v2654
      %v2657 = vadd.f32 %v2641, %v2655
      %vm2658 = vcmp.ge.f32.partialorder %v2656, 0.0
      %vm2659 = vcmp.ge.f32.partialorder %v2657, 0.0
      %v2660 = vmul.f32 %v2656, 0.2
      %v2661 = vmul.f32 %v2657, 0.2
      %v2662 = vsel %vm2658, %v2656, %v2660
      %v2663 = vsel %vm2659, %v2657, %v2661
      %v2664 = vadd.f32 %v2662, %v454
      %v2665 = vadd.f32 %v2663, %v2006
      %v2668 = vcombine.low %v2664, %v2665
      %2670 = vst [vmem:[%s446] sm:$0xff] %v2668
      %p2671 = scmp.lt.s32.totalorder %s22, 1
      %s2672 = scalar_select %p2671, %s22, 1
      %s2673 = smul.addr %s2672, 2
      %s2674 = smul.addr %s2673, 4
      %s2675 = scalar_lea.vmem %s11, %s2674
      // Predicated region
      $region65: #{gate_forward.1} parent=63 // pred_check
        %p2676 = pneg %p291
      $region66: #{gate_forward.1} parent=63 // pred_check_branch
        %2678 = sbr.rel (%p2676) target = $region68
      $region67: #{gate_forward.1} parent=63 // pred_region
        _
      $region68: #{gate_forward.1} parent=63 // pred_fallthru
        _
    $region64: #{gate_forward.1} parent=5 // pred_fallthru
      _
    %p2679 = scmp.le.s32.totalorder 2, %s17
    // Predicated region
    $region69: #{gate_forward.1} parent=5 // pred_check
      %p2680 = pneg %p2679
    $region70: #{gate_forward.1} parent=5 // pred_check_branch
      %2682 = sbr.rel (%p2680) target = $region72
    $region71: #{gate_forward.1} parent=5 // pred_region
      %s2683 = ssub.s32 %s17, 2
      // Predicated region
      $region73: #{gate_forward.1} parent=71 // pred_check
        %p2684 = pneg %p297
      $region74: #{gate_forward.1} parent=71 // pred_check_branch
        %2686 = sbr.rel (%p2684) target = $region76
      $region75: #{gate_forward.1} parent=71 // pred_region
        %p2687 = scmp.lt.s32.totalorder %s23, 1
        %s2688 = scalar_select %p2687, %s23, 1
        %s2689 = smul.addr %s2688, 2
        %s2690 = smul.addr %s2689, 4
        %s2691 = scalar_lea.vmem %s11, %s2690
      $region76: #{gate_forward.1} parent=71 // pred_fallthru
        _
    $region72: #{gate_forward.1} parent=5 // pred_fallthru
      _
  $region6: #{gate_forward.1} parent=0 // loop_footer
    %s21 = sadd.s32 1, %s17
  $region7: #{gate_forward.1} parent=0 // loop_footer_branch
    %16 = sbr.rel target = $region3
  $region8: #{gate_forward.1} parent=0 // loop_exit
    _

</llo_original>
